<compile_context>
chip_gen: v7x
topology: tpu7x:2x2x1
jax: 0.10.0
libtpu: 0.0.40
codegen_flags: <defaults>
</compile_context>

<pallas_src>
import math
from functools import partial

import jax
import jax.numpy as jnp
from jax.experimental import pallas as pl
from jax.experimental.pallas import tpu as pltpu

# ----------------------------- model config (small, synthetic) -----------------------------
D_MODEL = 32
NHEAD = 4
HEAD_DIM = D_MODEL // NHEAD
DIM_FF = 64
NUM_LAYERS = 2
SEQ = 16
BATCH = 2
LN_EPS = 1e-5


# ----------------------------- fused Pallas kernel: all layers, whole batch -----------------------------
def _fused_encoder_kernel(x_ref, pos_ref,
                          wqk_ref, bqk_ref, wv_ref, bv_ref, wo_ref, bo_ref,
                          w1_ref, b1_ref, w2_ref, b2_ref,
                          g1_ref, be1_ref, g2_ref, be2_ref,
                          out_ref,
                          act_ref, posb_ref, attn_ref,
                          *, nhead, head_dim, seq, batch):
    l = pl.program_id(0)            # layer index (grid axis, "arbitrary")
    d = nhead * head_dim

    # Layer 0: unpack the (S, B*D) inputs into batch-major (B*S, D) VMEM scratch.
    @pl.when(l == 0)
    def _():
        for b in range(batch):
            act_ref[b * seq:(b + 1) * seq, :] = x_ref[:, b * d:(b + 1) * d]
            posb_ref[b * seq:(b + 1) * seq, :] = pos_ref[:, b * d:(b + 1) * d]

    x = act_ref[...]                # (B*S, D) current activations (resident across layers)
    qk_in = x + posb_ref[...]       # q = k = src + pos (pos added every layer)

    # Merged Q/K projection (one MXU push, N = 2D) and V projection.
    # Weights are pre-transposed host-side, so contractions are plain x @ W.
    qk = jnp.dot(qk_in, wqk_ref[0], preferred_element_type=jnp.float32) + bqk_ref[0]
    v = jnp.dot(x, wv_ref[0], preferred_element_type=jnp.float32) + bv_ref[0]

    scale = 1.0 / math.sqrt(head_dim)

    # Scaled dot-product attention per (batch, head).  Head outputs are written
    # straight into attn_ref with static slices (no concatenate).
    for b in range(batch):
        r0, r1 = b * seq, (b + 1) * seq
        for h in range(nhead):
            lo, hi = h * head_dim, (h + 1) * head_dim
            qh = qk[r0:r1, lo:hi] * scale                   # (S, hd)
            kh = qk[r0:r1, d + lo:d + hi]                   # (S, hd)
            vh = v[r0:r1, lo:hi]                            # (S, hd)
            # q @ k.T without materializing the transpose.
            s = jax.lax.dot_general(qh, kh, (((1,), (1,)), ((), ())),
                                    preferred_element_type=jnp.float32)  # (S, S)
            s = s - jnp.max(s, axis=-1, keepdims=True)
            p = jnp.exp(s)
            p = p * pl.reciprocal(jnp.sum(p, axis=-1, keepdims=True), approx=True)
            attn_ref[r0:r1, lo:hi] = jnp.dot(p, vh, preferred_element_type=jnp.float32)

    attn = jnp.dot(attn_ref[...], wo_ref[0], preferred_element_type=jnp.float32) + bo_ref[0]

    # residual + LayerNorm1
    y = x + attn
    mu = jnp.mean(y, axis=-1, keepdims=True)
    var = jnp.mean((y - mu) ** 2, axis=-1, keepdims=True)
    y = (y - mu) * jax.lax.rsqrt(var + LN_EPS) * g1_ref[0] + be1_ref[0]

    # FFN: linear2(relu(linear1(y)))
    h1 = jnp.maximum(jnp.dot(y, w1_ref[0], preferred_element_type=jnp.float32) + b1_ref[0], 0.0)
    h2 = jnp.dot(h1, w2_ref[0], preferred_element_type=jnp.float32) + b2_ref[0]

    # residual + LayerNorm2
    z = y + h2
    mu2 = jnp.mean(z, axis=-1, keepdims=True)
    var2 = jnp.mean((z - mu2) ** 2, axis=-1, keepdims=True)
    z = (z - mu2) * jax.lax.rsqrt(var2 + LN_EPS) * g2_ref[0] + be2_ref[0]

    act_ref[...] = z                # carried to the next layer in VMEM (no HBM round trip)

    # Only the last layer writes the (S, B*D) output block.
    @pl.when(l == pl.num_programs(0) - 1)
    def _():
        for b in range(batch):
            out_ref[:, b * d:(b + 1) * d] = z[b * seq:(b + 1) * seq, :].astype(out_ref.dtype)


# ----------------------------- parameter init (PyTorch orientation, deterministic) -----------------------------
def xavier_uniform(key, shape):
    fan_out, fan_in = shape[0], shape[1]
    a = math.sqrt(6.0 / (fan_in + fan_out))
    return jax.random.uniform(key, shape, jnp.float32, -a, a)


def init_layer_params(key):
    ks = jax.random.split(key, 4)
    return {
        # nn.MultiheadAttention
        "wqkv": xavier_uniform(ks[0], (3 * D_MODEL, D_MODEL)),
        "bqkv": jnp.zeros((1, 3 * D_MODEL), jnp.float32),
        "wo": xavier_uniform(ks[1], (D_MODEL, D_MODEL)),
        "bo": jnp.zeros((1, D_MODEL), jnp.float32),
        # FFN
        "w1": xavier_uniform(ks[2], (DIM_FF, D_MODEL)),
        "b1": jnp.zeros((1, DIM_FF), jnp.float32),
        "w2": xavier_uniform(ks[3], (D_MODEL, DIM_FF)),
        "b2": jnp.zeros((1, D_MODEL), jnp.float32),
        # LayerNorms
        "g1": jnp.ones((1, D_MODEL), jnp.float32),
        "be1": jnp.zeros((1, D_MODEL), jnp.float32),
        "g2": jnp.ones((1, D_MODEL), jnp.float32),
        "be2": jnp.zeros((1, D_MODEL), jnp.float32),
    }


def pack_params(layer_params_list):
    """Stack per-layer weights on a leading L axis, pre-transposed for x @ W."""
    d = D_MODEL
    st = lambda xs: jnp.stack(xs, axis=0)
    wqk = st([p["wqkv"][:2 * d].T for p in layer_params_list])    # (L, D, 2D)  merged Q|K
    bqk = st([p["bqkv"][:, :2 * d] for p in layer_params_list])   # (L, 1, 2D)
    wv = st([p["wqkv"][2 * d:].T for p in layer_params_list])     # (L, D, D)
    bv = st([p["bqkv"][:, 2 * d:] for p in layer_params_list])    # (L, 1, D)
    wo = st([p["wo"].T for p in layer_params_list])               # (L, D, D)
    bo = st([p["bo"] for p in layer_params_list])                 # (L, 1, D)
    w1 = st([p["w1"].T for p in layer_params_list])               # (L, D, FF)
    b1 = st([p["b1"] for p in layer_params_list])                 # (L, 1, FF)
    w2 = st([p["w2"].T for p in layer_params_list])               # (L, FF, D)
    b2 = st([p["b2"] for p in layer_params_list])                 # (L, 1, D)
    g1 = st([p["g1"] for p in layer_params_list])                 # (L, 1, D)
    be1 = st([p["be1"] for p in layer_params_list])
    g2 = st([p["g2"] for p in layer_params_list])
    be2 = st([p["be2"] for p in layer_params_list])
    return (wqk, bqk, wv, bv, wo, bo, w1, b1, w2, b2, g1, be1, g2, be2)


# ----------------------------- full TransformerEncoder forward -----------------------------
def transformer_encoder(src_sbd, pos_sbd, layer_params_list):
    """src/pos: (S, B, D) to match PyTorch seq-first convention. norm=None."""
    S, B, D = src_sbd.shape
    L = len(layer_params_list)
    packed = pack_params(layer_params_list)

    # Free row-major reshapes (no transpose / extra HBM round trip); the kernel does
    # the (S, B, D) <-> batch-major (B*S, D) rearrangement on VMEM-resident data.
    x2 = src_sbd.reshape(S, B * D)
    p2 = pos_sbd.reshape(S, B * D)

    def wspec(a):
        nd = a.ndim
        return pl.BlockSpec((1,) + a.shape[1:], lambda l: (l,) + (0,) * (nd - 1))

    out = pl.pallas_call(
        partial(_fused_encoder_kernel, nhead=NHEAD, head_dim=HEAD_DIM, seq=S, batch=B),
        out_shape=jax.ShapeDtypeStruct((S, B * D), jnp.float32),
        grid_spec=pltpu.PrefetchScalarGridSpec(
            num_scalar_prefetch=0,
            grid=(L,),                                   # layer axis only; batch folded in tile
            in_specs=[pl.BlockSpec((S, B * D), lambda l: (0, 0)),    # src
                      pl.BlockSpec((S, B * D), lambda l: (0, 0))]    # pos
                     + [wspec(a) for a in packed],                   # per-layer weights
            out_specs=pl.BlockSpec((S, B * D), lambda l: (0, 0)),
            scratch_shapes=[pltpu.VMEM((B * S, D), jnp.float32),     # activations (carried)
                            pltpu.VMEM((B * S, D), jnp.float32),     # pos, batch-major
                            pltpu.VMEM((B * S, D), jnp.float32)],    # attention head buffer
        ),
        compiler_params=pltpu.CompilerParams(dimension_semantics=("arbitrary",)),
    )(x2, p2, *packed)

    return out.reshape(S, B, D)


if __name__ == "__main__":
    key = jax.random.PRNGKey(0)
    k_src, k_pos, k_params = jax.random.split(key, 3)

    src = jax.random.normal(k_src, (SEQ, BATCH, D_MODEL), jnp.float32)
    pos = jax.random.normal(k_pos, (SEQ, BATCH, D_MODEL), jnp.float32)

    layer_keys = jax.random.split(k_params, NUM_LAYERS)
    layer_params = [init_layer_params(k) for k in layer_keys]

    out = transformer_encoder(src, pos, layer_params)
    out = jax.block_until_ready(out)

    assert out.shape == (SEQ, BATCH, D_MODEL)
    assert bool(jnp.all(jnp.isfinite(out)))

    # quick correctness check vs. pure-JAX reference of the same math
    def ref_layer(x, pos, p):  # x, pos: (B, S, D)
        d = D_MODEL
        qk = x + pos
        q = qk @ p["wqkv"][0:d].T + p["bqkv"][0, 0:d]
        k_ = qk @ p["wqkv"][d:2 * d].T + p["bqkv"][0, d:2 * d]
        v = x @ p["wqkv"][2 * d:].T + p["bqkv"][0, 2 * d:]
        B, S, _ = x.shape
        qh = q.reshape(B, S, NHEAD, HEAD_DIM).transpose(0, 2, 1, 3) / math.sqrt(HEAD_DIM)
        kh = k_.reshape(B, S, NHEAD, HEAD_DIM).transpose(0, 2, 1, 3)
        vh = v.reshape(B, S, NHEAD, HEAD_DIM).transpose(0, 2, 1, 3)
        a = jax.nn.softmax(jnp.einsum("bhqd,bhkd->bhqk", qh, kh), axis=-1)
        o = jnp.einsum("bhqk,bhkd->bhqd", a, vh).transpose(0, 2, 1, 3).reshape(B, S, d)
        attn = o @ p["wo"].T + p["bo"][0]
        y = x + attn
        y = (y - y.mean(-1, keepdims=True)) / jnp.sqrt(y.var(-1, keepdims=True) + LN_EPS) * p["g1"][0] + p["be1"][0]
        h = jnp.maximum(y @ p["w1"].T + p["b1"][0], 0.0) @ p["w2"].T + p["b2"][0]
        z = y + h
        z = (z - z.mean(-1, keepdims=True)) / jnp.sqrt(z.var(-1, keepdims=True) + LN_EPS) * p["g2"][0] + p["be2"][0]
        return z

    xr = jnp.transpose(src, (1, 0, 2))
    pr = jnp.transpose(pos, (1, 0, 2))
    for p in layer_params:
        xr = ref_layer(xr, pr, p)
    ref = jnp.transpose(xr, (1, 0, 2))
    # tolerance slightly loosened because the kernel softmax uses pl.reciprocal(approx=True)
    assert jnp.allclose(out, ref, atol=2e-2, rtol=2e-2)

    print("KERNEL_OK")
</pallas_src>

<mosaic_0001>
module attributes {stable_mosaic.version = 11 : i64} {
  func.func @_fused_encoder_kernel(%arg0: i32, %arg1: memref<16x64xf32, #tpu.memory_space<vmem>>, %arg2: memref<16x64xf32, #tpu.memory_space<vmem>>, %arg3: memref<1x32x64xf32, #tpu.memory_space<vmem>>, %arg4: memref<1x1x64xf32, #tpu.memory_space<vmem>>, %arg5: memref<1x32x32xf32, #tpu.memory_space<vmem>>, %arg6: memref<1x1x32xf32, #tpu.memory_space<vmem>>, %arg7: memref<1x32x32xf32, #tpu.memory_space<vmem>>, %arg8: memref<1x1x32xf32, #tpu.memory_space<vmem>>, %arg9: memref<1x32x64xf32, #tpu.memory_space<vmem>>, %arg10: memref<1x1x64xf32, #tpu.memory_space<vmem>>, %arg11: memref<1x64x32xf32, #tpu.memory_space<vmem>>, %arg12: memref<1x1x32xf32, #tpu.memory_space<vmem>>, %arg13: memref<1x1x32xf32, #tpu.memory_space<vmem>>, %arg14: memref<1x1x32xf32, #tpu.memory_space<vmem>>, %arg15: memref<1x1x32xf32, #tpu.memory_space<vmem>>, %arg16: memref<1x1x32xf32, #tpu.memory_space<vmem>>, %arg17: memref<16x64xf32, #tpu.memory_space<vmem>>, %arg18: memref<32x32xf32, #tpu.memory_space<vmem>>, %arg19: memref<32x32xf32, #tpu.memory_space<vmem>>, %arg20: memref<32x32xf32, #tpu.memory_space<vmem>>) attributes {dimension_semantics = [#tpu.dimension_semantics<arbitrary>], iteration_bounds = array<i64: 2>, scalar_prefetch = 0 : i64, scratch_operands = 3 : i64, tpu.core_type = #tpu.core_type<tc>, window_params = [{pipeline_mode = #tpu.pipeline_mode<synchronous>, transform_indices = @transform_0, window_bounds = array<i64: 16, 64>}, {pipeline_mode = #tpu.pipeline_mode<synchronous>, transform_indices = @transform_1, window_bounds = array<i64: 16, 64>}, {transform_indices = @transform_2, window_bounds = array<i64: 1, 32, 64>}, {transform_indices = @transform_3, window_bounds = array<i64: 1, 1, 64>}, {transform_indices = @transform_4, window_bounds = array<i64: 1, 32, 32>}, {transform_indices = @transform_5, window_bounds = array<i64: 1, 1, 32>}, {transform_indices = @transform_6, window_bounds = array<i64: 1, 32, 32>}, {transform_indices = @transform_7, window_bounds = array<i64: 1, 1, 32>}, {transform_indices = @transform_8, window_bounds = array<i64: 1, 32, 64>}, {transform_indices = @transform_9, window_bounds = array<i64: 1, 1, 64>}, {transform_indices = @transform_10, window_bounds = array<i64: 1, 64, 32>}, {transform_indices = @transform_11, window_bounds = array<i64: 1, 1, 32>}, {transform_indices = @transform_12, window_bounds = array<i64: 1, 1, 32>}, {transform_indices = @transform_13, window_bounds = array<i64: 1, 1, 32>}, {transform_indices = @transform_14, window_bounds = array<i64: 1, 1, 32>}, {transform_indices = @transform_15, window_bounds = array<i64: 1, 1, 32>}, {pipeline_mode = #tpu.pipeline_mode<synchronous>, transform_indices = @transform_16, window_bounds = array<i64: 16, 64>}]} {
    %c0_i32 = arith.constant 0 : i32
    %0 = arith.cmpi eq, %arg0, %c0_i32 : i32
    %1 = arith.extui %0 : i1 to i32
    %c0_i32_0 = arith.constant 0 : i32
    %2 = arith.cmpi ne, %1, %c0_i32_0 : i32
    scf.if %2 {
      %c0_119 = arith.constant 0 : index
      %c0_120 = arith.constant 0 : index
      %246 = vector.load %arg1[%c0_119, %c0_120] : memref<16x64xf32, #tpu.memory_space<vmem>>, vector<16x32xf32>
      %c0_121 = arith.constant 0 : index
      %c0_122 = arith.constant 0 : index
      %247 = vector.load %arg18[%c0_121, %c0_122] : memref<32x32xf32, #tpu.memory_space<vmem>>, vector<16x32xf32>
      tpu.vector_store %arg18[%c0_121, %c0_122], %246 {strides = array<i32>} : memref<32x32xf32, #tpu.memory_space<vmem>>, vector<16x32xf32>,
      %c0_123 = arith.constant 0 : index
      %c0_124 = arith.constant 0 : index
      %248 = vector.load %arg2[%c0_123, %c0_124] : memref<16x64xf32, #tpu.memory_space<vmem>>, vector<16x32xf32>
      %c0_125 = arith.constant 0 : index
      %c0_126 = arith.constant 0 : index
      %249 = vector.load %arg19[%c0_125, %c0_126] : memref<32x32xf32, #tpu.memory_space<vmem>>, vector<16x32xf32>
      tpu.vector_store %arg19[%c0_125, %c0_126], %248 {strides = array<i32>} : memref<32x32xf32, #tpu.memory_space<vmem>>, vector<16x32xf32>,
      %c0_127 = arith.constant 0 : index
      %c32 = arith.constant 32 : index
      %250 = vector.load %arg1[%c0_127, %c32] : memref<16x64xf32, #tpu.memory_space<vmem>>, vector<16x32xf32>
      %c16_128 = arith.constant 16 : index
      %c0_129 = arith.constant 0 : index
      %251 = vector.load %arg18[%c16_128, %c0_129] : memref<32x32xf32, #tpu.memory_space<vmem>>, vector<16x32xf32>
      tpu.vector_store %arg18[%c16_128, %c0_129], %250 {strides = array<i32>} : memref<32x32xf32, #tpu.memory_space<vmem>>, vector<16x32xf32>,
      %c0_130 = arith.constant 0 : index
      %c32_131 = arith.constant 32 : index
      %252 = vector.load %arg2[%c0_130, %c32_131] : memref<16x64xf32, #tpu.memory_space<vmem>>, vector<16x32xf32>
      %c16_132 = arith.constant 16 : index
      %c0_133 = arith.constant 0 : index
      %253 = vector.load %arg19[%c16_132, %c0_133] : memref<32x32xf32, #tpu.memory_space<vmem>>, vector<16x32xf32>
      tpu.vector_store %arg19[%c16_132, %c0_133], %252 {strides = array<i32>} : memref<32x32xf32, #tpu.memory_space<vmem>>, vector<16x32xf32>,
    } else {
    }
    %c0 = arith.constant 0 : index
    %c0_1 = arith.constant 0 : index
    %3 = vector.load %arg18[%c0, %c0_1] : memref<32x32xf32, #tpu.memory_space<vmem>>, vector<32x32xf32>
    %c0_2 = arith.constant 0 : index
    %c0_3 = arith.constant 0 : index
    %4 = vector.load %arg19[%c0_2, %c0_3] : memref<32x32xf32, #tpu.memory_space<vmem>>, vector<32x32xf32>
    %5 = arith.addf %3, %4 : vector<32x32xf32>
    %c0_4 = arith.constant 0 : index
    %c0_5 = arith.constant 0 : index
    %c0_6 = arith.constant 0 : index
    %6 = vector.load %arg3[%c0_4, %c0_5, %c0_6] : memref<1x32x64xf32, #tpu.memory_space<vmem>>, vector<1x32x64xf32>
    %7 = vector.shape_cast %6 : vector<1x32x64xf32> to vector<32x64xf32>
    %cst = arith.constant dense<0.000000e+00> : vector<32x64xf32>
    %8 = tpu.matmul %5, %7, %cst {dimension_numbers = #tpu.dot_dimension_numbers<[1], [0], [0], [1], [0, 0, 1, 1], [], []>} : vector<32x32xf32>, vector<32x64xf32>, vector<32x64xf32> -> vector<32x64xf32>
    %c0_7 = arith.constant 0 : index
    %c0_8 = arith.constant 0 : index
    %c0_9 = arith.constant 0 : index
    %9 = vector.load %arg4[%c0_7, %c0_8, %c0_9] : memref<1x1x64xf32, #tpu.memory_space<vmem>>, vector<1x1x64xf32>
    %10 = vector.shape_cast %9 : vector<1x1x64xf32> to vector<1x64xf32>
    %11 = vector.broadcast %10 : vector<1x64xf32> to vector<32x64xf32>
    %12 = arith.addf %8, %11 : vector<32x64xf32>
    %c0_10 = arith.constant 0 : index
    %c0_11 = arith.constant 0 : index
    %c0_12 = arith.constant 0 : index
    %13 = vector.load %arg5[%c0_10, %c0_11, %c0_12] : memref<1x32x32xf32, #tpu.memory_space<vmem>>, vector<1x32x32xf32>
    %14 = vector.shape_cast %13 : vector<1x32x32xf32> to vector<32x32xf32>
    %cst_13 = arith.constant dense<0.000000e+00> : vector<32x32xf32>
    %15 = tpu.matmul %3, %14, %cst_13 {dimension_numbers = #tpu.dot_dimension_numbers<[1], [0], [0], [1], [0, 0, 1, 1], [], []>} : vector<32x32xf32>, vector<32x32xf32>, vector<32x32xf32> -> vector<32x32xf32>
    %c0_14 = arith.constant 0 : index
    %c0_15 = arith.constant 0 : index
    %c0_16 = arith.constant 0 : index
    %16 = vector.load %arg6[%c0_14, %c0_15, %c0_16] : memref<1x1x32xf32, #tpu.memory_space<vmem>>, vector<1x1x32xf32>
    %17 = vector.shape_cast %16 : vector<1x1x32xf32> to vector<1x32xf32>
    %18 = vector.broadcast %17 : vector<1x32xf32> to vector<32x32xf32>
    %19 = arith.addf %15, %18 : vector<32x32xf32>
    %20 = vector.extract_strided_slice %12 {offsets = [0, 0], sizes = [16, 8], strides = [1, 1]} : vector<32x64xf32> to vector<16x8xf32>
    %cst_17 = arith.constant 0.353553385 : f32
    %21 = vector.broadcast %cst_17 : f32 to vector<16x8xf32>
    %22 = arith.mulf %20, %21 : vector<16x8xf32>
    %23 = vector.extract_strided_slice %12 {offsets = [0, 32], sizes = [16, 8], strides = [1, 1]} : vector<32x64xf32> to vector<16x8xf32>
    %24 = vector.extract_strided_slice %19 {offsets = [0, 0], sizes = [16, 8], strides = [1, 1]} : vector<32x32xf32> to vector<16x8xf32>
    %cst_18 = arith.constant dense<0.000000e+00> : vector<16x16xf32>
    %25 = tpu.matmul %22, %23, %cst_18 {dimension_numbers = #tpu.dot_dimension_numbers<[1], [1], [0], [0], [0, 0, 1, 0], [], []>} : vector<16x8xf32>, vector<16x8xf32>, vector<16x16xf32> -> vector<16x16xf32>
    %cst_19 = arith.constant dense<0xFF800000> : vector<16xf32>
    %26 = vector.multi_reduction <maximumf>, %25, %cst_19 [1] : vector<16x16xf32> to vector<16xf32>
    %27 = vector.shape_cast %26 : vector<16xf32> to vector<16x1xf32>
    %28 = vector.broadcast %27 : vector<16x1xf32> to vector<16x16xf32>
    %29 = arith.subf %25, %28 : vector<16x16xf32>
    %30 = math.exp %29 : vector<16x16xf32>
    %cst_20 = arith.constant dense<0.000000e+00> : vector<16xf32>
    %31 = vector.multi_reduction <add>, %30, %cst_20 [1] : vector<16x16xf32> to vector<16xf32>
    %32 = vector.shape_cast %31 : vector<16xf32> to vector<16x1xf32>
    %33 = tpu.reciprocal %32 {approx = true} : vector<16x1xf32> -> vector<16x1xf32>
    %34 = vector.broadcast %33 : vector<16x1xf32> to vector<16x16xf32>
    %35 = arith.mulf %30, %34 : vector<16x16xf32>
    %cst_21 = arith.constant dense<0.000000e+00> : vector<16x8xf32>
    %36 = tpu.matmul %35, %24, %cst_21 {dimension_numbers = #tpu.dot_dimension_numbers<[1], [0], [0], [1], [0, 0, 1, 1], [], []>} : vector<16x16xf32>, vector<16x8xf32>, vector<16x8xf32> -> vector<16x8xf32>
    %c0_22 = arith.constant 0 : index
    %c0_23 = arith.constant 0 : index
    %37 = vector.load %arg20[%c0_22, %c0_23] : memref<32x32xf32, #tpu.memory_space<vmem>>, vector<16x8xf32>
    tpu.vector_store %arg20[%c0_22, %c0_23], %36 {strides = array<i32>} : memref<32x32xf32, #tpu.memory_space<vmem>>, vector<16x8xf32>,
    %38 = vector.extract_strided_slice %12 {offsets = [0, 8], sizes = [16, 8], strides = [1, 1]} : vector<32x64xf32> to vector<16x8xf32>
    %cst_24 = arith.constant 0.353553385 : f32
    %39 = vector.broadcast %cst_24 : f32 to vector<16x8xf32>
    %40 = arith.mulf %38, %39 : vector<16x8xf32>
    %41 = vector.extract_strided_slice %12 {offsets = [0, 40], sizes = [16, 8], strides = [1, 1]} : vector<32x64xf32> to vector<16x8xf32>
    %42 = vector.extract_strided_slice %19 {offsets = [0, 8], sizes = [16, 8], strides = [1, 1]} : vector<32x32xf32> to vector<16x8xf32>
    %cst_25 = arith.constant dense<0.000000e+00> : vector<16x16xf32>
    %43 = tpu.matmul %40, %41, %cst_25 {dimension_numbers = #tpu.dot_dimension_numbers<[1], [1], [0], [0], [0, 0, 1, 0], [], []>} : vector<16x8xf32>, vector<16x8xf32>, vector<16x16xf32> -> vector<16x16xf32>
    %cst_26 = arith.constant dense<0xFF800000> : vector<16xf32>
    %44 = vector.multi_reduction <maximumf>, %43, %cst_26 [1] : vector<16x16xf32> to vector<16xf32>
    %45 = vector.shape_cast %44 : vector<16xf32> to vector<16x1xf32>
    %46 = vector.broadcast %45 : vector<16x1xf32> to vector<16x16xf32>
    %47 = arith.subf %43, %46 : vector<16x16xf32>
    %48 = math.exp %47 : vector<16x16xf32>
    %cst_27 = arith.constant dense<0.000000e+00> : vector<16xf32>
    %49 = vector.multi_reduction <add>, %48, %cst_27 [1] : vector<16x16xf32> to vector<16xf32>
    %50 = vector.shape_cast %49 : vector<16xf32> to vector<16x1xf32>
    %51 = tpu.reciprocal %50 {approx = true} : vector<16x1xf32> -> vector<16x1xf32>
    %52 = vector.broadcast %51 : vector<16x1xf32> to vector<16x16xf32>
    %53 = arith.mulf %48, %52 : vector<16x16xf32>
    %cst_28 = arith.constant dense<0.000000e+00> : vector<16x8xf32>
    %54 = tpu.matmul %53, %42, %cst_28 {dimension_numbers = #tpu.dot_dimension_numbers<[1], [0], [0], [1], [0, 0, 1, 1], [], []>} : vector<16x16xf32>, vector<16x8xf32>, vector<16x8xf32> -> vector<16x8xf32>
    %c0_29 = arith.constant 0 : index
    %c8 = arith.constant 8 : index
    %55 = vector.load %arg20[%c0_29, %c8] : memref<32x32xf32, #tpu.memory_space<vmem>>, vector<16x8xf32>
    tpu.vector_store %arg20[%c0_29, %c8], %54 {strides = array<i32>} : memref<32x32xf32, #tpu.memory_space<vmem>>, vector<16x8xf32>,
    %56 = vector.extract_strided_slice %12 {offsets = [0, 16], sizes = [16, 8], strides = [1, 1]} : vector<32x64xf32> to vector<16x8xf32>
    %cst_30 = arith.constant 0.353553385 : f32
    %57 = vector.broadcast %cst_30 : f32 to vector<16x8xf32>
    %58 = arith.mulf %56, %57 : vector<16x8xf32>
    %59 = vector.extract_strided_slice %12 {offsets = [0, 48], sizes = [16, 8], strides = [1, 1]} : vector<32x64xf32> to vector<16x8xf32>
    %60 = vector.extract_strided_slice %19 {offsets = [0, 16], sizes = [16, 8], strides = [1, 1]} : vector<32x32xf32> to vector<16x8xf32>
    %cst_31 = arith.constant dense<0.000000e+00> : vector<16x16xf32>
    %61 = tpu.matmul %58, %59, %cst_31 {dimension_numbers = #tpu.dot_dimension_numbers<[1], [1], [0], [0], [0, 0, 1, 0], [], []>} : vector<16x8xf32>, vector<16x8xf32>, vector<16x16xf32> -> vector<16x16xf32>
    %cst_32 = arith.constant dense<0xFF800000> : vector<16xf32>
    %62 = vector.multi_reduction <maximumf>, %61, %cst_32 [1] : vector<16x16xf32> to vector<16xf32>
    %63 = vector.shape_cast %62 : vector<16xf32> to vector<16x1xf32>
    %64 = vector.broadcast %63 : vector<16x1xf32> to vector<16x16xf32>
    %65 = arith.subf %61, %64 : vector<16x16xf32>
    %66 = math.exp %65 : vector<16x16xf32>
    %cst_33 = arith.constant dense<0.000000e+00> : vector<16xf32>
    %67 = vector.multi_reduction <add>, %66, %cst_33 [1] : vector<16x16xf32> to vector<16xf32>
    %68 = vector.shape_cast %67 : vector<16xf32> to vector<16x1xf32>
    %69 = tpu.reciprocal %68 {approx = true} : vector<16x1xf32> -> vector<16x1xf32>
    %70 = vector.broadcast %69 : vector<16x1xf32> to vector<16x16xf32>
    %71 = arith.mulf %66, %70 : vector<16x16xf32>
    %cst_34 = arith.constant dense<0.000000e+00> : vector<16x8xf32>
    %72 = tpu.matmul %71, %60, %cst_34 {dimension_numbers = #tpu.dot_dimension_numbers<[1], [0], [0], [1], [0, 0, 1, 1], [], []>} : vector<16x16xf32>, vector<16x8xf32>, vector<16x8xf32> -> vector<16x8xf32>
    %c0_35 = arith.constant 0 : index
    %c16 = arith.constant 16 : index
    %73 = vector.load %arg20[%c0_35, %c16] : memref<32x32xf32, #tpu.memory_space<vmem>>, vector<16x8xf32>
    tpu.vector_store %arg20[%c0_35, %c16], %72 {strides = array<i32>} : memref<32x32xf32, #tpu.memory_space<vmem>>, vector<16x8xf32>,
    %74 = vector.extract_strided_slice %12 {offsets = [0, 24], sizes = [16, 8], strides = [1, 1]} : vector<32x64xf32> to vector<16x8xf32>
    %cst_36 = arith.constant 0.353553385 : f32
    %75 = vector.broadcast %cst_36 : f32 to vector<16x8xf32>
    %76 = arith.mulf %74, %75 : vector<16x8xf32>
    %77 = vector.extract_strided_slice %12 {offsets = [0, 56], sizes = [16, 8], strides = [1, 1]} : vector<32x64xf32> to vector<16x8xf32>
    %78 = vector.extract_strided_slice %19 {offsets = [0, 24], sizes = [16, 8], strides = [1, 1]} : vector<32x32xf32> to vector<16x8xf32>
    %cst_37 = arith.constant dense<0.000000e+00> : vector<16x16xf32>
    %79 = tpu.matmul %76, %77, %cst_37 {dimension_numbers = #tpu.dot_dimension_numbers<[1], [1], [0], [0], [0, 0, 1, 0], [], []>} : vector<16x8xf32>, vector<16x8xf32>, vector<16x16xf32> -> vector<16x16xf32>
    %cst_38 = arith.constant dense<0xFF800000> : vector<16xf32>
    %80 = vector.multi_reduction <maximumf>, %79, %cst_38 [1] : vector<16x16xf32> to vector<16xf32>
    %81 = vector.shape_cast %80 : vector<16xf32> to vector<16x1xf32>
    %82 = vector.broadcast %81 : vector<16x1xf32> to vector<16x16xf32>
    %83 = arith.subf %79, %82 : vector<16x16xf32>
    %84 = math.exp %83 : vector<16x16xf32>
    %cst_39 = arith.constant dense<0.000000e+00> : vector<16xf32>
    %85 = vector.multi_reduction <add>, %84, %cst_39 [1] : vector<16x16xf32> to vector<16xf32>
    %86 = vector.shape_cast %85 : vector<16xf32> to vector<16x1xf32>
    %87 = tpu.reciprocal %86 {approx = true} : vector<16x1xf32> -> vector<16x1xf32>
    %88 = vector.broadcast %87 : vector<16x1xf32> to vector<16x16xf32>
    %89 = arith.mulf %84, %88 : vector<16x16xf32>
    %cst_40 = arith.constant dense<0.000000e+00> : vector<16x8xf32>
    %90 = tpu.matmul %89, %78, %cst_40 {dimension_numbers = #tpu.dot_dimension_numbers<[1], [0], [0], [1], [0, 0, 1, 1], [], []>} : vector<16x16xf32>, vector<16x8xf32>, vector<16x8xf32> -> vector<16x8xf32>
    %c0_41 = arith.constant 0 : index
    %c24 = arith.constant 24 : index
    %91 = vector.load %arg20[%c0_41, %c24] : memref<32x32xf32, #tpu.memory_space<vmem>>, vector<16x8xf32>
    tpu.vector_store %arg20[%c0_41, %c24], %90 {strides = array<i32>} : memref<32x32xf32, #tpu.memory_space<vmem>>, vector<16x8xf32>,
    %92 = vector.extract_strided_slice %12 {offsets = [16, 0], sizes = [16, 8], strides = [1, 1]} : vector<32x64xf32> to vector<16x8xf32>
    %cst_42 = arith.constant 0.353553385 : f32
    %93 = vector.broadcast %cst_42 : f32 to vector<16x8xf32>
    %94 = arith.mulf %92, %93 : vector<16x8xf32>
    %95 = vector.extract_strided_slice %12 {offsets = [16, 32], sizes = [16, 8], strides = [1, 1]} : vector<32x64xf32> to vector<16x8xf32>
    %96 = vector.extract_strided_slice %19 {offsets = [16, 0], sizes = [16, 8], strides = [1, 1]} : vector<32x32xf32> to vector<16x8xf32>
    %cst_43 = arith.constant dense<0.000000e+00> : vector<16x16xf32>
    %97 = tpu.matmul %94, %95, %cst_43 {dimension_numbers = #tpu.dot_dimension_numbers<[1], [1], [0], [0], [0, 0, 1, 0], [], []>} : vector<16x8xf32>, vector<16x8xf32>, vector<16x16xf32> -> vector<16x16xf32>
    %cst_44 = arith.constant dense<0xFF800000> : vector<16xf32>
    %98 = vector.multi_reduction <maximumf>, %97, %cst_44 [1] : vector<16x16xf32> to vector<16xf32>
    %99 = vector.shape_cast %98 : vector<16xf32> to vector<16x1xf32>
    %100 = vector.broadcast %99 : vector<16x1xf32> to vector<16x16xf32>
    %101 = arith.subf %97, %100 : vector<16x16xf32>
    %102 = math.exp %101 : vector<16x16xf32>
    %cst_45 = arith.constant dense<0.000000e+00> : vector<16xf32>
    %103 = vector.multi_reduction <add>, %102, %cst_45 [1] : vector<16x16xf32> to vector<16xf32>
    %104 = vector.shape_cast %103 : vector<16xf32> to vector<16x1xf32>
    %105 = tpu.reciprocal %104 {approx = true} : vector<16x1xf32> -> vector<16x1xf32>
    %106 = vector.broadcast %105 : vector<16x1xf32> to vector<16x16xf32>
    %107 = arith.mulf %102, %106 : vector<16x16xf32>
    %cst_46 = arith.constant dense<0.000000e+00> : vector<16x8xf32>
    %108 = tpu.matmul %107, %96, %cst_46 {dimension_numbers = #tpu.dot_dimension_numbers<[1], [0], [0], [1], [0, 0, 1, 1], [], []>} : vector<16x16xf32>, vector<16x8xf32>, vector<16x8xf32> -> vector<16x8xf32>
    %c16_47 = arith.constant 16 : index
    %c0_48 = arith.constant 0 : index
    %109 = vector.load %arg20[%c16_47, %c0_48] : memref<32x32xf32, #tpu.memory_space<vmem>>, vector<16x8xf32>
    tpu.vector_store %arg20[%c16_47, %c0_48], %108 {strides = array<i32>} : memref<32x32xf32, #tpu.memory_space<vmem>>, vector<16x8xf32>,
    %110 = vector.extract_strided_slice %12 {offsets = [16, 8], sizes = [16, 8], strides = [1, 1]} : vector<32x64xf32> to vector<16x8xf32>
    %cst_49 = arith.constant 0.353553385 : f32
    %111 = vector.broadcast %cst_49 : f32 to vector<16x8xf32>
    %112 = arith.mulf %110, %111 : vector<16x8xf32>
    %113 = vector.extract_strided_slice %12 {offsets = [16, 40], sizes = [16, 8], strides = [1, 1]} : vector<32x64xf32> to vector<16x8xf32>
    %114 = vector.extract_strided_slice %19 {offsets = [16, 8], sizes = [16, 8], strides = [1, 1]} : vector<32x32xf32> to vector<16x8xf32>
    %cst_50 = arith.constant dense<0.000000e+00> : vector<16x16xf32>
    %115 = tpu.matmul %112, %113, %cst_50 {dimension_numbers = #tpu.dot_dimension_numbers<[1], [1], [0], [0], [0, 0, 1, 0], [], []>} : vector<16x8xf32>, vector<16x8xf32>, vector<16x16xf32> -> vector<16x16xf32>
    %cst_51 = arith.constant dense<0xFF800000> : vector<16xf32>
    %116 = vector.multi_reduction <maximumf>, %115, %cst_51 [1] : vector<16x16xf32> to vector<16xf32>
    %117 = vector.shape_cast %116 : vector<16xf32> to vector<16x1xf32>
    %118 = vector.broadcast %117 : vector<16x1xf32> to vector<16x16xf32>
    %119 = arith.subf %115, %118 : vector<16x16xf32>
    %120 = math.exp %119 : vector<16x16xf32>
    %cst_52 = arith.constant dense<0.000000e+00> : vector<16xf32>
    %121 = vector.multi_reduction <add>, %120, %cst_52 [1] : vector<16x16xf32> to vector<16xf32>
    %122 = vector.shape_cast %121 : vector<16xf32> to vector<16x1xf32>
    %123 = tpu.reciprocal %122 {approx = true} : vector<16x1xf32> -> vector<16x1xf32>
    %124 = vector.broadcast %123 : vector<16x1xf32> to vector<16x16xf32>
    %125 = arith.mulf %120, %124 : vector<16x16xf32>
    %cst_53 = arith.constant dense<0.000000e+00> : vector<16x8xf32>
    %126 = tpu.matmul %125, %114, %cst_53 {dimension_numbers = #tpu.dot_dimension_numbers<[1], [0], [0], [1], [0, 0, 1, 1], [], []>} : vector<16x16xf32>, vector<16x8xf32>, vector<16x8xf32> -> vector<16x8xf32>
    %c16_54 = arith.constant 16 : index
    %c8_55 = arith.constant 8 : index
    %127 = vector.load %arg20[%c16_54, %c8_55] : memref<32x32xf32, #tpu.memory_space<vmem>>, vector<16x8xf32>
    tpu.vector_store %arg20[%c16_54, %c8_55], %126 {strides = array<i32>} : memref<32x32xf32, #tpu.memory_space<vmem>>, vector<16x8xf32>,
    %128 = vector.extract_strided_slice %12 {offsets = [16, 16], sizes = [16, 8], strides = [1, 1]} : vector<32x64xf32> to vector<16x8xf32>
    %cst_56 = arith.constant 0.353553385 : f32
    %129 = vector.broadcast %cst_56 : f32 to vector<16x8xf32>
    %130 = arith.mulf %128, %129 : vector<16x8xf32>
    %131 = vector.extract_strided_slice %12 {offsets = [16, 48], sizes = [16, 8], strides = [1, 1]} : vector<32x64xf32> to vector<16x8xf32>
    %132 = vector.extract_strided_slice %19 {offsets = [16, 16], sizes = [16, 8], strides = [1, 1]} : vector<32x32xf32> to vector<16x8xf32>
    %cst_57 = arith.constant dense<0.000000e+00> : vector<16x16xf32>
    %133 = tpu.matmul %130, %131, %cst_57 {dimension_numbers = #tpu.dot_dimension_numbers<[1], [1], [0], [0], [0, 0, 1, 0], [], []>} : vector<16x8xf32>, vector<16x8xf32>, vector<16x16xf32> -> vector<16x16xf32>
    %cst_58 = arith.constant dense<0xFF800000> : vector<16xf32>
    %134 = vector.multi_reduction <maximumf>, %133, %cst_58 [1] : vector<16x16xf32> to vector<16xf32>
    %135 = vector.shape_cast %134 : vector<16xf32> to vector<16x1xf32>
    %136 = vector.broadcast %135 : vector<16x1xf32> to vector<16x16xf32>
    %137 = arith.subf %133, %136 : vector<16x16xf32>
    %138 = math.exp %137 : vector<16x16xf32>
    %cst_59 = arith.constant dense<0.000000e+00> : vector<16xf32>
    %139 = vector.multi_reduction <add>, %138, %cst_59 [1] : vector<16x16xf32> to vector<16xf32>
    %140 = vector.shape_cast %139 : vector<16xf32> to vector<16x1xf32>
    %141 = tpu.reciprocal %140 {approx = true} : vector<16x1xf32> -> vector<16x1xf32>
    %142 = vector.broadcast %141 : vector<16x1xf32> to vector<16x16xf32>
    %143 = arith.mulf %138, %142 : vector<16x16xf32>
    %cst_60 = arith.constant dense<0.000000e+00> : vector<16x8xf32>
    %144 = tpu.matmul %143, %132, %cst_60 {dimension_numbers = #tpu.dot_dimension_numbers<[1], [0], [0], [1], [0, 0, 1, 1], [], []>} : vector<16x16xf32>, vector<16x8xf32>, vector<16x8xf32> -> vector<16x8xf32>
    %c16_61 = arith.constant 16 : index
    %c16_62 = arith.constant 16 : index
    %145 = vector.load %arg20[%c16_61, %c16_62] : memref<32x32xf32, #tpu.memory_space<vmem>>, vector<16x8xf32>
    tpu.vector_store %arg20[%c16_61, %c16_62], %144 {strides = array<i32>} : memref<32x32xf32, #tpu.memory_space<vmem>>, vector<16x8xf32>,
    %146 = vector.extract_strided_slice %12 {offsets = [16, 24], sizes = [16, 8], strides = [1, 1]} : vector<32x64xf32> to vector<16x8xf32>
    %cst_63 = arith.constant 0.353553385 : f32
    %147 = vector.broadcast %cst_63 : f32 to vector<16x8xf32>
    %148 = arith.mulf %146, %147 : vector<16x8xf32>
    %149 = vector.extract_strided_slice %12 {offsets = [16, 56], sizes = [16, 8], strides = [1, 1]} : vector<32x64xf32> to vector<16x8xf32>
    %150 = vector.extract_strided_slice %19 {offsets = [16, 24], sizes = [16, 8], strides = [1, 1]} : vector<32x32xf32> to vector<16x8xf32>
    %cst_64 = arith.constant dense<0.000000e+00> : vector<16x16xf32>
    %151 = tpu.matmul %148, %149, %cst_64 {dimension_numbers = #tpu.dot_dimension_numbers<[1], [1], [0], [0], [0, 0, 1, 0], [], []>} : vector<16x8xf32>, vector<16x8xf32>, vector<16x16xf32> -> vector<16x16xf32>
    %cst_65 = arith.constant dense<0xFF800000> : vector<16xf32>
    %152 = vector.multi_reduction <maximumf>, %151, %cst_65 [1] : vector<16x16xf32> to vector<16xf32>
    %153 = vector.shape_cast %152 : vector<16xf32> to vector<16x1xf32>
    %154 = vector.broadcast %153 : vector<16x1xf32> to vector<16x16xf32>
    %155 = arith.subf %151, %154 : vector<16x16xf32>
    %156 = math.exp %155 : vector<16x16xf32>
    %cst_66 = arith.constant dense<0.000000e+00> : vector<16xf32>
    %157 = vector.multi_reduction <add>, %156, %cst_66 [1] : vector<16x16xf32> to vector<16xf32>
    %158 = vector.shape_cast %157 : vector<16xf32> to vector<16x1xf32>
    %159 = tpu.reciprocal %158 {approx = true} : vector<16x1xf32> -> vector<16x1xf32>
    %160 = vector.broadcast %159 : vector<16x1xf32> to vector<16x16xf32>
    %161 = arith.mulf %156, %160 : vector<16x16xf32>
    %cst_67 = arith.constant dense<0.000000e+00> : vector<16x8xf32>
    %162 = tpu.matmul %161, %150, %cst_67 {dimension_numbers = #tpu.dot_dimension_numbers<[1], [0], [0], [1], [0, 0, 1, 1], [], []>} : vector<16x16xf32>, vector<16x8xf32>, vector<16x8xf32> -> vector<16x8xf32>
    %c16_68 = arith.constant 16 : index
    %c24_69 = arith.constant 24 : index
    %163 = vector.load %arg20[%c16_68, %c24_69] : memref<32x32xf32, #tpu.memory_space<vmem>>, vector<16x8xf32>
    tpu.vector_store %arg20[%c16_68, %c24_69], %162 {strides = array<i32>} : memref<32x32xf32, #tpu.memory_space<vmem>>, vector<16x8xf32>,
    %c0_70 = arith.constant 0 : index
    %c0_71 = arith.constant 0 : index
    %164 = vector.load %arg20[%c0_70, %c0_71] : memref<32x32xf32, #tpu.memory_space<vmem>>, vector<32x32xf32>
    %c0_72 = arith.constant 0 : index
    %c0_73 = arith.constant 0 : index
    %c0_74 = arith.constant 0 : index
    %165 = vector.load %arg7[%c0_72, %c0_73, %c0_74] : memref<1x32x32xf32, #tpu.memory_space<vmem>>, vector<1x32x32xf32>
    %166 = vector.shape_cast %165 : vector<1x32x32xf32> to vector<32x32xf32>
    %cst_75 = arith.constant dense<0.000000e+00> : vector<32x32xf32>
    %167 = tpu.matmul %164, %166, %cst_75 {dimension_numbers = #tpu.dot_dimension_numbers<[1], [0], [0], [1], [0, 0, 1, 1], [], []>} : vector<32x32xf32>, vector<32x32xf32>, vector<32x32xf32> -> vector<32x32xf32>
    %c0_76 = arith.constant 0 : index
    %c0_77 = arith.constant 0 : index
    %c0_78 = arith.constant 0 : index
    %168 = vector.load %arg8[%c0_76, %c0_77, %c0_78] : memref<1x1x32xf32, #tpu.memory_space<vmem>>, vector<1x1x32xf32>
    %169 = vector.shape_cast %168 : vector<1x1x32xf32> to vector<1x32xf32>
    %170 = vector.broadcast %169 : vector<1x32xf32> to vector<32x32xf32>
    %171 = arith.addf %167, %170 : vector<32x32xf32>
    %172 = arith.addf %3, %171 : vector<32x32xf32>
    %cst_79 = arith.constant dense<0.000000e+00> : vector<32xf32>
    %173 = vector.multi_reduction <add>, %172, %cst_79 [1] : vector<32x32xf32> to vector<32xf32>
    %174 = vector.shape_cast %173 : vector<32xf32> to vector<32x1xf32>
    %cst_80 = arith.constant 3.200000e+01 : f32
    %175 = vector.broadcast %cst_80 : f32 to vector<32x1xf32>
    %176 = arith.divf %174, %175 : vector<32x1xf32>
    %177 = vector.broadcast %176 : vector<32x1xf32> to vector<32x32xf32>
    %178 = arith.subf %172, %177 : vector<32x32xf32>
    %179 = arith.mulf %178, %178 : vector<32x32xf32>
    %cst_81 = arith.constant dense<0.000000e+00> : vector<32xf32>
    %180 = vector.multi_reduction <add>, %179, %cst_81 [1] : vector<32x32xf32> to vector<32xf32>
    %181 = vector.shape_cast %180 : vector<32xf32> to vector<32x1xf32>
    %cst_82 = arith.constant 3.200000e+01 : f32
    %182 = vector.broadcast %cst_82 : f32 to vector<32x1xf32>
    %183 = arith.divf %181, %182 : vector<32x1xf32>
    %184 = vector.broadcast %176 : vector<32x1xf32> to vector<32x32xf32>
    %185 = arith.subf %172, %184 : vector<32x32xf32>
    %cst_83 = arith.constant 9.99999974E-6 : f32
    %186 = vector.broadcast %cst_83 : f32 to vector<32x1xf32>
    %187 = arith.addf %183, %186 : vector<32x1xf32>
    %188 = math.rsqrt %187 : vector<32x1xf32>
    %189 = vector.broadcast %188 : vector<32x1xf32> to vector<32x32xf32>
    %190 = arith.mulf %185, %189 : vector<32x32xf32>
    %c0_84 = arith.constant 0 : index
    %c0_85 = arith.constant 0 : index
    %c0_86 = arith.constant 0 : index
    %191 = vector.load %arg13[%c0_84, %c0_85, %c0_86] : memref<1x1x32xf32, #tpu.memory_space<vmem>>, vector<1x1x32xf32>
    %192 = vector.shape_cast %191 : vector<1x1x32xf32> to vector<1x32xf32>
    %193 = vector.broadcast %192 : vector<1x32xf32> to vector<32x32xf32>
    %194 = arith.mulf %190, %193 : vector<32x32xf32>
    %c0_87 = arith.constant 0 : index
    %c0_88 = arith.constant 0 : index
    %c0_89 = arith.constant 0 : index
    %195 = vector.load %arg14[%c0_87, %c0_88, %c0_89] : memref<1x1x32xf32, #tpu.memory_space<vmem>>, vector<1x1x32xf32>
    %196 = vector.shape_cast %195 : vector<1x1x32xf32> to vector<1x32xf32>
    %197 = vector.broadcast %196 : vector<1x32xf32> to vector<32x32xf32>
    %198 = arith.addf %194, %197 : vector<32x32xf32>
    %c0_90 = arith.constant 0 : index
    %c0_91 = arith.constant 0 : index
    %c0_92 = arith.constant 0 : index
    %199 = vector.load %arg9[%c0_90, %c0_91, %c0_92] : memref<1x32x64xf32, #tpu.memory_space<vmem>>, vector<1x32x64xf32>
    %200 = vector.shape_cast %199 : vector<1x32x64xf32> to vector<32x64xf32>
    %cst_93 = arith.constant dense<0.000000e+00> : vector<32x64xf32>
    %201 = tpu.matmul %198, %200, %cst_93 {dimension_numbers = #tpu.dot_dimension_numbers<[1], [0], [0], [1], [0, 0, 1, 1], [], []>} : vector<32x32xf32>, vector<32x64xf32>, vector<32x64xf32> -> vector<32x64xf32>
    %c0_94 = arith.constant 0 : index
    %c0_95 = arith.constant 0 : index
    %c0_96 = arith.constant 0 : index
    %202 = vector.load %arg10[%c0_94, %c0_95, %c0_96] : memref<1x1x64xf32, #tpu.memory_space<vmem>>, vector<1x1x64xf32>
    %203 = vector.shape_cast %202 : vector<1x1x64xf32> to vector<1x64xf32>
    %204 = vector.broadcast %203 : vector<1x64xf32> to vector<32x64xf32>
    %205 = arith.addf %201, %204 : vector<32x64xf32>
    %cst_97 = arith.constant 0.000000e+00 : f32
    %206 = vector.broadcast %cst_97 : f32 to vector<32x64xf32>
    %207 = arith.maximumf %205, %206 : vector<32x64xf32>
    %c0_98 = arith.constant 0 : index
    %c0_99 = arith.constant 0 : index
    %c0_100 = arith.constant 0 : index
    %208 = vector.load %arg11[%c0_98, %c0_99, %c0_100] : memref<1x64x32xf32, #tpu.memory_space<vmem>>, vector<1x64x32xf32>
    %209 = vector.shape_cast %208 : vector<1x64x32xf32> to vector<64x32xf32>
    %cst_101 = arith.constant dense<0.000000e+00> : vector<32x32xf32>
    %210 = tpu.matmul %207, %209, %cst_101 {dimension_numbers = #tpu.dot_dimension_numbers<[1], [0], [0], [1], [0, 0, 1, 1], [], []>} : vector<32x64xf32>, vector<64x32xf32>, vector<32x32xf32> -> vector<32x32xf32>
    %c0_102 = arith.constant 0 : index
    %c0_103 = arith.constant 0 : index
    %c0_104 = arith.constant 0 : index
    %211 = vector.load %arg12[%c0_102, %c0_103, %c0_104] : memref<1x1x32xf32, #tpu.memory_space<vmem>>, vector<1x1x32xf32>
    %212 = vector.shape_cast %211 : vector<1x1x32xf32> to vector<1x32xf32>
    %213 = vector.broadcast %212 : vector<1x32xf32> to vector<32x32xf32>
    %214 = arith.addf %210, %213 : vector<32x32xf32>
    %215 = arith.addf %198, %214 : vector<32x32xf32>
    %cst_105 = arith.constant dense<0.000000e+00> : vector<32xf32>
    %216 = vector.multi_reduction <add>, %215, %cst_105 [1] : vector<32x32xf32> to vector<32xf32>
    %217 = vector.shape_cast %216 : vector<32xf32> to vector<32x1xf32>
    %cst_106 = arith.constant 3.200000e+01 : f32
    %218 = vector.broadcast %cst_106 : f32 to vector<32x1xf32>
    %219 = arith.divf %217, %218 : vector<32x1xf32>
    %220 = vector.broadcast %219 : vector<32x1xf32> to vector<32x32xf32>
    %221 = arith.subf %215, %220 : vector<32x32xf32>
    %222 = arith.mulf %221, %221 : vector<32x32xf32>
    %cst_107 = arith.constant dense<0.000000e+00> : vector<32xf32>
    %223 = vector.multi_reduction <add>, %222, %cst_107 [1] : vector<32x32xf32> to vector<32xf32>
    %224 = vector.shape_cast %223 : vector<32xf32> to vector<32x1xf32>
    %cst_108 = arith.constant 3.200000e+01 : f32
    %225 = vector.broadcast %cst_108 : f32 to vector<32x1xf32>
    %226 = arith.divf %224, %225 : vector<32x1xf32>
    %227 = vector.broadcast %219 : vector<32x1xf32> to vector<32x32xf32>
    %228 = arith.subf %215, %227 : vector<32x32xf32>
    %cst_109 = arith.constant 9.99999974E-6 : f32
    %229 = vector.broadcast %cst_109 : f32 to vector<32x1xf32>
    %230 = arith.addf %226, %229 : vector<32x1xf32>
    %231 = math.rsqrt %230 : vector<32x1xf32>
    %232 = vector.broadcast %231 : vector<32x1xf32> to vector<32x32xf32>
    %233 = arith.mulf %228, %232 : vector<32x32xf32>
    %c0_110 = arith.constant 0 : index
    %c0_111 = arith.constant 0 : index
    %c0_112 = arith.constant 0 : index
    %234 = vector.load %arg15[%c0_110, %c0_111, %c0_112] : memref<1x1x32xf32, #tpu.memory_space<vmem>>, vector<1x1x32xf32>
    %235 = vector.shape_cast %234 : vector<1x1x32xf32> to vector<1x32xf32>
    %236 = vector.broadcast %235 : vector<1x32xf32> to vector<32x32xf32>
    %237 = arith.mulf %233, %236 : vector<32x32xf32>
    %c0_113 = arith.constant 0 : index
    %c0_114 = arith.constant 0 : index
    %c0_115 = arith.constant 0 : index
    %238 = vector.load %arg16[%c0_113, %c0_114, %c0_115] : memref<1x1x32xf32, #tpu.memory_space<vmem>>, vector<1x1x32xf32>
    %239 = vector.shape_cast %238 : vector<1x1x32xf32> to vector<1x32xf32>
    %240 = vector.broadcast %239 : vector<1x32xf32> to vector<32x32xf32>
    %241 = arith.addf %237, %240 : vector<32x32xf32>
    %c0_116 = arith.constant 0 : index
    %c0_117 = arith.constant 0 : index
    %242 = vector.load %arg18[%c0_116, %c0_117] : memref<32x32xf32, #tpu.memory_space<vmem>>, vector<32x32xf32>
    tpu.vector_store %arg18[%c0_116, %c0_117], %241 {strides = array<i32>} : memref<32x32xf32, #tpu.memory_space<vmem>>, vector<32x32xf32>,
    %c1_i32 = arith.constant 1 : i32
    %243 = arith.cmpi eq, %arg0, %c1_i32 : i32
    %244 = arith.extui %243 : i1 to i32
    %c0_i32_118 = arith.constant 0 : i32
    %245 = arith.cmpi ne, %244, %c0_i32_118 : i32
    scf.if %245 {
      %246 = vector.extract_strided_slice %241 {offsets = [0, 0], sizes = [16, 32], strides = [1, 1]} : vector<32x32xf32> to vector<16x32xf32>
      %c0_119 = arith.constant 0 : index
      %c0_120 = arith.constant 0 : index
      %247 = vector.load %arg17[%c0_119, %c0_120] : memref<16x64xf32, #tpu.memory_space<vmem>>, vector<16x32xf32>
      tpu.vector_store %arg17[%c0_119, %c0_120], %246 {strides = array<i32>} : memref<16x64xf32, #tpu.memory_space<vmem>>, vector<16x32xf32>,
      %248 = vector.extract_strided_slice %241 {offsets = [16, 0], sizes = [16, 32], strides = [1, 1]} : vector<32x32xf32> to vector<16x32xf32>
      %c0_121 = arith.constant 0 : index
      %c32 = arith.constant 32 : index
      %249 = vector.load %arg17[%c0_121, %c32] : memref<16x64xf32, #tpu.memory_space<vmem>>, vector<16x32xf32>
      tpu.vector_store %arg17[%c0_121, %c32], %248 {strides = array<i32>} : memref<16x64xf32, #tpu.memory_space<vmem>>, vector<16x32xf32>,
    } else {
    }
    return
  }
  func.func @transform_0(%arg0: i32) -> (i32, i32) {
    %c0_i32 = arith.constant 0 : i32
    %c0_i32_0 = arith.constant 0 : i32
    %c0_i32_1 = arith.constant 0 : i32
    return %c0_i32, %c0_i32_0 : i32, i32
  }
  func.func @transform_1(%arg0: i32) -> (i32, i32) {
    %c0_i32 = arith.constant 0 : i32
    %c0_i32_0 = arith.constant 0 : i32
    %c0_i32_1 = arith.constant 0 : i32
    return %c0_i32, %c0_i32_0 : i32, i32
  }
  func.func @transform_2(%arg0: i32) -> (i32, i32, i32) {
    %c0_i32 = arith.constant 0 : i32
    %c0_i32_0 = arith.constant 0 : i32
    %c0_i32_1 = arith.constant 0 : i32
    return %arg0, %c0_i32, %c0_i32_0 : i32, i32, i32
  }
  func.func @transform_3(%arg0: i32) -> (i32, i32, i32) {
    %c0_i32 = arith.constant 0 : i32
    %c0_i32_0 = arith.constant 0 : i32
    %c0_i32_1 = arith.constant 0 : i32
    return %arg0, %c0_i32, %c0_i32_0 : i32, i32, i32
  }
  func.func @transform_4(%arg0: i32) -> (i32, i32, i32) {
    %c0_i32 = arith.constant 0 : i32
    %c0_i32_0 = arith.constant 0 : i32
    %c0_i32_1 = arith.constant 0 : i32
    return %arg0, %c0_i32, %c0_i32_0 : i32, i32, i32
  }
  func.func @transform_5(%arg0: i32) -> (i32, i32, i32) {
    %c0_i32 = arith.constant 0 : i32
    %c0_i32_0 = arith.constant 0 : i32
    %c0_i32_1 = arith.constant 0 : i32
    return %arg0, %c0_i32, %c0_i32_0 : i32, i32, i32
  }
  func.func @transform_6(%arg0: i32) -> (i32, i32, i32) {
    %c0_i32 = arith.constant 0 : i32
    %c0_i32_0 = arith.constant 0 : i32
    %c0_i32_1 = arith.constant 0 : i32
    return %arg0, %c0_i32, %c0_i32_0 : i32, i32, i32
  }
  func.func @transform_7(%arg0: i32) -> (i32, i32, i32) {
    %c0_i32 = arith.constant 0 : i32
    %c0_i32_0 = arith.constant 0 : i32
    %c0_i32_1 = arith.constant 0 : i32
    return %arg0, %c0_i32, %c0_i32_0 : i32, i32, i32
  }
  func.func @transform_8(%arg0: i32) -> (i32, i32, i32) {
    %c0_i32 = arith.constant 0 : i32
    %c0_i32_0 = arith.constant 0 : i32
    %c0_i32_1 = arith.constant 0 : i32
    return %arg0, %c0_i32, %c0_i32_0 : i32, i32, i32
  }
  func.func @transform_9(%arg0: i32) -> (i32, i32, i32) {
    %c0_i32 = arith.constant 0 : i32
    %c0_i32_0 = arith.constant 0 : i32
    %c0_i32_1 = arith.constant 0 : i32
    return %arg0, %c0_i32, %c0_i32_0 : i32, i32, i32
  }
  func.func @transform_10(%arg0: i32) -> (i32, i32, i32) {
    %c0_i32 = arith.constant 0 : i32
    %c0_i32_0 = arith.constant 0 : i32
    %c0_i32_1 = arith.constant 0 : i32
    return %arg0, %c0_i32, %c0_i32_0 : i32, i32, i32
  }
  func.func @transform_11(%arg0: i32) -> (i32, i32, i32) {
    %c0_i32 = arith.constant 0 : i32
    %c0_i32_0 = arith.constant 0 : i32
    %c0_i32_1 = arith.constant 0 : i32
    return %arg0, %c0_i32, %c0_i32_0 : i32, i32, i32
  }
  func.func @transform_12(%arg0: i32) -> (i32, i32, i32) {
    %c0_i32 = arith.constant 0 : i32
    %c0_i32_0 = arith.constant 0 : i32
    %c0_i32_1 = arith.constant 0 : i32
    return %arg0, %c0_i32, %c0_i32_0 : i32, i32, i32
  }
  func.func @transform_13(%arg0: i32) -> (i32, i32, i32) {
    %c0_i32 = arith.constant 0 : i32
    %c0_i32_0 = arith.constant 0 : i32
    %c0_i32_1 = arith.constant 0 : i32
    return %arg0, %c0_i32, %c0_i32_0 : i32, i32, i32
  }
  func.func @transform_14(%arg0: i32) -> (i32, i32, i32) {
    %c0_i32 = arith.constant 0 : i32
    %c0_i32_0 = arith.constant 0 : i32
    %c0_i32_1 = arith.constant 0 : i32
    return %arg0, %c0_i32, %c0_i32_0 : i32, i32, i32
  }
  func.func @transform_15(%arg0: i32) -> (i32, i32, i32) {
    %c0_i32 = arith.constant 0 : i32
    %c0_i32_0 = arith.constant 0 : i32
    %c0_i32_1 = arith.constant 0 : i32
    return %arg0, %c0_i32, %c0_i32_0 : i32, i32, i32
  }
  func.func @transform_16(%arg0: i32) -> (i32, i32) {
    %c0_i32 = arith.constant 0 : i32
    %c0_i32_0 = arith.constant 0 : i32
    %c0_i32_1 = arith.constant 0 : i32
    return %c0_i32, %c0_i32_0 : i32, i32
  }
}

</mosaic_0001>

<llo_original>
// kernel: tpu_custom_call.1
$region0: #{tpu_custom_call.1}
  #allocation0 [shape = 'u32[]', space=smem, size = 0x4, offset = 0x4, fixed_abs, tag = 'smem constant byte address 0x4 - core index']
  #allocation1 [shape = 'u32[144,128]{1,0:T(1,128)}', space=vmem, size = 0x12000, scoped, tag = 'internal scratch']
  #allocation2 [shape = 'f32[32,32]{1,0:T(8,128)}', space=vmem, size = 0x4000, scoped, tag = 'scratch operand']
  #allocation3 [shape = 'f32[32,32]{1,0:T(8,128)}', space=vmem, size = 0x4000, scoped, tag = 'scratch operand']
  #allocation4 [shape = 'f32[32,32]{1,0:T(8,128)}', space=vmem, size = 0x4000, scoped, tag = 'scratch operand']
  %s0 = inlined_call_operand.hbm [shape: f32[16,64], index: 0, kind: input, shape index: {}]
  %s1 = inlined_call_operand.hbm [shape: f32[16,64], index: 1, kind: input, shape index: {}]
  %s2 = inlined_call_operand.vmem [shape: f32[2,32,64], index: 2, kind: input, shape index: {}]
  %s3 = inlined_call_operand.vmem [shape: f32[2,1,64], index: 3, kind: input, shape index: {}]
  %s4 = inlined_call_operand.vmem [shape: f32[2,32,32], index: 4, kind: input, shape index: {}]
  %s5 = inlined_call_operand.vmem [shape: f32[2,1,32], index: 5, kind: input, shape index: {}]
  %s6 = inlined_call_operand.vmem [shape: f32[2,32,32], index: 6, kind: input, shape index: {}]
  %s7 = inlined_call_operand.vmem [shape: f32[2,1,32], index: 7, kind: input, shape index: {}]
  %s8 = inlined_call_operand.hbm [shape: f32[2,32,64], index: 8, kind: input, shape index: {}]
  %s9 = inlined_call_operand.vmem [shape: f32[2,1,64], index: 9, kind: input, shape index: {}]
  %s10 = inlined_call_operand.vmem [shape: f32[2,64,32], index: 10, kind: input, shape index: {}]
  %s11 = inlined_call_operand.vmem [shape: f32[2,1,32], index: 11, kind: input, shape index: {}]
  %s12 = inlined_call_operand.vmem [shape: f32[2,1,32], index: 12, kind: input, shape index: {}]
  %s13 = inlined_call_operand.vmem [shape: f32[2,1,32], index: 13, kind: input, shape index: {}]
  %s14 = inlined_call_operand.vmem [shape: f32[2,1,32], index: 14, kind: input, shape index: {}]
  %s15 = inlined_call_operand.vmem [shape: f32[2,1,32], index: 15, kind: input, shape index: {}]
  %s16 = inlined_call_operand.hbm [shape: f32[16,64], index: 16, kind: output, shape index: {}]
  %s17 = sld [smem:[#allocation0]]
  $region117: #{tpu_custom_call.1} parent=0
    _
  %s19 = ssub.s32 1, %s17
  %s20 = scalar_select 0, %s19, %s17
  $region1: #{tpu_custom_call.1} parent=0
    #allocation5 [shape = 'u8[8192]{0}', space=vmem, size = 0x2000, scoped, tag = 'input window, operand 0, single buffered']
    #allocation6 [shape = 's32[2]{0}', space=sflag, size = 0x8, scoped, tag = 'scoped memory for tpu_custom_call.1']
    #allocation7 [shape = 's32[2]{0}', space=sflag, size = 0x8, scoped, tag = 'scoped memory for tpu_custom_call.1']
    #allocation8 [shape = 'u8[8192]{0}', space=vmem, size = 0x2000, scoped, tag = 'input window, operand 1, single buffered']
    #allocation9 [shape = 's32[1]{0}', space=sflag, size = 0x4, scoped, tag = 'scoped memory for tpu_custom_call.1']
    #allocation10 [shape = 'u8[32768]{0}', space=vmem, size = 0x8000, scoped, tag = 'input window, operand 8']
    #allocation11 [shape = 'u8[8192]{0}', space=vmem, size = 0x2000, scoped, tag = 'output window, operand 0, single buffered']
    %21 = vsyncpa [#allocation6], 0
    %22 = vsyncpa [#allocation9], 0
    %23 = vsyncpa [#allocation7], 0
    loop: start=0, step=1, limit=4
    $region2: #{tpu_custom_call.1} parent=1 // loop_pre_header
      _
    $region3: #{tpu_custom_call.1} parent=1 // loop_header
      %s25 = sphi 0, %s29
      %p26 = scmp.ge.s32.totalorder %s25, 4
      %s33 = sphi 0, %s33
      %s35 = sphi 0, %s33
      %s36 = sphi 0, %s35
      %s50 = sphi 0, %s36
      %s54 = sphi 0, %s54
      %s56 = sphi 0, %s54
      %s57 = sphi 0, %s56
      %s71 = sphi 0, %s57
      %s77 = sphi 0, %s79
      %s80 = sphi 0, %s77
      %s81 = sphi 0, %s80
      %s97 = sphi 0, %s81
      %s103 = sphi 0, %s105
      %s106 = sphi 0, %s103
      %s107 = sphi 0, %s106
      %s123 = sphi 0, %s107
      %s129 = sphi 0, %s131
      %s132 = sphi 0, %s129
      %s133 = sphi 0, %s132
      %s149 = sphi 0, %s133
      %s155 = sphi 0, %s157
      %s158 = sphi 0, %s155
      %s159 = sphi 0, %s158
      %s175 = sphi 0, %s159
      %s181 = sphi 0, %s183
      %s184 = sphi 0, %s181
      %s185 = sphi 0, %s184
      %s201 = sphi 0, %s185
      %s207 = sphi 0, %s209
      %s210 = sphi 0, %s207
      %s211 = sphi 0, %s210
      %s227 = sphi 0, %s211
      %s233 = sphi 0, %s235
      %s236 = sphi 0, %s233
      %s237 = sphi 0, %s236
      %s253 = sphi 0, %s237
      %s259 = sphi 0, %s261
      %s262 = sphi 0, %s259
      %s263 = sphi 0, %s262
      %s279 = sphi 0, %s263
      %s285 = sphi 0, %s287
      %s288 = sphi 0, %s285
      %s289 = sphi 0, %s288
      %s305 = sphi 0, %s289
      %s311 = sphi 0, %s313
      %s314 = sphi 0, %s311
      %s315 = sphi 0, %s314
      %s331 = sphi 0, %s315
      %s337 = sphi 0, %s339
      %s340 = sphi 0, %s337
      %s341 = sphi 0, %s340
      %s357 = sphi 0, %s341
      %s363 = sphi 0, %s365
      %s366 = sphi 0, %s363
      %s367 = sphi 0, %s366
      %s383 = sphi 0, %s367
      %s389 = sphi 0, %s391
      %s392 = sphi 0, %s389
      %s393 = sphi 0, %s392
      %s409 = sphi 0, %s393
      %s415 = sphi 0, %s417
      %s418 = sphi 0, %s415
      %s419 = sphi 0, %s418
      %s435 = sphi 0, %s419
      %s439 = sphi 0, %s439
      %s441 = sphi 0, %s439
      %s442 = sphi 0, %s441
      %s456 = sphi 0, %s442
    $region4: #{tpu_custom_call.1} parent=1 // loop_header_branch
      %28 = sbr.rel (%p26) target = $region8
    $region5: #{tpu_custom_call.1} parent=1 // loop_body
      %s30 = ssub.s32 %s25, 1
      %s31 = ssub.s32 %s25, 2
      %s32 = sadd.s32 %s25, 1
      %s34 = sadd.s32 %s33, 1
      %p37 = scmp.eq.s32.totalorder %s25, 1
      %p38 = scmp.ne.s32.totalorder %s33, %s35
      %p39 = scmp.eq.s32.totalorder %s25, 0
      %p40 = por %p38, %p39
      %p41 = scmp.ne.s32.totalorder %s33, %s35
      %p42 = scmp.eq.s32.totalorder %s30, 1
      %p43 = por %p41, %p42
      %p44 = scmp.ne.s32.totalorder %s35, %s36
      %p45 = scmp.eq.s32.totalorder %s30, 0
      %p46 = por %p44, %p45
      %p47 = scmp.ne.s32.totalorder %s35, %s36
      %p48 = scmp.eq.s32.totalorder %s31, 1
      %p49 = por %p47, %p48
      %p51 = scmp.ne.s32.totalorder %s36, %s50
      %p52 = scmp.eq.s32.totalorder %s31, 0
      %p53 = por %p51, %p52
      %s55 = sadd.s32 %s54, 1
      %p58 = scmp.eq.s32.totalorder %s25, 1
      %p59 = scmp.ne.s32.totalorder %s54, %s56
      %p60 = scmp.eq.s32.totalorder %s25, 0
      %p61 = por %p59, %p60
      %p62 = scmp.ne.s32.totalorder %s54, %s56
      %p63 = scmp.eq.s32.totalorder %s30, 1
      %p64 = por %p62, %p63
      %p65 = scmp.ne.s32.totalorder %s56, %s57
      %p66 = scmp.eq.s32.totalorder %s30, 0
      %p67 = por %p65, %p66
      %p68 = scmp.ne.s32.totalorder %s56, %s57
      %p69 = scmp.eq.s32.totalorder %s31, 1
      %p70 = por %p68, %p69
      %p72 = scmp.ne.s32.totalorder %s57, %s71
      %p73 = scmp.eq.s32.totalorder %s31, 0
      %p74 = por %p72, %p73
      %s75 = ssub.s32 %s25, %s32
      %p76 = scmp.eq.s32.totalorder %s75, 0
      %s78 = sadd.s32 %s77, 1
      %s79 = scalar_select %p76, %s77, %s78
      %p82 = pneg %p76
      %p83 = scmp.eq.s32.totalorder %s25, 1
      %p84 = por %p82, %p83
      %p85 = scmp.ne.s32.totalorder %s77, %s80
      %p86 = scmp.eq.s32.totalorder %s25, 0
      %p87 = por %p85, %p86
      %p88 = scmp.ne.s32.totalorder %s77, %s80
      %p89 = scmp.eq.s32.totalorder %s30, 1
      %p90 = por %p88, %p89
      %p91 = scmp.ne.s32.totalorder %s80, %s81
      %p92 = scmp.eq.s32.totalorder %s30, 0
      %p93 = por %p91, %p92
      %p94 = scmp.ne.s32.totalorder %s80, %s81
      %p95 = scmp.eq.s32.totalorder %s31, 1
      %p96 = por %p94, %p95
      %p98 = scmp.ne.s32.totalorder %s81, %s97
      %p99 = scmp.eq.s32.totalorder %s31, 0
      %p100 = por %p98, %p99
      %s101 = ssub.s32 %s25, %s32
      %p102 = scmp.eq.s32.totalorder %s101, 0
      %s104 = sadd.s32 %s103, 1
      %s105 = scalar_select %p102, %s103, %s104
      %p108 = pneg %p102
      %p109 = scmp.eq.s32.totalorder %s25, 1
      %p110 = por %p108, %p109
      %p111 = scmp.ne.s32.totalorder %s103, %s106
      %p112 = scmp.eq.s32.totalorder %s25, 0
      %p113 = por %p111, %p112
      %p114 = scmp.ne.s32.totalorder %s103, %s106
      %p115 = scmp.eq.s32.totalorder %s30, 1
      %p116 = por %p114, %p115
      %p117 = scmp.ne.s32.totalorder %s106, %s107
      %p118 = scmp.eq.s32.totalorder %s30, 0
      %p119 = por %p117, %p118
      %p120 = scmp.ne.s32.totalorder %s106, %s107
      %p121 = scmp.eq.s32.totalorder %s31, 1
      %p122 = por %p120, %p121
      %p124 = scmp.ne.s32.totalorder %s107, %s123
      %p125 = scmp.eq.s32.totalorder %s31, 0
      %p126 = por %p124, %p125
      %s127 = ssub.s32 %s25, %s32
      %p128 = scmp.eq.s32.totalorder %s127, 0
      %s130 = sadd.s32 %s129, 1
      %s131 = scalar_select %p128, %s129, %s130
      %p134 = pneg %p128
      %p135 = scmp.eq.s32.totalorder %s25, 1
      %p136 = por %p134, %p135
      %p137 = scmp.ne.s32.totalorder %s129, %s132
      %p138 = scmp.eq.s32.totalorder %s25, 0
      %p139 = por %p137, %p138
      %p140 = scmp.ne.s32.totalorder %s129, %s132
      %p141 = scmp.eq.s32.totalorder %s30, 1
      %p142 = por %p140, %p141
      %p143 = scmp.ne.s32.totalorder %s132, %s133
      %p144 = scmp.eq.s32.totalorder %s30, 0
      %p145 = por %p143, %p144
      %p146 = scmp.ne.s32.totalorder %s132, %s133
      %p147 = scmp.eq.s32.totalorder %s31, 1
      %p148 = por %p146, %p147
      %p150 = scmp.ne.s32.totalorder %s133, %s149
      %p151 = scmp.eq.s32.totalorder %s31, 0
      %p152 = por %p150, %p151
      %s153 = ssub.s32 %s25, %s32
      %p154 = scmp.eq.s32.totalorder %s153, 0
      %s156 = sadd.s32 %s155, 1
      %s157 = scalar_select %p154, %s155, %s156
      %p160 = pneg %p154
      %p161 = scmp.eq.s32.totalorder %s25, 1
      %p162 = por %p160, %p161
      %p163 = scmp.ne.s32.totalorder %s155, %s158
      %p164 = scmp.eq.s32.totalorder %s25, 0
      %p165 = por %p163, %p164
      %p166 = scmp.ne.s32.totalorder %s155, %s158
      %p167 = scmp.eq.s32.totalorder %s30, 1
      %p168 = por %p166, %p167
      %p169 = scmp.ne.s32.totalorder %s158, %s159
      %p170 = scmp.eq.s32.totalorder %s30, 0
      %p171 = por %p169, %p170
      %p172 = scmp.ne.s32.totalorder %s158, %s159
      %p173 = scmp.eq.s32.totalorder %s31, 1
      %p174 = por %p172, %p173
      %p176 = scmp.ne.s32.totalorder %s159, %s175
      %p177 = scmp.eq.s32.totalorder %s31, 0
      %p178 = por %p176, %p177
      %s179 = ssub.s32 %s25, %s32
      %p180 = scmp.eq.s32.totalorder %s179, 0
      %s182 = sadd.s32 %s181, 1
      %s183 = scalar_select %p180, %s181, %s182
      %p186 = pneg %p180
      %p187 = scmp.eq.s32.totalorder %s25, 1
      %p188 = por %p186, %p187
      %p189 = scmp.ne.s32.totalorder %s181, %s184
      %p190 = scmp.eq.s32.totalorder %s25, 0
      %p191 = por %p189, %p190
      %p192 = scmp.ne.s32.totalorder %s181, %s184
      %p193 = scmp.eq.s32.totalorder %s30, 1
      %p194 = por %p192, %p193
      %p195 = scmp.ne.s32.totalorder %s184, %s185
      %p196 = scmp.eq.s32.totalorder %s30, 0
      %p197 = por %p195, %p196
      %p198 = scmp.ne.s32.totalorder %s184, %s185
      %p199 = scmp.eq.s32.totalorder %s31, 1
      %p200 = por %p198, %p199
      %p202 = scmp.ne.s32.totalorder %s185, %s201
      %p203 = scmp.eq.s32.totalorder %s31, 0
      %p204 = por %p202, %p203
      %s205 = ssub.s32 %s25, %s32
      %p206 = scmp.eq.s32.totalorder %s205, 0
      %s208 = sadd.s32 %s207, 1
      %s209 = scalar_select %p206, %s207, %s208
      %p212 = pneg %p206
      %p213 = scmp.eq.s32.totalorder %s25, 1
      %p214 = por %p212, %p213
      %p215 = scmp.ne.s32.totalorder %s207, %s210
      %p216 = scmp.eq.s32.totalorder %s25, 0
      %p217 = por %p215, %p216
      %p218 = scmp.ne.s32.totalorder %s207, %s210
      %p219 = scmp.eq.s32.totalorder %s30, 1
      %p220 = por %p218, %p219
      %p221 = scmp.ne.s32.totalorder %s210, %s211
      %p222 = scmp.eq.s32.totalorder %s30, 0
      %p223 = por %p221, %p222
      %p224 = scmp.ne.s32.totalorder %s210, %s211
      %p225 = scmp.eq.s32.totalorder %s31, 1
      %p226 = por %p224, %p225
      %p228 = scmp.ne.s32.totalorder %s211, %s227
      %p229 = scmp.eq.s32.totalorder %s31, 0
      %p230 = por %p228, %p229
      %s231 = ssub.s32 %s25, %s32
      %p232 = scmp.eq.s32.totalorder %s231, 0
      %s234 = sadd.s32 %s233, 1
      %s235 = scalar_select %p232, %s233, %s234
      %p238 = pneg %p232
      %p239 = scmp.eq.s32.totalorder %s25, 1
      %p240 = por %p238, %p239
      %p241 = scmp.ne.s32.totalorder %s233, %s236
      %p242 = scmp.eq.s32.totalorder %s25, 0
      %p243 = por %p241, %p242
      %p244 = scmp.ne.s32.totalorder %s233, %s236
      %p245 = scmp.eq.s32.totalorder %s30, 1
      %p246 = por %p244, %p245
      %p247 = scmp.ne.s32.totalorder %s236, %s237
      %p248 = scmp.eq.s32.totalorder %s30, 0
      %p249 = por %p247, %p248
      %p250 = scmp.ne.s32.totalorder %s236, %s237
      %p251 = scmp.eq.s32.totalorder %s31, 1
      %p252 = por %p250, %p251
      %p254 = scmp.ne.s32.totalorder %s237, %s253
      %p255 = scmp.eq.s32.totalorder %s31, 0
      %p256 = por %p254, %p255
      %s257 = ssub.s32 %s25, %s32
      %p258 = scmp.eq.s32.totalorder %s257, 0
      %s260 = sadd.s32 %s259, 1
      %s261 = scalar_select %p258, %s259, %s260
      %p264 = pneg %p258
      %p265 = scmp.eq.s32.totalorder %s25, 1
      %p266 = por %p264, %p265
      %p267 = scmp.ne.s32.totalorder %s259, %s262
      %p268 = scmp.eq.s32.totalorder %s25, 0
      %p269 = por %p267, %p268
      %p270 = scmp.ne.s32.totalorder %s259, %s262
      %p271 = scmp.eq.s32.totalorder %s30, 1
      %p272 = por %p270, %p271
      %p273 = scmp.ne.s32.totalorder %s262, %s263
      %p274 = scmp.eq.s32.totalorder %s30, 0
      %p275 = por %p273, %p274
      %p276 = scmp.ne.s32.totalorder %s262, %s263
      %p277 = scmp.eq.s32.totalorder %s31, 1
      %p278 = por %p276, %p277
      %p280 = scmp.ne.s32.totalorder %s263, %s279
      %p281 = scmp.eq.s32.totalorder %s31, 0
      %p282 = por %p280, %p281
      %s283 = ssub.s32 %s25, %s32
      %p284 = scmp.eq.s32.totalorder %s283, 0
      %s286 = sadd.s32 %s285, 1
      %s287 = scalar_select %p284, %s285, %s286
      %p290 = pneg %p284
      %p291 = scmp.eq.s32.totalorder %s25, 1
      %p292 = por %p290, %p291
      %p293 = scmp.ne.s32.totalorder %s285, %s288
      %p294 = scmp.eq.s32.totalorder %s25, 0
      %p295 = por %p293, %p294
      %p296 = scmp.ne.s32.totalorder %s285, %s288
      %p297 = scmp.eq.s32.totalorder %s30, 1
      %p298 = por %p296, %p297
      %p299 = scmp.ne.s32.totalorder %s288, %s289
      %p300 = scmp.eq.s32.totalorder %s30, 0
      %p301 = por %p299, %p300
      %p302 = scmp.ne.s32.totalorder %s288, %s289
      %p303 = scmp.eq.s32.totalorder %s31, 1
      %p304 = por %p302, %p303
      %p306 = scmp.ne.s32.totalorder %s289, %s305
      %p307 = scmp.eq.s32.totalorder %s31, 0
      %p308 = por %p306, %p307
      %s309 = ssub.s32 %s25, %s32
      %p310 = scmp.eq.s32.totalorder %s309, 0
      %s312 = sadd.s32 %s311, 1
      %s313 = scalar_select %p310, %s311, %s312
      %p316 = pneg %p310
      %p317 = scmp.eq.s32.totalorder %s25, 1
      %p318 = por %p316, %p317
      %p319 = scmp.ne.s32.totalorder %s311, %s314
      %p320 = scmp.eq.s32.totalorder %s25, 0
      %p321 = por %p319, %p320
      %p322 = scmp.ne.s32.totalorder %s311, %s314
      %p323 = scmp.eq.s32.totalorder %s30, 1
      %p324 = por %p322, %p323
      %p325 = scmp.ne.s32.totalorder %s314, %s315
      %p326 = scmp.eq.s32.totalorder %s30, 0
      %p327 = por %p325, %p326
      %p328 = scmp.ne.s32.totalorder %s314, %s315
      %p329 = scmp.eq.s32.totalorder %s31, 1
      %p330 = por %p328, %p329
      %p332 = scmp.ne.s32.totalorder %s315, %s331
      %p333 = scmp.eq.s32.totalorder %s31, 0
      %p334 = por %p332, %p333
      %s335 = ssub.s32 %s25, %s32
      %p336 = scmp.eq.s32.totalorder %s335, 0
      %s338 = sadd.s32 %s337, 1
      %s339 = scalar_select %p336, %s337, %s338
      %p342 = pneg %p336
      %p343 = scmp.eq.s32.totalorder %s25, 1
      %p344 = por %p342, %p343
      %p345 = scmp.ne.s32.totalorder %s337, %s340
      %p346 = scmp.eq.s32.totalorder %s25, 0
      %p347 = por %p345, %p346
      %p348 = scmp.ne.s32.totalorder %s337, %s340
      %p349 = scmp.eq.s32.totalorder %s30, 1
      %p350 = por %p348, %p349
      %p351 = scmp.ne.s32.totalorder %s340, %s341
      %p352 = scmp.eq.s32.totalorder %s30, 0
      %p353 = por %p351, %p352
      %p354 = scmp.ne.s32.totalorder %s340, %s341
      %p355 = scmp.eq.s32.totalorder %s31, 1
      %p356 = por %p354, %p355
      %p358 = scmp.ne.s32.totalorder %s341, %s357
      %p359 = scmp.eq.s32.totalorder %s31, 0
      %p360 = por %p358, %p359
      %s361 = ssub.s32 %s25, %s32
      %p362 = scmp.eq.s32.totalorder %s361, 0
      %s364 = sadd.s32 %s363, 1
      %s365 = scalar_select %p362, %s363, %s364
      %p368 = pneg %p362
      %p369 = scmp.eq.s32.totalorder %s25, 1
      %p370 = por %p368, %p369
      %p371 = scmp.ne.s32.totalorder %s363, %s366
      %p372 = scmp.eq.s32.totalorder %s25, 0
      %p373 = por %p371, %p372
      %p374 = scmp.ne.s32.totalorder %s363, %s366
      %p375 = scmp.eq.s32.totalorder %s30, 1
      %p376 = por %p374, %p375
      %p377 = scmp.ne.s32.totalorder %s366, %s367
      %p378 = scmp.eq.s32.totalorder %s30, 0
      %p379 = por %p377, %p378
      %p380 = scmp.ne.s32.totalorder %s366, %s367
      %p381 = scmp.eq.s32.totalorder %s31, 1
      %p382 = por %p380, %p381
      %p384 = scmp.ne.s32.totalorder %s367, %s383
      %p385 = scmp.eq.s32.totalorder %s31, 0
      %p386 = por %p384, %p385
      %s387 = ssub.s32 %s25, %s32
      %p388 = scmp.eq.s32.totalorder %s387, 0
      %s390 = sadd.s32 %s389, 1
      %s391 = scalar_select %p388, %s389, %s390
      %p394 = pneg %p388
      %p395 = scmp.eq.s32.totalorder %s25, 1
      %p396 = por %p394, %p395
      %p397 = scmp.ne.s32.totalorder %s389, %s392
      %p398 = scmp.eq.s32.totalorder %s25, 0
      %p399 = por %p397, %p398
      %p400 = scmp.ne.s32.totalorder %s389, %s392
      %p401 = scmp.eq.s32.totalorder %s30, 1
      %p402 = por %p400, %p401
      %p403 = scmp.ne.s32.totalorder %s392, %s393
      %p404 = scmp.eq.s32.totalorder %s30, 0
      %p405 = por %p403, %p404
      %p406 = scmp.ne.s32.totalorder %s392, %s393
      %p407 = scmp.eq.s32.totalorder %s31, 1
      %p408 = por %p406, %p407
      %p410 = scmp.ne.s32.totalorder %s393, %s409
      %p411 = scmp.eq.s32.totalorder %s31, 0
      %p412 = por %p410, %p411
      %s413 = ssub.s32 %s25, %s32
      %p414 = scmp.eq.s32.totalorder %s413, 0
      %s416 = sadd.s32 %s415, 1
      %s417 = scalar_select %p414, %s415, %s416
      %p420 = pneg %p414
      %p421 = scmp.eq.s32.totalorder %s25, 1
      %p422 = por %p420, %p421
      %p423 = scmp.ne.s32.totalorder %s415, %s418
      %p424 = scmp.eq.s32.totalorder %s25, 0
      %p425 = por %p423, %p424
      %p426 = scmp.ne.s32.totalorder %s415, %s418
      %p427 = scmp.eq.s32.totalorder %s30, 1
      %p428 = por %p426, %p427
      %p429 = scmp.ne.s32.totalorder %s418, %s419
      %p430 = scmp.eq.s32.totalorder %s30, 0
      %p431 = por %p429, %p430
      %p432 = scmp.ne.s32.totalorder %s418, %s419
      %p433 = scmp.eq.s32.totalorder %s31, 1
      %p434 = por %p432, %p433
      %p436 = scmp.ne.s32.totalorder %s419, %s435
      %p437 = scmp.eq.s32.totalorder %s31, 0
      %p438 = por %p436, %p437
      %s440 = sadd.s32 %s439, 1
      %p443 = scmp.eq.s32.totalorder %s25, 1
      %p444 = scmp.ne.s32.totalorder %s439, %s441
      %p445 = scmp.eq.s32.totalorder %s25, 0
      %p446 = por %p444, %p445
      %p447 = scmp.ne.s32.totalorder %s439, %s441
      %p448 = scmp.eq.s32.totalorder %s30, 1
      %p449 = por %p447, %p448
      %p450 = scmp.ne.s32.totalorder %s441, %s442
      %p451 = scmp.eq.s32.totalorder %s30, 0
      %p452 = por %p450, %p451
      %p453 = scmp.ne.s32.totalorder %s441, %s442
      %p454 = scmp.eq.s32.totalorder %s31, 1
      %p455 = por %p453, %p454
      %p457 = scmp.ne.s32.totalorder %s442, %s456
      %p458 = scmp.eq.s32.totalorder %s31, 0
      %p459 = por %p457, %p458
      %p460 = scmp.le.s32.totalorder 1, %s25
      %p461 = scmp.lt.s32.totalorder %s25, 3
      %p462 = pnand %p460, %p461
      %p463 = pneg %p462
      // Predicated region
      $region9: #{tpu_custom_call.1} parent=5 // pred_check
        _
      $region10: #{tpu_custom_call.1} parent=5 // pred_check_branch
        %465 = sbr.rel (%p462) target = $region12
      $region11: #{tpu_custom_call.1} parent=5 // pred_region
        %s466 = ssub.s32 %s25, 1
        // Predicated region
        $region13: #{tpu_custom_call.1} parent=11 // pred_check
          %p467 = pneg %p46
        $region14: #{tpu_custom_call.1} parent=11 // pred_check_branch
          %469 = sbr.rel (%p467) target = $region16
        $region15: #{tpu_custom_call.1} parent=11 // pred_region
          %s471 = ssub.s32 256, 256
          %472 = vsyncadd [#allocation6], %s471
          %s473 = sshll.u32 [#allocation5], 4
          %s474 = int_to_ptr.vmem [resolvable:$true] %s473
          %479 = dma.hbm_to_vmem [thread:$0]  %s0, 256, %s474, [#allocation6], 128, 128, 8
        $region16: #{tpu_custom_call.1} parent=11 // pred_fallthru
          _
        // Predicated region
        $region17: #{tpu_custom_call.1} parent=11 // pred_check
          %p480 = pneg %p67
        $region18: #{tpu_custom_call.1} parent=11 // pred_check_branch
          %482 = sbr.rel (%p480) target = $region20
        $region19: #{tpu_custom_call.1} parent=11 // pred_region
          %s484 = ssub.s32 256, 256
          %485 = vsyncadd [#allocation9], %s484
          %s486 = sshll.u32 [#allocation8], 4
          %s487 = int_to_ptr.vmem [resolvable:$true] %s486
          %492 = dma.hbm_to_vmem [thread:$0]  %s1, 256, %s487, [#allocation9], 128, 128, 8
        $region20: #{tpu_custom_call.1} parent=11 // pred_fallthru
          _
      $region12: #{tpu_custom_call.1} parent=5 // pred_fallthru
        _
      %p493 = scmp.lt.s32.totalorder %s25, 2
      // Predicated region
      $region21: #{tpu_custom_call.1} parent=5 // pred_check
        %p494 = pneg %p493
      $region22: #{tpu_custom_call.1} parent=5 // pred_check_branch
        %496 = sbr.rel (%p494) target = $region24
      $region23: #{tpu_custom_call.1} parent=5 // pred_region
        // Predicated region
        $region25: #{tpu_custom_call.1} parent=23 // pred_check
          %p497 = pneg %p87
        $region26: #{tpu_custom_call.1} parent=23 // pred_check_branch
          %499 = sbr.rel (%p497) target = $region28
        $region27: #{tpu_custom_call.1} parent=23 // pred_region
          %p500 = scmp.lt.s32.totalorder %s25, 1
          %s501 = scalar_select %p500, %s25, 1
          %s502 = smul.addr %s501, 4
          %s503 = smul.addr %s502, 8
          %s504 = scalar_lea.vmem %s2, %s503
        $region28: #{tpu_custom_call.1} parent=23 // pred_fallthru
          _
        // Predicated region
        $region29: #{tpu_custom_call.1} parent=23 // pred_check
          %p505 = pneg %p113
        $region30: #{tpu_custom_call.1} parent=23 // pred_check_branch
          %507 = sbr.rel (%p505) target = $region32
        $region31: #{tpu_custom_call.1} parent=23 // pred_region
          %p508 = scmp.lt.s32.totalorder %s25, 1
          %s509 = scalar_select %p508, %s25, 1
          %s510 = scalar_lea.vmem %s3, %s509
        $region32: #{tpu_custom_call.1} parent=23 // pred_fallthru
          _
        // Predicated region
        $region33: #{tpu_custom_call.1} parent=23 // pred_check
          %p511 = pneg %p139
        $region34: #{tpu_custom_call.1} parent=23 // pred_check_branch
          %513 = sbr.rel (%p511) target = $region36
        $region35: #{tpu_custom_call.1} parent=23 // pred_region
          %p514 = scmp.lt.s32.totalorder %s25, 1
          %s515 = scalar_select %p514, %s25, 1
          %s516 = smul.addr %s515, 4
          %s517 = smul.addr %s516, 8
          %s518 = scalar_lea.vmem %s4, %s517
        $region36: #{tpu_custom_call.1} parent=23 // pred_fallthru
          _
        // Predicated region
        $region37: #{tpu_custom_call.1} parent=23 // pred_check
          %p519 = pneg %p165
        $region38: #{tpu_custom_call.1} parent=23 // pred_check_branch
          %521 = sbr.rel (%p519) target = $region40
        $region39: #{tpu_custom_call.1} parent=23 // pred_region
          %p522 = scmp.lt.s32.totalorder %s25, 1
          %s523 = scalar_select %p522, %s25, 1
          %s524 = scalar_lea.vmem %s5, %s523
        $region40: #{tpu_custom_call.1} parent=23 // pred_fallthru
          _
        // Predicated region
        $region41: #{tpu_custom_call.1} parent=23 // pred_check
          %p525 = pneg %p191
        $region42: #{tpu_custom_call.1} parent=23 // pred_check_branch
          %527 = sbr.rel (%p525) target = $region44
        $region43: #{tpu_custom_call.1} parent=23 // pred_region
          %p528 = scmp.lt.s32.totalorder %s25, 1
          %s529 = scalar_select %p528, %s25, 1
          %s530 = smul.addr %s529, 4
          %s531 = smul.addr %s530, 8
          %s532 = scalar_lea.vmem %s6, %s531
        $region44: #{tpu_custom_call.1} parent=23 // pred_fallthru
          _
        // Predicated region
        $region45: #{tpu_custom_call.1} parent=23 // pred_check
          %p533 = pneg %p217
        $region46: #{tpu_custom_call.1} parent=23 // pred_check_branch
          %535 = sbr.rel (%p533) target = $region48
        $region47: #{tpu_custom_call.1} parent=23 // pred_region
          %p536 = scmp.lt.s32.totalorder %s25, 1
          %s537 = scalar_select %p536, %s25, 1
          %s538 = scalar_lea.vmem %s7, %s537
        $region48: #{tpu_custom_call.1} parent=23 // pred_fallthru
          _
        // Predicated region
        $region49: #{tpu_custom_call.1} parent=23 // pred_check
          %p539 = pneg %p243
        $region50: #{tpu_custom_call.1} parent=23 // pred_check_branch
          %541 = sbr.rel (%p539) target = $region52
        $region51: #{tpu_custom_call.1} parent=23 // pred_region
          %s542 = sand.u32 %s25, 1
          %s543 = scalar_lea.sflag [#allocation6], %s542
          %s544 = sand.u32 %s233, 1
          %s545 = smul.addr %s544, 32
          %s546 = scalar_lea.vmem [#allocation10], %s545
          %s548 = ssub.s32 512, 512
          %549 = vsyncadd %s543, %s548
          %s550 = smul.addr %s25, 4
          %s551 = smul.addr %s550, 128
          %s552 = scalar_lea.hbm %s8, %s551
          %s553 = sshll.u32 %s546, 4
          %s554 = int_to_ptr.vmem [resolvable:$true] %s553
          %559 = dma.hbm_to_vmem [thread:$0]  %s552, 512, %s554, %s543, 128, 128, 8
        $region52: #{tpu_custom_call.1} parent=23 // pred_fallthru
          _
        // Predicated region
        $region53: #{tpu_custom_call.1} parent=23 // pred_check
          %p560 = pneg %p269
        $region54: #{tpu_custom_call.1} parent=23 // pred_check_branch
          %562 = sbr.rel (%p560) target = $region56
        $region55: #{tpu_custom_call.1} parent=23 // pred_region
          %p563 = scmp.lt.s32.totalorder %s25, 1
          %s564 = scalar_select %p563, %s25, 1
          %s565 = scalar_lea.vmem %s9, %s564
        $region56: #{tpu_custom_call.1} parent=23 // pred_fallthru
          _
        // Predicated region
        $region57: #{tpu_custom_call.1} parent=23 // pred_check
          %p566 = pneg %p295
        $region58: #{tpu_custom_call.1} parent=23 // pred_check_branch
          %568 = sbr.rel (%p566) target = $region60
        $region59: #{tpu_custom_call.1} parent=23 // pred_region
          %p569 = scmp.lt.s32.totalorder %s25, 1
          %s570 = scalar_select %p569, %s25, 1
          %s571 = smul.addr %s570, 8
          %s572 = smul.addr %s571, 8
          %s573 = scalar_lea.vmem %s10, %s572
        $region60: #{tpu_custom_call.1} parent=23 // pred_fallthru
          _
        // Predicated region
        $region61: #{tpu_custom_call.1} parent=23 // pred_check
          %p574 = pneg %p321
        $region62: #{tpu_custom_call.1} parent=23 // pred_check_branch
          %576 = sbr.rel (%p574) target = $region64
        $region63: #{tpu_custom_call.1} parent=23 // pred_region
          %p577 = scmp.lt.s32.totalorder %s25, 1
          %s578 = scalar_select %p577, %s25, 1
          %s579 = scalar_lea.vmem %s11, %s578
        $region64: #{tpu_custom_call.1} parent=23 // pred_fallthru
          _
        // Predicated region
        $region65: #{tpu_custom_call.1} parent=23 // pred_check
          %p580 = pneg %p347
        $region66: #{tpu_custom_call.1} parent=23 // pred_check_branch
          %582 = sbr.rel (%p580) target = $region68
        $region67: #{tpu_custom_call.1} parent=23 // pred_region
          %p583 = scmp.lt.s32.totalorder %s25, 1
          %s584 = scalar_select %p583, %s25, 1
          %s585 = scalar_lea.vmem %s12, %s584
        $region68: #{tpu_custom_call.1} parent=23 // pred_fallthru
          _
        // Predicated region
        $region69: #{tpu_custom_call.1} parent=23 // pred_check
          %p586 = pneg %p373
        $region70: #{tpu_custom_call.1} parent=23 // pred_check_branch
          %588 = sbr.rel (%p586) target = $region72
        $region71: #{tpu_custom_call.1} parent=23 // pred_region
          %p589 = scmp.lt.s32.totalorder %s25, 1
          %s590 = scalar_select %p589, %s25, 1
          %s591 = scalar_lea.vmem %s13, %s590
        $region72: #{tpu_custom_call.1} parent=23 // pred_fallthru
          _
        // Predicated region
        $region73: #{tpu_custom_call.1} parent=23 // pred_check
          %p592 = pneg %p399
        $region74: #{tpu_custom_call.1} parent=23 // pred_check_branch
          %594 = sbr.rel (%p592) target = $region76
        $region75: #{tpu_custom_call.1} parent=23 // pred_region
          %p595 = scmp.lt.s32.totalorder %s25, 1
          %s596 = scalar_select %p595, %s25, 1
          %s597 = scalar_lea.vmem %s14, %s596
        $region76: #{tpu_custom_call.1} parent=23 // pred_fallthru
          _
        // Predicated region
        $region77: #{tpu_custom_call.1} parent=23 // pred_check
          %p598 = pneg %p425
        $region78: #{tpu_custom_call.1} parent=23 // pred_check_branch
          %600 = sbr.rel (%p598) target = $region80
        $region79: #{tpu_custom_call.1} parent=23 // pred_region
          %p601 = scmp.lt.s32.totalorder %s25, 1
          %s602 = scalar_select %p601, %s25, 1
          %s603 = scalar_lea.vmem %s15, %s602
        $region80: #{tpu_custom_call.1} parent=23 // pred_fallthru
          _
      $region24: #{tpu_custom_call.1} parent=5 // pred_fallthru
        _
      %p604 = scmp.le.s32.totalorder 1, %s25
      %p605 = scmp.lt.s32.totalorder %s25, 3
      %p606 = pnand %p604, %p605
      %p607 = pneg %p606
      // Predicated region
      $region81: #{tpu_custom_call.1} parent=5 // pred_check
        _
      $region82: #{tpu_custom_call.1} parent=5 // pred_check_branch
        %609 = sbr.rel (%p606) target = $region84
      $region83: #{tpu_custom_call.1} parent=5 // pred_region
        %s610 = ssub.s32 %s25, 1
        // Predicated region
        $region85: #{tpu_custom_call.1} parent=83 // pred_check
          %p611 = pneg %p46
        $region86: #{tpu_custom_call.1} parent=83 // pred_check_branch
          %613 = sbr.rel (%p611) target = $region88
        $region87: #{tpu_custom_call.1} parent=83 // pred_region
          %614 = dma.done [#allocation6], 256
        $region88: #{tpu_custom_call.1} parent=83 // pred_fallthru
          _
        // Predicated region
        $region89: #{tpu_custom_call.1} parent=83 // pred_check
          %p615 = pneg %p67
        $region90: #{tpu_custom_call.1} parent=83 // pred_check_branch
          %617 = sbr.rel (%p615) target = $region92
        $region91: #{tpu_custom_call.1} parent=83 // pred_region
          %618 = dma.done [#allocation9], 256
        $region92: #{tpu_custom_call.1} parent=83 // pred_fallthru
          _
        %s619 = sand.u32 %s30, 1
        %s620 = scalar_lea.sflag [#allocation6], %s619
        %s621 = sand.u32 %s236, 1
        %s622 = smul.addr %s621, 32
        %s623 = scalar_lea.vmem [#allocation10], %s622
        // Predicated region
        $region93: #{tpu_custom_call.1} parent=83 // pred_check
          %p624 = pneg %p249
        $region94: #{tpu_custom_call.1} parent=83 // pred_check_branch
          %626 = sbr.rel (%p624) target = $region96
        $region95: #{tpu_custom_call.1} parent=83 // pred_region
          %627 = dma.done %s620, 512
        $region96: #{tpu_custom_call.1} parent=83 // pred_fallthru
          _
        %p628 = pneg %p46
        %p629 = pneg %p43
        %p630 = pneg %p67
        %p631 = pneg %p64
        %p632 = scmp.lt.s32.totalorder %s30, 1
        %s633 = scalar_select %p632, %s30, 1
        %s634 = smul.addr %s633, 4
        %s635 = smul.addr %s634, 8
        %s636 = scalar_lea.vmem %s2, %s635
        %p637 = pneg %p93
        %p638 = pneg %p90
        %p639 = scmp.lt.s32.totalorder %s30, 1
        %s640 = scalar_select %p639, %s30, 1
        %s641 = scalar_lea.vmem %s3, %s640
        %p642 = pneg %p119
        %p643 = pneg %p116
        %p644 = scmp.lt.s32.totalorder %s30, 1
        %s645 = scalar_select %p644, %s30, 1
        %s646 = smul.addr %s645, 4
        %s647 = smul.addr %s646, 8
        %s648 = scalar_lea.vmem %s4, %s647
        %p649 = pneg %p145
        %p650 = pneg %p142
        %p651 = scmp.lt.s32.totalorder %s30, 1
        %s652 = scalar_select %p651, %s30, 1
        %s653 = scalar_lea.vmem %s5, %s652
        %p654 = pneg %p171
        %p655 = pneg %p168
        %p656 = scmp.lt.s32.totalorder %s30, 1
        %s657 = scalar_select %p656, %s30, 1
        %s658 = smul.addr %s657, 4
        %s659 = smul.addr %s658, 8
        %s660 = scalar_lea.vmem %s6, %s659
        %p661 = pneg %p197
        %p662 = pneg %p194
        %p663 = scmp.lt.s32.totalorder %s30, 1
        %s664 = scalar_select %p663, %s30, 1
        %s665 = scalar_lea.vmem %s7, %s664
        %p666 = pneg %p223
        %p667 = pneg %p220
        %s668 = sand.u32 %s30, 1
        %s669 = scalar_lea.sflag [#allocation6], %s668
        %s670 = sand.u32 %s236, 1
        %s671 = smul.addr %s670, 32
        %s672 = scalar_lea.vmem [#allocation10], %s671
        %p673 = pneg %p249
        %p674 = pneg %p246
        %p675 = scmp.lt.s32.totalorder %s30, 1
        %s676 = scalar_select %p675, %s30, 1
        %s677 = scalar_lea.vmem %s9, %s676
        %p678 = pneg %p275
        %p679 = pneg %p272
        %p680 = scmp.lt.s32.totalorder %s30, 1
        %s681 = scalar_select %p680, %s30, 1
        %s682 = smul.addr %s681, 8
        %s683 = smul.addr %s682, 8
        %s684 = scalar_lea.vmem %s10, %s683
        %p685 = pneg %p301
        %p686 = pneg %p298
        %p687 = scmp.lt.s32.totalorder %s30, 1
        %s688 = scalar_select %p687, %s30, 1
        %s689 = scalar_lea.vmem %s11, %s688
        %p690 = pneg %p327
        %p691 = pneg %p324
        %p692 = scmp.lt.s32.totalorder %s30, 1
        %s693 = scalar_select %p692, %s30, 1
        %s694 = scalar_lea.vmem %s12, %s693
        %p695 = pneg %p353
        %p696 = pneg %p350
        %p697 = scmp.lt.s32.totalorder %s30, 1
        %s698 = scalar_select %p697, %s30, 1
        %s699 = scalar_lea.vmem %s13, %s698
        %p700 = pneg %p379
        %p701 = pneg %p376
        %p702 = scmp.lt.s32.totalorder %s30, 1
        %s703 = scalar_select %p702, %s30, 1
        %s704 = scalar_lea.vmem %s14, %s703
        %p705 = pneg %p405
        %p706 = pneg %p402
        %p707 = scmp.lt.s32.totalorder %s30, 1
        %s708 = scalar_select %p707, %s30, 1
        %s709 = scalar_lea.vmem %s15, %s708
        %p710 = pneg %p431
        %p711 = pneg %p428
        %p712 = pneg %p452
        %p713 = pneg %p449
        %p714 = scmp.lt.s32.totalorder %s30, 1
        %s715 = scalar_select %p714, %s30, 1
        %s716 = smul.addr %s715, 4
        %s717 = smul.addr %s716, 8
        %s718 = scalar_lea.vmem %s2, %s717
        %p719 = scmp.lt.s32.totalorder %s30, 1
        %s720 = scalar_select %p719, %s30, 1
        %s721 = scalar_lea.vmem %s3, %s720
        %p722 = scmp.lt.s32.totalorder %s30, 1
        %s723 = scalar_select %p722, %s30, 1
        %s724 = smul.addr %s723, 4
        %s725 = smul.addr %s724, 8
        %s726 = scalar_lea.vmem %s4, %s725
        %p727 = scmp.lt.s32.totalorder %s30, 1
        %s728 = scalar_select %p727, %s30, 1
        %s729 = scalar_lea.vmem %s5, %s728
        %p730 = scmp.lt.s32.totalorder %s30, 1
        %s731 = scalar_select %p730, %s30, 1
        %s732 = smul.addr %s731, 4
        %s733 = smul.addr %s732, 8
        %s734 = scalar_lea.vmem %s6, %s733
        %p735 = scmp.lt.s32.totalorder %s30, 1
        %s736 = scalar_select %p735, %s30, 1
        %s737 = scalar_lea.vmem %s7, %s736
        %p738 = scmp.lt.s32.totalorder %s30, 1
        %s739 = scalar_select %p738, %s30, 1
        %s740 = scalar_lea.vmem %s9, %s739
        %p741 = scmp.lt.s32.totalorder %s30, 1
        %s742 = scalar_select %p741, %s30, 1
        %s743 = smul.addr %s742, 8
        %s744 = smul.addr %s743, 8
        %s745 = scalar_lea.vmem %s10, %s744
        %p746 = scmp.lt.s32.totalorder %s30, 1
        %s747 = scalar_select %p746, %s30, 1
        %s748 = scalar_lea.vmem %s11, %s747
        %p749 = scmp.lt.s32.totalorder %s30, 1
        %s750 = scalar_select %p749, %s30, 1
        %s751 = scalar_lea.vmem %s12, %s750
        %p752 = scmp.lt.s32.totalorder %s30, 1
        %s753 = scalar_select %p752, %s30, 1
        %s754 = scalar_lea.vmem %s13, %s753
        %p755 = scmp.lt.s32.totalorder %s30, 1
        %s756 = scalar_select %p755, %s30, 1
        %s757 = scalar_lea.vmem %s14, %s756
        %p758 = scmp.lt.s32.totalorder %s30, 1
        %s759 = scalar_select %p758, %s30, 1
        %s760 = scalar_lea.vmem %s15, %s759
        %p761 = scmp.eq.s32.totalorder %s30, 0
        // Predicated region
        $region97: #{tpu_custom_call.1} parent=83 // pred_check
          %p762 = pneg %p761
        $region98: #{tpu_custom_call.1} parent=83 // pred_check_branch
          %764 = sbr.rel (%p762) target = $region100
        $region99: #{tpu_custom_call.1} parent=83 // pred_region
          %v765 = vld [vmem:[#allocation5] sm:$0xff]
          %v766 = vld [vmem:[#allocation5 + $0x8] sm:$0xff]
          %vm767 = vcmask 261120
          %768 = vst.msk [vmem:[#allocation2] sm:$0xff] %vm767, %v765
          %769 = vst.msk [vmem:[#allocation2 + $0x8] sm:$0xff] %vm767, %v766
          %v770 = vld [vmem:[#allocation8] sm:$0xff]
          %v771 = vld [vmem:[#allocation8 + $0x8] sm:$0xff]
          %772 = vst.msk [vmem:[#allocation3] sm:$0xff] %vm767, %v770
          %773 = vst.msk [vmem:[#allocation3 + $0x8] sm:$0xff] %vm767, %v771
          %v774 = vld [vmem:[#allocation5] sm:$0xff]
          %v775 = vld [vmem:[#allocation5 + $0x8] sm:$0xff]
          %778 = vrot.lane.b32.xlu0 %v774, 96
          %v779 = vpop.permute.xlu0 %778
          %780 = vrot.lane.b32.xlu0 %v775, 96
          %v781 = vpop.permute.xlu0 %780
          %784 = vst.msk [vmem:[#allocation2 + $0x10] sm:$0xff] %vm767, %v779
          %785 = vst.msk [vmem:[#allocation2 + $0x18] sm:$0xff] %vm767, %v781
          %v786 = vld [vmem:[#allocation8] sm:$0xff]
          %v787 = vld [vmem:[#allocation8 + $0x8] sm:$0xff]
          %790 = vrot.lane.b32.xlu0 %v786, 96
          %v791 = vpop.permute.xlu0 %790
          %792 = vrot.lane.b32.xlu0 %v787, 96
          %v793 = vpop.permute.xlu0 %792
          %796 = vst.msk [vmem:[#allocation3 + $0x10] sm:$0xff] %vm767, %v791
          %797 = vst.msk [vmem:[#allocation3 + $0x18] sm:$0xff] %vm767, %v793
        $region100: #{tpu_custom_call.1} parent=83 // pred_fallthru
          _
        %v798 = vld [vmem:[#allocation2] sm:$0xff]
        %v799 = vld [vmem:[#allocation2 + $0x8] sm:$0xff]
        %v800 = vld [vmem:[#allocation2 + $0x10] sm:$0xff]
        %v801 = vld [vmem:[#allocation2 + $0x18] sm:$0xff]
        %v802 = vld [vmem:[#allocation3] sm:$0xff]
        %v803 = vld [vmem:[#allocation3 + $0x8] sm:$0xff]
        %v804 = vld [vmem:[#allocation3 + $0x10] sm:$0xff]
        %v805 = vld [vmem:[#allocation3 + $0x18] sm:$0xff]
        %v806 = vadd.f32 %v798, %v802
        %v807 = vadd.f32 %v799, %v803
        %v808 = vadd.f32 %v800, %v804
        %v809 = vadd.f32 %v801, %v805
        %v810 = vld [vmem:[%s718] sm:$0xff]
        %v811 = vld [vmem:[%s718 + $0x8] sm:$0xff]
        %v812 = vld [vmem:[%s718 + $0x10] sm:$0xff]
        %v813 = vld [vmem:[%s718 + $0x18] sm:$0xff]
        %v814 = vld [vmem:[%s721] sm:$0x1]
        %v816 = vlaneseq
        %v817 = vshrl.u32 %v816, 7
        %v818 = vsub.s32 0, %v817
        %v819 = vrot.slane %v814, %v818
        %vm821 = vcmask 261120
        %v823 = vsel %vm821, %v806, 0
        %v826 = vsel %vm821, %v807, 0
        %v829 = vsel %vm821, %v808, 0
        %v832 = vsel %vm821, %v809, 0
        %834 = vmatprep.subr.mxu0 0.0
        %835 = vmatpush1.msra.mxu0 %v810
        %836 = vmatprep.subr.mxu0 0.0
        %837 = vmatpush1.msra.mxu0 %v811
        %838 = vmatprep.subr.mxu0 0.0
        %839 = vmatpush1.msra.mxu0 %v812
        %840 = vmatprep.subr.mxu0 0.0
        %841 = vmatpush1.msra.mxu0 %v813
        %842 = vmatprep.subr.mxu0 0.0
        %843 = vmatpush1.msra.mxu0 0.0
        %844 = vmatprep.subr.mxu0 0.0
        %845 = vmatpush1.msra.mxu0 0.0
        %846 = vmatprep.subr.mxu0 0.0
        %847 = vmatpush1.msra.mxu0 0.0
        %848 = vmatprep.subr.mxu0 0.0
        %849 = vmatpush1.msra.mxu0 0.0
        %850 = vmatprep.subr.mxu0 0.0
        %851 = vmatpush1.msra.mxu0 0.0
        %852 = vmatprep.subr.mxu0 0.0
        %853 = vmatpush1.msra.mxu0 0.0
        %854 = vmatprep.subr.mxu0 0.0
        %855 = vmatpush1.msra.mxu0 0.0
        %856 = vmatprep.subr.mxu0 0.0
        %857 = vmatpush1.msra.mxu0 0.0
        %858 = vmatprep.subr.mxu0 0.0
        %859 = vmatpush1.msra.mxu0 0.0
        %860 = vmatprep.subr.mxu0 0.0
        %861 = vmatpush1.msra.mxu0 0.0
        %862 = vmatprep.subr.mxu0 0.0
        %863 = vmatpush1.msra.mxu0 0.0
        %864 = vmatprep.subr.mxu0 0.0
        %865 = vmatpush1.msra.mxu0 0.0
        %866 = vmatprep.subr.mxu0 0.0
        %867 = vmatpush1.msra.mxu0 0.0
        %868 = vmatprep.subr.mxu0 0.0
        %869 = vmatpush1.msra.mxu0 0.0
        %870 = vmatprep.subr.mxu0 0.0
        %871 = vmatpush1.msra.mxu0 0.0
        %872 = vmatprep.subr.mxu0 0.0
        %873 = vmatpush1.msra.mxu0 0.0
        %874 = vmatprep.subr.mxu0 0.0
        %875 = vmatpush1.msra.mxu0 0.0
        %876 = vmatprep.subr.mxu0 0.0
        %877 = vmatpush1.msra.mxu0 0.0
        %878 = vmatprep.subr.mxu0 0.0
        %879 = vmatpush1.msra.mxu0 0.0
        %880 = vmatprep.subr.mxu0 0.0
        %881 = vmatpush1.msra.mxu0 0.0
        %882 = vmatprep.subr.mxu0 0.0
        %883 = vmatpush1.msra.mxu0 0.0
        %884 = vmatprep.subr.mxu0 0.0
        %885 = vmatpush1.msra.mxu0 0.0
        %886 = vmatprep.subr.mxu0 0.0
        %887 = vmatpush1.msra.mxu0 0.0
        %888 = vmatprep.subr.mxu0 0.0
        %889 = vmatpush1.msra.mxu0 0.0
        %890 = vmatprep.subr.mxu0 0.0
        %891 = vmatpush1.msra.mxu0 0.0
        %892 = vmatprep.subr.mxu0 0.0
        %893 = vmatpush1.msra.mxu0 0.0
        %894 = vmatprep.subr.mxu0 0.0
        %895 = vmatpush1.msra.mxu0 0.0
        %896 = vmatprep.subr.mxu0 0.0
        %897 = vmatpush1.msra.mxu0 0.0
        %898 = vmatprep.mubr.f32.mxu0 0.0
        %899 = vmatmul.mubr.f32.gmra.mrb[0].mxu0 %v823
        %v900 = vpop.f32.mrb[0].mxu0
        %v901 = vadd.f32 %v819, %v900
        %v902 = vpop.f32.mrb[0].mxu0
        %903 = vmatprep.mubr.f32.mxu0 0.0
        %904 = vmatmul.mubr.f32.gmra.mrb[0].mxu0 %v826
        %v905 = vpop.f32.mrb[0].mxu0
        %v906 = vadd.f32 %v819, %v905
        %v907 = vpop.f32.mrb[0].mxu0
        %908 = vmatprep.mubr.f32.mxu0 0.0
        %909 = vmatmul.mubr.f32.gmra.mrb[0].mxu0 %v829
        %v910 = vpop.f32.mrb[0].mxu0
        %v911 = vadd.f32 %v819, %v910
        %v912 = vpop.f32.mrb[0].mxu0
        %913 = vmatprep.mubr.f32.mxu0 0.0
        %914 = vmatmul.mubr.f32.gmra.mrb[0].mxu0 %v832
        %v915 = vpop.f32.mrb[0].mxu0
        %v916 = vadd.f32 %v819, %v915
        %v917 = vpop.f32.mrb[0].mxu0
        %918 = vdwg.mxu0
        %v919 = vld [vmem:[%s726] sm:$0xff]
        %v920 = vld [vmem:[%s726 + $0x8] sm:$0xff]
        %v921 = vld [vmem:[%s726 + $0x10] sm:$0xff]
        %v922 = vld [vmem:[%s726 + $0x18] sm:$0xff]
        %v923 = vld [vmem:[%s729] sm:$0x1]
        %v925 = vlaneseq
        %v926 = vshrl.u32 %v925, 7
        %v927 = vsub.s32 0, %v926
        %v928 = vrot.slane %v923, %v927
        %v931 = vsel %vm821, %v798, 0
        %v934 = vsel %vm821, %v799, 0
        %v937 = vsel %vm821, %v800, 0
        %v940 = vsel %vm821, %v801, 0
        %942 = vmatprep.subr.mxu0 0.0
        %943 = vmatpush1.msra.mxu0 %v919
        %944 = vmatprep.subr.mxu0 0.0
        %945 = vmatpush1.msra.mxu0 %v920
        %946 = vmatprep.subr.mxu0 0.0
        %947 = vmatpush1.msra.mxu0 %v921
        %948 = vmatprep.subr.mxu0 0.0
        %949 = vmatpush1.msra.mxu0 %v922
        %950 = vmatprep.subr.mxu0 0.0
        %951 = vmatpush1.msra.mxu0 0.0
        %952 = vmatprep.subr.mxu0 0.0
        %953 = vmatpush1.msra.mxu0 0.0
        %954 = vmatprep.subr.mxu0 0.0
        %955 = vmatpush1.msra.mxu0 0.0
        %956 = vmatprep.subr.mxu0 0.0
        %957 = vmatpush1.msra.mxu0 0.0
        %958 = vmatprep.subr.mxu0 0.0
        %959 = vmatpush1.msra.mxu0 0.0
        %960 = vmatprep.subr.mxu0 0.0
        %961 = vmatpush1.msra.mxu0 0.0
        %962 = vmatprep.subr.mxu0 0.0
        %963 = vmatpush1.msra.mxu0 0.0
        %964 = vmatprep.subr.mxu0 0.0
        %965 = vmatpush1.msra.mxu0 0.0
        %966 = vmatprep.subr.mxu0 0.0
        %967 = vmatpush1.msra.mxu0 0.0
        %968 = vmatprep.subr.mxu0 0.0
        %969 = vmatpush1.msra.mxu0 0.0
        %970 = vmatprep.subr.mxu0 0.0
        %971 = vmatpush1.msra.mxu0 0.0
        %972 = vmatprep.subr.mxu0 0.0
        %973 = vmatpush1.msra.mxu0 0.0
        %974 = vmatprep.subr.mxu0 0.0
        %975 = vmatpush1.msra.mxu0 0.0
        %976 = vmatprep.subr.mxu0 0.0
        %977 = vmatpush1.msra.mxu0 0.0
        %978 = vmatprep.subr.mxu0 0.0
        %979 = vmatpush1.msra.mxu0 0.0
        %980 = vmatprep.subr.mxu0 0.0
        %981 = vmatpush1.msra.mxu0 0.0
        %982 = vmatprep.subr.mxu0 0.0
        %983 = vmatpush1.msra.mxu0 0.0
        %984 = vmatprep.subr.mxu0 0.0
        %985 = vmatpush1.msra.mxu0 0.0
        %986 = vmatprep.subr.mxu0 0.0
        %987 = vmatpush1.msra.mxu0 0.0
        %988 = vmatprep.subr.mxu0 0.0
        %989 = vmatpush1.msra.mxu0 0.0
        %990 = vmatprep.subr.mxu0 0.0
        %991 = vmatpush1.msra.mxu0 0.0
        %992 = vmatprep.subr.mxu0 0.0
        %993 = vmatpush1.msra.mxu0 0.0
        %994 = vmatprep.subr.mxu0 0.0
        %995 = vmatpush1.msra.mxu0 0.0
        %996 = vmatprep.subr.mxu0 0.0
        %997 = vmatpush1.msra.mxu0 0.0
        %998 = vmatprep.subr.mxu0 0.0
        %999 = vmatpush1.msra.mxu0 0.0
        %1000 = vmatprep.subr.mxu0 0.0
        %1001 = vmatpush1.msra.mxu0 0.0
        %1002 = vmatprep.subr.mxu0 0.0
        %1003 = vmatpush1.msra.mxu0 0.0
        %1004 = vmatprep.subr.mxu0 0.0
        %1005 = vmatpush1.msra.mxu0 0.0
        %1006 = vmatprep.mubr.f32.mxu0 0.0
        %1007 = vmatmul.mubr.f32.gmra.mrb[0].mxu0 %v931
        %v1008 = vpop.f32.mrb[0].mxu0
        %v1009 = vadd.f32 %v928, %v1008
        %v1010 = vpop.f32.mrb[0].mxu0
        %1011 = vmatprep.mubr.f32.mxu0 0.0
        %1012 = vmatmul.mubr.f32.gmra.mrb[0].mxu0 %v934
        %v1013 = vpop.f32.mrb[0].mxu0
        %v1014 = vadd.f32 %v928, %v1013
        %v1015 = vpop.f32.mrb[0].mxu0
        %1016 = vmatprep.mubr.f32.mxu0 0.0
        %1017 = vmatmul.mubr.f32.gmra.mrb[0].mxu0 %v937
        %v1018 = vpop.f32.mrb[0].mxu0
        %v1019 = vadd.f32 %v928, %v1018
        %v1020 = vpop.f32.mrb[0].mxu0
        %1021 = vmatprep.mubr.f32.mxu0 0.0
        %1022 = vmatmul.mubr.f32.gmra.mrb[0].mxu0 %v940
        %v1023 = vpop.f32.mrb[0].mxu0
        %v1024 = vadd.f32 %v928, %v1023
        %v1025 = vpop.f32.mrb[0].mxu0
        %1026 = vdwg.mxu0
        %v1027 = vmul.f32 %v901, 0.35355338
        %v1028 = vmul.f32 %v906, 0.35355338
        %1031 = vrot.lane.b32.xlu0 %v901, 96
        %v1032 = vpop.permute.xlu0 %1031
        %1033 = vrot.lane.b32.xlu0 %v906, 96
        %v1034 = vpop.permute.xlu0 %1033
        %vm1035 = vcmask 64512
        %v1037 = vsel %vm1035, %v1027, 0
        %v1040 = vsel %vm1035, %v1028, 0
        %v1042 = vsel %vm1035, %v1032, 0
        %v1044 = vsel %vm1035, %v1034, 0
        %1046 = vmatprep.subr.mxu0 0.0
        %1047 = vmatpush1.xpose.msra.mxu0 %v1042
        %1048 = vmatprep.subr.mxu0 0.0
        %1049 = vmatpush1.xpose.msra.mxu0 %v1044
        %1050 = vmatprep.subr.mxu0 0.0
        %1051 = vmatpush1.xpose.msra.mxu0 0.0
        %1052 = vmatprep.subr.mxu0 0.0
        %1053 = vmatpush1.xpose.msra.mxu0 0.0
        %1054 = vmatprep.subr.mxu0 0.0
        %1055 = vmatpush1.xpose.msra.mxu0 0.0
        %1056 = vmatprep.subr.mxu0 0.0
        %1057 = vmatpush1.xpose.msra.mxu0 0.0
        %1058 = vmatprep.subr.mxu0 0.0
        %1059 = vmatpush1.xpose.msra.mxu0 0.0
        %1060 = vmatprep.subr.mxu0 0.0
        %1061 = vmatpush1.xpose.msra.mxu0 0.0
        %1062 = vmatprep.subr.mxu0 0.0
        %1063 = vmatpush1.xpose.msra.mxu0 0.0
        %1064 = vmatprep.subr.mxu0 0.0
        %1065 = vmatpush1.xpose.msra.mxu0 0.0
        %1066 = vmatprep.subr.mxu0 0.0
        %1067 = vmatpush1.xpose.msra.mxu0 0.0
        %1068 = vmatprep.subr.mxu0 0.0
        %1069 = vmatpush1.xpose.msra.mxu0 0.0
        %1070 = vmatprep.subr.mxu0 0.0
        %1071 = vmatpush1.xpose.msra.mxu0 0.0
        %1072 = vmatprep.subr.mxu0 0.0
        %1073 = vmatpush1.xpose.msra.mxu0 0.0
        %1074 = vmatprep.subr.mxu0 0.0
        %1075 = vmatpush1.xpose.msra.mxu0 0.0
        %1076 = vmatprep.subr.mxu0 0.0
        %1077 = vmatpush1.xpose.msra.mxu0 0.0
        %1078 = vmatprep.subr.mxu0 0.0
        %1079 = vmatpush1.xpose.msra.mxu0 0.0
        %1080 = vmatprep.subr.mxu0 0.0
        %1081 = vmatpush1.xpose.msra.mxu0 0.0
        %1082 = vmatprep.subr.mxu0 0.0
        %1083 = vmatpush1.xpose.msra.mxu0 0.0
        %1084 = vmatprep.subr.mxu0 0.0
        %1085 = vmatpush1.xpose.msra.mxu0 0.0
        %1086 = vmatprep.subr.mxu0 0.0
        %1087 = vmatpush1.xpose.msra.mxu0 0.0
        %1088 = vmatprep.subr.mxu0 0.0
        %1089 = vmatpush1.xpose.msra.mxu0 0.0
        %1090 = vmatprep.subr.mxu0 0.0
        %1091 = vmatpush1.xpose.msra.mxu0 0.0
        %1092 = vmatprep.subr.mxu0 0.0
        %1093 = vmatpush1.xpose.msra.mxu0 0.0
        %1094 = vmatprep.subr.mxu0 0.0
        %1095 = vmatpush1.xpose.msra.mxu0 0.0
        %1096 = vmatprep.subr.mxu0 0.0
        %1097 = vmatpush1.xpose.msra.mxu0 0.0
        %1098 = vmatprep.subr.mxu0 0.0
        %1099 = vmatpush1.xpose.msra.mxu0 0.0
        %1100 = vmatprep.subr.mxu0 0.0
        %1101 = vmatpush1.xpose.msra.mxu0 0.0
        %1102 = vmatprep.subr.mxu0 0.0
        %1103 = vmatpush1.xpose.msra.mxu0 0.0
        %1104 = vmatprep.subr.mxu0 0.0
        %1105 = vmatpush1.xpose.msra.mxu0 0.0
        %1106 = vmatprep.subr.mxu0 0.0
        %1107 = vmatpush1.xpose.msra.mxu0 0.0
        %1108 = vmatprep.subr.mxu0 0.0
        %1109 = vmatpush1.xpose.msra.mxu0 0.0
        %1110 = vmatprep.mubr.f32.mxu0 0.0
        %1111 = vmatmul.mubr.f32.gmra.mrb[0].mxu0 %v1037
        %v1112 = vpop.f32.mrb[0].mxu0
        %v1113 = vadd.f32 0.0, %v1112
        %v1114 = vpop.f32.mrb[0].mxu0
        %1115 = vmatprep.mubr.f32.mxu0 0.0
        %1116 = vmatmul.mubr.f32.gmra.mrb[0].mxu0 %v1040
        %v1117 = vpop.f32.mrb[0].mxu0
        %v1118 = vadd.f32 0.0, %v1117
        %v1119 = vpop.f32.mrb[0].mxu0
        %1120 = vdwg.mxu0
        %vm1121 = vcmask 130048
        %v1122 = vsel %vm1121, %v1113, -inf
        %1123 = vmax.xlane.f32.xlu0 %v1122
        %v1124 = vpop.xlane.xlu0 %1123
        %v1125 = vsel %vm1121, %v1118, -inf
        %1126 = vmax.xlane.f32.xlu0 %v1125
        %v1127 = vpop.xlane.xlu0 %1126
        %v1128 = vsub.f32 %v1113, %v1124
        %v1129 = vsub.f32 %v1118, %v1127
        %v1130 = vmul.f32 %v1128, 1.442695
        %v1131 = vpow.pop %v1130
        %v1132 = vmul.f32 %v1129, 1.442695
        %v1133 = vpow.pop %v1132
        %v1134 = vsel %vm1121, %v1131, 0.0
        %1135 = vadd.xlane.f32.xlu0 %v1134
        %v1136 = vpop.xlane.xlu0 %1135
        %v1137 = vsel %vm1121, %v1133, 0.0
        %1138 = vadd.xlane.f32.xlu0 %v1137
        %v1139 = vpop.xlane.xlu0 %1138
        %v1140 = vrcp.pop %v1136
        %v1141 = vrcp.pop %v1139
        %v1142 = vmul.f32 %v1131, %v1140
        %v1143 = vmul.f32 %v1133, %v1141
        %v1145 = vsel %vm1121, %v1142, 0
        %v1148 = vsel %vm1121, %v1143, 0
        %1150 = vmatprep.subr.mxu0 0.0
        %1151 = vmatpush1.msra.mxu0 %v1009
        %1152 = vmatprep.subr.mxu0 0.0
        %1153 = vmatpush1.msra.mxu0 %v1014
        %1154 = vmatprep.subr.mxu0 0.0
        %1155 = vmatpush1.msra.mxu0 0.0
        %1156 = vmatprep.subr.mxu0 0.0
        %1157 = vmatpush1.msra.mxu0 0.0
        %1158 = vmatprep.subr.mxu0 0.0
        %1159 = vmatpush1.msra.mxu0 0.0
        %1160 = vmatprep.subr.mxu0 0.0
        %1161 = vmatpush1.msra.mxu0 0.0
        %1162 = vmatprep.subr.mxu0 0.0
        %1163 = vmatpush1.msra.mxu0 0.0
        %1164 = vmatprep.subr.mxu0 0.0
        %1165 = vmatpush1.msra.mxu0 0.0
        %1166 = vmatprep.subr.mxu0 0.0
        %1167 = vmatpush1.msra.mxu0 0.0
        %1168 = vmatprep.subr.mxu0 0.0
        %1169 = vmatpush1.msra.mxu0 0.0
        %1170 = vmatprep.subr.mxu0 0.0
        %1171 = vmatpush1.msra.mxu0 0.0
        %1172 = vmatprep.subr.mxu0 0.0
        %1173 = vmatpush1.msra.mxu0 0.0
        %1174 = vmatprep.subr.mxu0 0.0
        %1175 = vmatpush1.msra.mxu0 0.0
        %1176 = vmatprep.subr.mxu0 0.0
        %1177 = vmatpush1.msra.mxu0 0.0
        %1178 = vmatprep.subr.mxu0 0.0
        %1179 = vmatpush1.msra.mxu0 0.0
        %1180 = vmatprep.subr.mxu0 0.0
        %1181 = vmatpush1.msra.mxu0 0.0
        %1182 = vmatprep.subr.mxu0 0.0
        %1183 = vmatpush1.msra.mxu0 0.0
        %1184 = vmatprep.subr.mxu0 0.0
        %1185 = vmatpush1.msra.mxu0 0.0
        %1186 = vmatprep.subr.mxu0 0.0
        %1187 = vmatpush1.msra.mxu0 0.0
        %1188 = vmatprep.subr.mxu0 0.0
        %1189 = vmatpush1.msra.mxu0 0.0
        %1190 = vmatprep.subr.mxu0 0.0
        %1191 = vmatpush1.msra.mxu0 0.0
        %1192 = vmatprep.subr.mxu0 0.0
        %1193 = vmatpush1.msra.mxu0 0.0
        %1194 = vmatprep.subr.mxu0 0.0
        %1195 = vmatpush1.msra.mxu0 0.0
        %1196 = vmatprep.subr.mxu0 0.0
        %1197 = vmatpush1.msra.mxu0 0.0
        %1198 = vmatprep.subr.mxu0 0.0
        %1199 = vmatpush1.msra.mxu0 0.0
        %1200 = vmatprep.subr.mxu0 0.0
        %1201 = vmatpush1.msra.mxu0 0.0
        %1202 = vmatprep.subr.mxu0 0.0
        %1203 = vmatpush1.msra.mxu0 0.0
        %1204 = vmatprep.subr.mxu0 0.0
        %1205 = vmatpush1.msra.mxu0 0.0
        %1206 = vmatprep.subr.mxu0 0.0
        %1207 = vmatpush1.msra.mxu0 0.0
        %1208 = vmatprep.subr.mxu0 0.0
        %1209 = vmatpush1.msra.mxu0 0.0
        %1210 = vmatprep.subr.mxu0 0.0
        %1211 = vmatpush1.msra.mxu0 0.0
        %1212 = vmatprep.subr.mxu0 0.0
        %1213 = vmatpush1.msra.mxu0 0.0
        %1214 = vmatprep.mubr.f32.mxu0 0.0
        %1215 = vmatmul.mubr.f32.gmra.mrb[0].mxu0 %v1145
        %v1216 = vpop.f32.mrb[0].mxu0
        %v1217 = vadd.f32 0.0, %v1216
        %v1218 = vpop.f32.mrb[0].mxu0
        %1219 = vmatprep.mubr.f32.mxu0 0.0
        %1220 = vmatmul.mubr.f32.gmra.mrb[0].mxu0 %v1148
        %v1221 = vpop.f32.mrb[0].mxu0
        %v1222 = vadd.f32 0.0, %v1221
        %v1223 = vpop.f32.mrb[0].mxu0
        %1224 = vdwg.mxu0
        %1225 = vst.msk [vmem:[#allocation4] sm:$0xff] %vm1035, %v1217
        %1226 = vst.msk [vmem:[#allocation4 + $0x8] sm:$0xff] %vm1035, %v1222
        %1227 = vrot.lane.b32.xlu0 %v1027, 120
        %v1228 = vpop.permute.xlu0 %1227
        %1229 = vrot.lane.b32.xlu0 %v1028, 120
        %v1230 = vpop.permute.xlu0 %1229
        %1231 = vrot.lane.b32.xlu0 %v901, 88
        %v1232 = vpop.permute.xlu0 %1231
        %1233 = vrot.lane.b32.xlu0 %v906, 88
        %v1234 = vpop.permute.xlu0 %1233
        %v1235 = vsel %vm1035, %v1228, 0
        %v1237 = vsel %vm1035, %v1230, 0
        %v1239 = vsel %vm1035, %v1232, 0
        %v1241 = vsel %vm1035, %v1234, 0
        %1243 = vmatprep.subr.mxu0 0.0
        %1244 = vmatpush1.xpose.msra.mxu0 %v1239
        %1245 = vmatprep.subr.mxu0 0.0
        %1246 = vmatpush1.xpose.msra.mxu0 %v1241
        %1247 = vmatprep.subr.mxu0 0.0
        %1248 = vmatpush1.xpose.msra.mxu0 0.0
        %1249 = vmatprep.subr.mxu0 0.0
        %1250 = vmatpush1.xpose.msra.mxu0 0.0
        %1251 = vmatprep.subr.mxu0 0.0
        %1252 = vmatpush1.xpose.msra.mxu0 0.0
        %1253 = vmatprep.subr.mxu0 0.0
        %1254 = vmatpush1.xpose.msra.mxu0 0.0
        %1255 = vmatprep.subr.mxu0 0.0
        %1256 = vmatpush1.xpose.msra.mxu0 0.0
        %1257 = vmatprep.subr.mxu0 0.0
        %1258 = vmatpush1.xpose.msra.mxu0 0.0
        %1259 = vmatprep.subr.mxu0 0.0
        %1260 = vmatpush1.xpose.msra.mxu0 0.0
        %1261 = vmatprep.subr.mxu0 0.0
        %1262 = vmatpush1.xpose.msra.mxu0 0.0
        %1263 = vmatprep.subr.mxu0 0.0
        %1264 = vmatpush1.xpose.msra.mxu0 0.0
        %1265 = vmatprep.subr.mxu0 0.0
        %1266 = vmatpush1.xpose.msra.mxu0 0.0
        %1267 = vmatprep.subr.mxu0 0.0
        %1268 = vmatpush1.xpose.msra.mxu0 0.0
        %1269 = vmatprep.subr.mxu0 0.0
        %1270 = vmatpush1.xpose.msra.mxu0 0.0
        %1271 = vmatprep.subr.mxu0 0.0
        %1272 = vmatpush1.xpose.msra.mxu0 0.0
        %1273 = vmatprep.subr.mxu0 0.0
        %1274 = vmatpush1.xpose.msra.mxu0 0.0
        %1275 = vmatprep.subr.mxu0 0.0
        %1276 = vmatpush1.xpose.msra.mxu0 0.0
        %1277 = vmatprep.subr.mxu0 0.0
        %1278 = vmatpush1.xpose.msra.mxu0 0.0
        %1279 = vmatprep.subr.mxu0 0.0
        %1280 = vmatpush1.xpose.msra.mxu0 0.0
        %1281 = vmatprep.subr.mxu0 0.0
        %1282 = vmatpush1.xpose.msra.mxu0 0.0
        %1283 = vmatprep.subr.mxu0 0.0
        %1284 = vmatpush1.xpose.msra.mxu0 0.0
        %1285 = vmatprep.subr.mxu0 0.0
        %1286 = vmatpush1.xpose.msra.mxu0 0.0
        %1287 = vmatprep.subr.mxu0 0.0
        %1288 = vmatpush1.xpose.msra.mxu0 0.0
        %1289 = vmatprep.subr.mxu0 0.0
        %1290 = vmatpush1.xpose.msra.mxu0 0.0
        %1291 = vmatprep.subr.mxu0 0.0
        %1292 = vmatpush1.xpose.msra.mxu0 0.0
        %1293 = vmatprep.subr.mxu0 0.0
        %1294 = vmatpush1.xpose.msra.mxu0 0.0
        %1295 = vmatprep.subr.mxu0 0.0
        %1296 = vmatpush1.xpose.msra.mxu0 0.0
        %1297 = vmatprep.subr.mxu0 0.0
        %1298 = vmatpush1.xpose.msra.mxu0 0.0
        %1299 = vmatprep.subr.mxu0 0.0
        %1300 = vmatpush1.xpose.msra.mxu0 0.0
        %1301 = vmatprep.subr.mxu0 0.0
        %1302 = vmatpush1.xpose.msra.mxu0 0.0
        %1303 = vmatprep.subr.mxu0 0.0
        %1304 = vmatpush1.xpose.msra.mxu0 0.0
        %1305 = vmatprep.subr.mxu0 0.0
        %1306 = vmatpush1.xpose.msra.mxu0 0.0
        %1307 = vmatprep.mubr.f32.mxu0 0.0
        %1308 = vmatmul.mubr.f32.gmra.mrb[0].mxu0 %v1235
        %v1309 = vpop.f32.mrb[0].mxu0
        %v1310 = vadd.f32 0.0, %v1309
        %v1311 = vpop.f32.mrb[0].mxu0
        %1312 = vmatprep.mubr.f32.mxu0 0.0
        %1313 = vmatmul.mubr.f32.gmra.mrb[0].mxu0 %v1237
        %v1314 = vpop.f32.mrb[0].mxu0
        %v1315 = vadd.f32 0.0, %v1314
        %v1316 = vpop.f32.mrb[0].mxu0
        %1317 = vdwg.mxu0
        %v1318 = vsel %vm1121, %v1310, -inf
        %1319 = vmax.xlane.f32.xlu0 %v1318
        %v1320 = vpop.xlane.xlu0 %1319
        %v1321 = vsel %vm1121, %v1315, -inf
        %1322 = vmax.xlane.f32.xlu0 %v1321
        %v1323 = vpop.xlane.xlu0 %1322
        %v1324 = vsub.f32 %v1310, %v1320
        %v1325 = vsub.f32 %v1315, %v1323
        %v1326 = vmul.f32 %v1324, 1.442695
        %v1327 = vpow.pop %v1326
        %v1328 = vmul.f32 %v1325, 1.442695
        %v1329 = vpow.pop %v1328
        %v1330 = vsel %vm1121, %v1327, 0.0
        %1331 = vadd.xlane.f32.xlu0 %v1330
        %v1332 = vpop.xlane.xlu0 %1331
        %v1333 = vsel %vm1121, %v1329, 0.0
        %1334 = vadd.xlane.f32.xlu0 %v1333
        %v1335 = vpop.xlane.xlu0 %1334
        %v1336 = vrcp.pop %v1332
        %v1337 = vrcp.pop %v1335
        %v1338 = vmul.f32 %v1327, %v1336
        %v1339 = vmul.f32 %v1329, %v1337
        %1342 = vrot.lane.b32.xlu0 %v1009, 120
        %v1343 = vpop.permute.xlu0 %1342
        %1344 = vrot.lane.b32.xlu0 %v1014, 120
        %v1345 = vpop.permute.xlu0 %1344
        %v1349 = vsel %vm1121, %v1338, 0
        %v1352 = vsel %vm1121, %v1339, 0
        %1354 = vmatprep.subr.mxu0 0.0
        %1355 = vmatpush1.msra.mxu0 %v1343
        %1356 = vmatprep.subr.mxu0 0.0
        %1357 = vmatpush1.msra.mxu0 %v1345
        %1358 = vmatprep.subr.mxu0 0.0
        %1359 = vmatpush1.msra.mxu0 0.0
        %1360 = vmatprep.subr.mxu0 0.0
        %1361 = vmatpush1.msra.mxu0 0.0
        %1362 = vmatprep.subr.mxu0 0.0
        %1363 = vmatpush1.msra.mxu0 0.0
        %1364 = vmatprep.subr.mxu0 0.0
        %1365 = vmatpush1.msra.mxu0 0.0
        %1366 = vmatprep.subr.mxu0 0.0
        %1367 = vmatpush1.msra.mxu0 0.0
        %1368 = vmatprep.subr.mxu0 0.0
        %1369 = vmatpush1.msra.mxu0 0.0
        %1370 = vmatprep.subr.mxu0 0.0
        %1371 = vmatpush1.msra.mxu0 0.0
        %1372 = vmatprep.subr.mxu0 0.0
        %1373 = vmatpush1.msra.mxu0 0.0
        %1374 = vmatprep.subr.mxu0 0.0
        %1375 = vmatpush1.msra.mxu0 0.0
        %1376 = vmatprep.subr.mxu0 0.0
        %1377 = vmatpush1.msra.mxu0 0.0
        %1378 = vmatprep.subr.mxu0 0.0
        %1379 = vmatpush1.msra.mxu0 0.0
        %1380 = vmatprep.subr.mxu0 0.0
        %1381 = vmatpush1.msra.mxu0 0.0
        %1382 = vmatprep.subr.mxu0 0.0
        %1383 = vmatpush1.msra.mxu0 0.0
        %1384 = vmatprep.subr.mxu0 0.0
        %1385 = vmatpush1.msra.mxu0 0.0
        %1386 = vmatprep.subr.mxu0 0.0
        %1387 = vmatpush1.msra.mxu0 0.0
        %1388 = vmatprep.subr.mxu0 0.0
        %1389 = vmatpush1.msra.mxu0 0.0
        %1390 = vmatprep.subr.mxu0 0.0
        %1391 = vmatpush1.msra.mxu0 0.0
        %1392 = vmatprep.subr.mxu0 0.0
        %1393 = vmatpush1.msra.mxu0 0.0
        %1394 = vmatprep.subr.mxu0 0.0
        %1395 = vmatpush1.msra.mxu0 0.0
        %1396 = vmatprep.subr.mxu0 0.0
        %1397 = vmatpush1.msra.mxu0 0.0
        %1398 = vmatprep.subr.mxu0 0.0
        %1399 = vmatpush1.msra.mxu0 0.0
        %1400 = vmatprep.subr.mxu0 0.0
        %1401 = vmatpush1.msra.mxu0 0.0
        %1402 = vmatprep.subr.mxu0 0.0
        %1403 = vmatpush1.msra.mxu0 0.0
        %1404 = vmatprep.subr.mxu0 0.0
        %1405 = vmatpush1.msra.mxu0 0.0
        %1406 = vmatprep.subr.mxu0 0.0
        %1407 = vmatpush1.msra.mxu0 0.0
        %1408 = vmatprep.subr.mxu0 0.0
        %1409 = vmatpush1.msra.mxu0 0.0
        %1410 = vmatprep.subr.mxu0 0.0
        %1411 = vmatpush1.msra.mxu0 0.0
        %1412 = vmatprep.subr.mxu0 0.0
        %1413 = vmatpush1.msra.mxu0 0.0
        %1414 = vmatprep.subr.mxu0 0.0
        %1415 = vmatpush1.msra.mxu0 0.0
        %1416 = vmatprep.subr.mxu0 0.0
        %1417 = vmatpush1.msra.mxu0 0.0
        %1418 = vmatprep.mubr.f32.mxu0 0.0
        %1419 = vmatmul.mubr.f32.gmra.mrb[0].mxu0 %v1349
        %v1420 = vpop.f32.mrb[0].mxu0
        %v1421 = vadd.f32 0.0, %v1420
        %v1422 = vpop.f32.mrb[0].mxu0
        %1423 = vmatprep.mubr.f32.mxu0 0.0
        %1424 = vmatmul.mubr.f32.gmra.mrb[0].mxu0 %v1352
        %v1425 = vpop.f32.mrb[0].mxu0
        %v1426 = vadd.f32 0.0, %v1425
        %v1427 = vpop.f32.mrb[0].mxu0
        %1428 = vdwg.mxu0
        %1431 = vrot.lane.b32.xlu0 %v1421, 8
        %v1432 = vpop.permute.xlu0 %1431
        %1433 = vrot.lane.b32.xlu0 %v1426, 8
        %v1434 = vpop.permute.xlu0 %1433
        %vm1437 = vcmask 130112
        %1438 = vst.msk [vmem:[#allocation4] sm:$0xff] %vm1437, %v1432
        %1439 = vst.msk [vmem:[#allocation4 + $0x8] sm:$0xff] %vm1437, %v1434
        %1440 = vrot.lane.b32.xlu0 %v1027, 112
        %v1441 = vpop.permute.xlu0 %1440
        %1442 = vrot.lane.b32.xlu0 %v1028, 112
        %v1443 = vpop.permute.xlu0 %1442
        %1444 = vrot.lane.b32.xlu0 %v901, 80
        %v1445 = vpop.permute.xlu0 %1444
        %1446 = vrot.lane.b32.xlu0 %v906, 80
        %v1447 = vpop.permute.xlu0 %1446
        %v1448 = vsel %vm1035, %v1441, 0
        %v1450 = vsel %vm1035, %v1443, 0
        %v1452 = vsel %vm1035, %v1445, 0
        %v1454 = vsel %vm1035, %v1447, 0
        %1456 = vmatprep.subr.mxu0 0.0
        %1457 = vmatpush1.xpose.msra.mxu0 %v1452
        %1458 = vmatprep.subr.mxu0 0.0
        %1459 = vmatpush1.xpose.msra.mxu0 %v1454
        %1460 = vmatprep.subr.mxu0 0.0
        %1461 = vmatpush1.xpose.msra.mxu0 0.0
        %1462 = vmatprep.subr.mxu0 0.0
        %1463 = vmatpush1.xpose.msra.mxu0 0.0
        %1464 = vmatprep.subr.mxu0 0.0
        %1465 = vmatpush1.xpose.msra.mxu0 0.0
        %1466 = vmatprep.subr.mxu0 0.0
        %1467 = vmatpush1.xpose.msra.mxu0 0.0
        %1468 = vmatprep.subr.mxu0 0.0
        %1469 = vmatpush1.xpose.msra.mxu0 0.0
        %1470 = vmatprep.subr.mxu0 0.0
        %1471 = vmatpush1.xpose.msra.mxu0 0.0
        %1472 = vmatprep.subr.mxu0 0.0
        %1473 = vmatpush1.xpose.msra.mxu0 0.0
        %1474 = vmatprep.subr.mxu0 0.0
        %1475 = vmatpush1.xpose.msra.mxu0 0.0
        %1476 = vmatprep.subr.mxu0 0.0
        %1477 = vmatpush1.xpose.msra.mxu0 0.0
        %1478 = vmatprep.subr.mxu0 0.0
        %1479 = vmatpush1.xpose.msra.mxu0 0.0
        %1480 = vmatprep.subr.mxu0 0.0
        %1481 = vmatpush1.xpose.msra.mxu0 0.0
        %1482 = vmatprep.subr.mxu0 0.0
        %1483 = vmatpush1.xpose.msra.mxu0 0.0
        %1484 = vmatprep.subr.mxu0 0.0
        %1485 = vmatpush1.xpose.msra.mxu0 0.0
        %1486 = vmatprep.subr.mxu0 0.0
        %1487 = vmatpush1.xpose.msra.mxu0 0.0
        %1488 = vmatprep.subr.mxu0 0.0
        %1489 = vmatpush1.xpose.msra.mxu0 0.0
        %1490 = vmatprep.subr.mxu0 0.0
        %1491 = vmatpush1.xpose.msra.mxu0 0.0
        %1492 = vmatprep.subr.mxu0 0.0
        %1493 = vmatpush1.xpose.msra.mxu0 0.0
        %1494 = vmatprep.subr.mxu0 0.0
        %1495 = vmatpush1.xpose.msra.mxu0 0.0
        %1496 = vmatprep.subr.mxu0 0.0
        %1497 = vmatpush1.xpose.msra.mxu0 0.0
        %1498 = vmatprep.subr.mxu0 0.0
        %1499 = vmatpush1.xpose.msra.mxu0 0.0
        %1500 = vmatprep.subr.mxu0 0.0
        %1501 = vmatpush1.xpose.msra.mxu0 0.0
        %1502 = vmatprep.subr.mxu0 0.0
        %1503 = vmatpush1.xpose.msra.mxu0 0.0
        %1504 = vmatprep.subr.mxu0 0.0
        %1505 = vmatpush1.xpose.msra.mxu0 0.0
        %1506 = vmatprep.subr.mxu0 0.0
        %1507 = vmatpush1.xpose.msra.mxu0 0.0
        %1508 = vmatprep.subr.mxu0 0.0
        %1509 = vmatpush1.xpose.msra.mxu0 0.0
        %1510 = vmatprep.subr.mxu0 0.0
        %1511 = vmatpush1.xpose.msra.mxu0 0.0
        %1512 = vmatprep.subr.mxu0 0.0
        %1513 = vmatpush1.xpose.msra.mxu0 0.0
        %1514 = vmatprep.subr.mxu0 0.0
        %1515 = vmatpush1.xpose.msra.mxu0 0.0
        %1516 = vmatprep.subr.mxu0 0.0
        %1517 = vmatpush1.xpose.msra.mxu0 0.0
        %1518 = vmatprep.subr.mxu0 0.0
        %1519 = vmatpush1.xpose.msra.mxu0 0.0
        %1520 = vmatprep.mubr.f32.mxu0 0.0
        %1521 = vmatmul.mubr.f32.gmra.mrb[0].mxu0 %v1448
        %v1522 = vpop.f32.mrb[0].mxu0
        %v1523 = vadd.f32 0.0, %v1522
        %v1524 = vpop.f32.mrb[0].mxu0
        %1525 = vmatprep.mubr.f32.mxu0 0.0
        %1526 = vmatmul.mubr.f32.gmra.mrb[0].mxu0 %v1450
        %v1527 = vpop.f32.mrb[0].mxu0
        %v1528 = vadd.f32 0.0, %v1527
        %v1529 = vpop.f32.mrb[0].mxu0
        %1530 = vdwg.mxu0
        %v1531 = vsel %vm1121, %v1523, -inf
        %1532 = vmax.xlane.f32.xlu0 %v1531
        %v1533 = vpop.xlane.xlu0 %1532
        %v1534 = vsel %vm1121, %v1528, -inf
        %1535 = vmax.xlane.f32.xlu0 %v1534
        %v1536 = vpop.xlane.xlu0 %1535
        %v1537 = vsub.f32 %v1523, %v1533
        %v1538 = vsub.f32 %v1528, %v1536
        %v1539 = vmul.f32 %v1537, 1.442695
        %v1540 = vpow.pop %v1539
        %v1541 = vmul.f32 %v1538, 1.442695
        %v1542 = vpow.pop %v1541
        %v1543 = vsel %vm1121, %v1540, 0.0
        %1544 = vadd.xlane.f32.xlu0 %v1543
        %v1545 = vpop.xlane.xlu0 %1544
        %v1546 = vsel %vm1121, %v1542, 0.0
        %1547 = vadd.xlane.f32.xlu0 %v1546
        %v1548 = vpop.xlane.xlu0 %1547
        %v1549 = vrcp.pop %v1545
        %v1550 = vrcp.pop %v1548
        %v1551 = vmul.f32 %v1540, %v1549
        %v1552 = vmul.f32 %v1542, %v1550
        %1553 = vrot.lane.b32.xlu0 %v1009, 112
        %v1554 = vpop.permute.xlu0 %1553
        %1555 = vrot.lane.b32.xlu0 %v1014, 112
        %v1556 = vpop.permute.xlu0 %1555
        %v1560 = vsel %vm1121, %v1551, 0
        %v1563 = vsel %vm1121, %v1552, 0
        %1565 = vmatprep.subr.mxu0 0.0
        %1566 = vmatpush1.msra.mxu0 %v1554
        %1567 = vmatprep.subr.mxu0 0.0
        %1568 = vmatpush1.msra.mxu0 %v1556
        %1569 = vmatprep.subr.mxu0 0.0
        %1570 = vmatpush1.msra.mxu0 0.0
        %1571 = vmatprep.subr.mxu0 0.0
        %1572 = vmatpush1.msra.mxu0 0.0
        %1573 = vmatprep.subr.mxu0 0.0
        %1574 = vmatpush1.msra.mxu0 0.0
        %1575 = vmatprep.subr.mxu0 0.0
        %1576 = vmatpush1.msra.mxu0 0.0
        %1577 = vmatprep.subr.mxu0 0.0
        %1578 = vmatpush1.msra.mxu0 0.0
        %1579 = vmatprep.subr.mxu0 0.0
        %1580 = vmatpush1.msra.mxu0 0.0
        %1581 = vmatprep.subr.mxu0 0.0
        %1582 = vmatpush1.msra.mxu0 0.0
        %1583 = vmatprep.subr.mxu0 0.0
        %1584 = vmatpush1.msra.mxu0 0.0
        %1585 = vmatprep.subr.mxu0 0.0
        %1586 = vmatpush1.msra.mxu0 0.0
        %1587 = vmatprep.subr.mxu0 0.0
        %1588 = vmatpush1.msra.mxu0 0.0
        %1589 = vmatprep.subr.mxu0 0.0
        %1590 = vmatpush1.msra.mxu0 0.0
        %1591 = vmatprep.subr.mxu0 0.0
        %1592 = vmatpush1.msra.mxu0 0.0
        %1593 = vmatprep.subr.mxu0 0.0
        %1594 = vmatpush1.msra.mxu0 0.0
        %1595 = vmatprep.subr.mxu0 0.0
        %1596 = vmatpush1.msra.mxu0 0.0
        %1597 = vmatprep.subr.mxu0 0.0
        %1598 = vmatpush1.msra.mxu0 0.0
        %1599 = vmatprep.subr.mxu0 0.0
        %1600 = vmatpush1.msra.mxu0 0.0
        %1601 = vmatprep.subr.mxu0 0.0
        %1602 = vmatpush1.msra.mxu0 0.0
        %1603 = vmatprep.subr.mxu0 0.0
        %1604 = vmatpush1.msra.mxu0 0.0
        %1605 = vmatprep.subr.mxu0 0.0
        %1606 = vmatpush1.msra.mxu0 0.0
        %1607 = vmatprep.subr.mxu0 0.0
        %1608 = vmatpush1.msra.mxu0 0.0
        %1609 = vmatprep.subr.mxu0 0.0
        %1610 = vmatpush1.msra.mxu0 0.0
        %1611 = vmatprep.subr.mxu0 0.0
        %1612 = vmatpush1.msra.mxu0 0.0
        %1613 = vmatprep.subr.mxu0 0.0
        %1614 = vmatpush1.msra.mxu0 0.0
        %1615 = vmatprep.subr.mxu0 0.0
        %1616 = vmatpush1.msra.mxu0 0.0
        %1617 = vmatprep.subr.mxu0 0.0
        %1618 = vmatpush1.msra.mxu0 0.0
        %1619 = vmatprep.subr.mxu0 0.0
        %1620 = vmatpush1.msra.mxu0 0.0
        %1621 = vmatprep.subr.mxu0 0.0
        %1622 = vmatpush1.msra.mxu0 0.0
        %1623 = vmatprep.subr.mxu0 0.0
        %1624 = vmatpush1.msra.mxu0 0.0
        %1625 = vmatprep.subr.mxu0 0.0
        %1626 = vmatpush1.msra.mxu0 0.0
        %1627 = vmatprep.subr.mxu0 0.0
        %1628 = vmatpush1.msra.mxu0 0.0
        %1629 = vmatprep.mubr.f32.mxu0 0.0
        %1630 = vmatmul.mubr.f32.gmra.mrb[0].mxu0 %v1560
        %v1631 = vpop.f32.mrb[0].mxu0
        %v1632 = vadd.f32 0.0, %v1631
        %v1633 = vpop.f32.mrb[0].mxu0
        %1634 = vmatprep.mubr.f32.mxu0 0.0
        %1635 = vmatmul.mubr.f32.gmra.mrb[0].mxu0 %v1563
        %v1636 = vpop.f32.mrb[0].mxu0
        %v1637 = vadd.f32 0.0, %v1636
        %v1638 = vpop.f32.mrb[0].mxu0
        %1639 = vdwg.mxu0
        %1642 = vrot.lane.b32.xlu0 %v1632, 16
        %v1643 = vpop.permute.xlu0 %1642
        %1644 = vrot.lane.b32.xlu0 %v1637, 16
        %v1645 = vpop.permute.xlu0 %1644
        %vm1648 = vcmask 195712
        %1649 = vst.msk [vmem:[#allocation4] sm:$0xff] %vm1648, %v1643
        %1650 = vst.msk [vmem:[#allocation4 + $0x8] sm:$0xff] %vm1648, %v1645
        %1651 = vrot.lane.b32.xlu0 %v1027, 104
        %v1652 = vpop.permute.xlu0 %1651
        %1653 = vrot.lane.b32.xlu0 %v1028, 104
        %v1654 = vpop.permute.xlu0 %1653
        %1655 = vrot.lane.b32.xlu0 %v901, 72
        %v1656 = vpop.permute.xlu0 %1655
        %1657 = vrot.lane.b32.xlu0 %v906, 72
        %v1658 = vpop.permute.xlu0 %1657
        %v1659 = vsel %vm1035, %v1652, 0
        %v1661 = vsel %vm1035, %v1654, 0
        %v1663 = vsel %vm1035, %v1656, 0
        %v1665 = vsel %vm1035, %v1658, 0
        %1667 = vmatprep.subr.mxu0 0.0
        %1668 = vmatpush1.xpose.msra.mxu0 %v1663
        %1669 = vmatprep.subr.mxu0 0.0
        %1670 = vmatpush1.xpose.msra.mxu0 %v1665
        %1671 = vmatprep.subr.mxu0 0.0
        %1672 = vmatpush1.xpose.msra.mxu0 0.0
        %1673 = vmatprep.subr.mxu0 0.0
        %1674 = vmatpush1.xpose.msra.mxu0 0.0
        %1675 = vmatprep.subr.mxu0 0.0
        %1676 = vmatpush1.xpose.msra.mxu0 0.0
        %1677 = vmatprep.subr.mxu0 0.0
        %1678 = vmatpush1.xpose.msra.mxu0 0.0
        %1679 = vmatprep.subr.mxu0 0.0
        %1680 = vmatpush1.xpose.msra.mxu0 0.0
        %1681 = vmatprep.subr.mxu0 0.0
        %1682 = vmatpush1.xpose.msra.mxu0 0.0
        %1683 = vmatprep.subr.mxu0 0.0
        %1684 = vmatpush1.xpose.msra.mxu0 0.0
        %1685 = vmatprep.subr.mxu0 0.0
        %1686 = vmatpush1.xpose.msra.mxu0 0.0
        %1687 = vmatprep.subr.mxu0 0.0
        %1688 = vmatpush1.xpose.msra.mxu0 0.0
        %1689 = vmatprep.subr.mxu0 0.0
        %1690 = vmatpush1.xpose.msra.mxu0 0.0
        %1691 = vmatprep.subr.mxu0 0.0
        %1692 = vmatpush1.xpose.msra.mxu0 0.0
        %1693 = vmatprep.subr.mxu0 0.0
        %1694 = vmatpush1.xpose.msra.mxu0 0.0
        %1695 = vmatprep.subr.mxu0 0.0
        %1696 = vmatpush1.xpose.msra.mxu0 0.0
        %1697 = vmatprep.subr.mxu0 0.0
        %1698 = vmatpush1.xpose.msra.mxu0 0.0
        %1699 = vmatprep.subr.mxu0 0.0
        %1700 = vmatpush1.xpose.msra.mxu0 0.0
        %1701 = vmatprep.subr.mxu0 0.0
        %1702 = vmatpush1.xpose.msra.mxu0 0.0
        %1703 = vmatprep.subr.mxu0 0.0
        %1704 = vmatpush1.xpose.msra.mxu0 0.0
        %1705 = vmatprep.subr.mxu0 0.0
        %1706 = vmatpush1.xpose.msra.mxu0 0.0
        %1707 = vmatprep.subr.mxu0 0.0
        %1708 = vmatpush1.xpose.msra.mxu0 0.0
        %1709 = vmatprep.subr.mxu0 0.0
        %1710 = vmatpush1.xpose.msra.mxu0 0.0
        %1711 = vmatprep.subr.mxu0 0.0
        %1712 = vmatpush1.xpose.msra.mxu0 0.0
        %1713 = vmatprep.subr.mxu0 0.0
        %1714 = vmatpush1.xpose.msra.mxu0 0.0
        %1715 = vmatprep.subr.mxu0 0.0
        %1716 = vmatpush1.xpose.msra.mxu0 0.0
        %1717 = vmatprep.subr.mxu0 0.0
        %1718 = vmatpush1.xpose.msra.mxu0 0.0
        %1719 = vmatprep.subr.mxu0 0.0
        %1720 = vmatpush1.xpose.msra.mxu0 0.0
        %1721 = vmatprep.subr.mxu0 0.0
        %1722 = vmatpush1.xpose.msra.mxu0 0.0
        %1723 = vmatprep.subr.mxu0 0.0
        %1724 = vmatpush1.xpose.msra.mxu0 0.0
        %1725 = vmatprep.subr.mxu0 0.0
        %1726 = vmatpush1.xpose.msra.mxu0 0.0
        %1727 = vmatprep.subr.mxu0 0.0
        %1728 = vmatpush1.xpose.msra.mxu0 0.0
        %1729 = vmatprep.subr.mxu0 0.0
        %1730 = vmatpush1.xpose.msra.mxu0 0.0
        %1731 = vmatprep.mubr.f32.mxu0 0.0
        %1732 = vmatmul.mubr.f32.gmra.mrb[0].mxu0 %v1659
        %v1733 = vpop.f32.mrb[0].mxu0
        %v1734 = vadd.f32 0.0, %v1733
        %v1735 = vpop.f32.mrb[0].mxu0
        %1736 = vmatprep.mubr.f32.mxu0 0.0
        %1737 = vmatmul.mubr.f32.gmra.mrb[0].mxu0 %v1661
        %v1738 = vpop.f32.mrb[0].mxu0
        %v1739 = vadd.f32 0.0, %v1738
        %v1740 = vpop.f32.mrb[0].mxu0
        %1741 = vdwg.mxu0
        %v1742 = vsel %vm1121, %v1734, -inf
        %1743 = vmax.xlane.f32.xlu0 %v1742
        %v1744 = vpop.xlane.xlu0 %1743
        %v1745 = vsel %vm1121, %v1739, -inf
        %1746 = vmax.xlane.f32.xlu0 %v1745
        %v1747 = vpop.xlane.xlu0 %1746
        %v1748 = vsub.f32 %v1734, %v1744
        %v1749 = vsub.f32 %v1739, %v1747
        %v1750 = vmul.f32 %v1748, 1.442695
        %v1751 = vpow.pop %v1750
        %v1752 = vmul.f32 %v1749, 1.442695
        %v1753 = vpow.pop %v1752
        %v1754 = vsel %vm1121, %v1751, 0.0
        %1755 = vadd.xlane.f32.xlu0 %v1754
        %v1756 = vpop.xlane.xlu0 %1755
        %v1757 = vsel %vm1121, %v1753, 0.0
        %1758 = vadd.xlane.f32.xlu0 %v1757
        %v1759 = vpop.xlane.xlu0 %1758
        %v1760 = vrcp.pop %v1756
        %v1761 = vrcp.pop %v1759
        %v1762 = vmul.f32 %v1751, %v1760
        %v1763 = vmul.f32 %v1753, %v1761
        %1764 = vrot.lane.b32.xlu0 %v1009, 104
        %v1765 = vpop.permute.xlu0 %1764
        %1766 = vrot.lane.b32.xlu0 %v1014, 104
        %v1767 = vpop.permute.xlu0 %1766
        %v1771 = vsel %vm1121, %v1762, 0
        %v1774 = vsel %vm1121, %v1763, 0
        %1776 = vmatprep.subr.mxu0 0.0
        %1777 = vmatpush1.msra.mxu0 %v1765
        %1778 = vmatprep.subr.mxu0 0.0
        %1779 = vmatpush1.msra.mxu0 %v1767
        %1780 = vmatprep.subr.mxu0 0.0
        %1781 = vmatpush1.msra.mxu0 0.0
        %1782 = vmatprep.subr.mxu0 0.0
        %1783 = vmatpush1.msra.mxu0 0.0
        %1784 = vmatprep.subr.mxu0 0.0
        %1785 = vmatpush1.msra.mxu0 0.0
        %1786 = vmatprep.subr.mxu0 0.0
        %1787 = vmatpush1.msra.mxu0 0.0
        %1788 = vmatprep.subr.mxu0 0.0
        %1789 = vmatpush1.msra.mxu0 0.0
        %1790 = vmatprep.subr.mxu0 0.0
        %1791 = vmatpush1.msra.mxu0 0.0
        %1792 = vmatprep.subr.mxu0 0.0
        %1793 = vmatpush1.msra.mxu0 0.0
        %1794 = vmatprep.subr.mxu0 0.0
        %1795 = vmatpush1.msra.mxu0 0.0
        %1796 = vmatprep.subr.mxu0 0.0
        %1797 = vmatpush1.msra.mxu0 0.0
        %1798 = vmatprep.subr.mxu0 0.0
        %1799 = vmatpush1.msra.mxu0 0.0
        %1800 = vmatprep.subr.mxu0 0.0
        %1801 = vmatpush1.msra.mxu0 0.0
        %1802 = vmatprep.subr.mxu0 0.0
        %1803 = vmatpush1.msra.mxu0 0.0
        %1804 = vmatprep.subr.mxu0 0.0
        %1805 = vmatpush1.msra.mxu0 0.0
        %1806 = vmatprep.subr.mxu0 0.0
        %1807 = vmatpush1.msra.mxu0 0.0
        %1808 = vmatprep.subr.mxu0 0.0
        %1809 = vmatpush1.msra.mxu0 0.0
        %1810 = vmatprep.subr.mxu0 0.0
        %1811 = vmatpush1.msra.mxu0 0.0
        %1812 = vmatprep.subr.mxu0 0.0
        %1813 = vmatpush1.msra.mxu0 0.0
        %1814 = vmatprep.subr.mxu0 0.0
        %1815 = vmatpush1.msra.mxu0 0.0
        %1816 = vmatprep.subr.mxu0 0.0
        %1817 = vmatpush1.msra.mxu0 0.0
        %1818 = vmatprep.subr.mxu0 0.0
        %1819 = vmatpush1.msra.mxu0 0.0
        %1820 = vmatprep.subr.mxu0 0.0
        %1821 = vmatpush1.msra.mxu0 0.0
        %1822 = vmatprep.subr.mxu0 0.0
        %1823 = vmatpush1.msra.mxu0 0.0
        %1824 = vmatprep.subr.mxu0 0.0
        %1825 = vmatpush1.msra.mxu0 0.0
        %1826 = vmatprep.subr.mxu0 0.0
        %1827 = vmatpush1.msra.mxu0 0.0
        %1828 = vmatprep.subr.mxu0 0.0
        %1829 = vmatpush1.msra.mxu0 0.0
        %1830 = vmatprep.subr.mxu0 0.0
        %1831 = vmatpush1.msra.mxu0 0.0
        %1832 = vmatprep.subr.mxu0 0.0
        %1833 = vmatpush1.msra.mxu0 0.0
        %1834 = vmatprep.subr.mxu0 0.0
        %1835 = vmatpush1.msra.mxu0 0.0
        %1836 = vmatprep.subr.mxu0 0.0
        %1837 = vmatpush1.msra.mxu0 0.0
        %1838 = vmatprep.subr.mxu0 0.0
        %1839 = vmatpush1.msra.mxu0 0.0
        %1840 = vmatprep.mubr.f32.mxu0 0.0
        %1841 = vmatmul.mubr.f32.gmra.mrb[0].mxu0 %v1771
        %v1842 = vpop.f32.mrb[0].mxu0
        %v1843 = vadd.f32 0.0, %v1842
        %v1844 = vpop.f32.mrb[0].mxu0
        %1845 = vmatprep.mubr.f32.mxu0 0.0
        %1846 = vmatmul.mubr.f32.gmra.mrb[0].mxu0 %v1774
        %v1847 = vpop.f32.mrb[0].mxu0
        %v1848 = vadd.f32 0.0, %v1847
        %v1849 = vpop.f32.mrb[0].mxu0
        %1850 = vdwg.mxu0
        %1853 = vrot.lane.b32.xlu0 %v1843, 24
        %v1854 = vpop.permute.xlu0 %1853
        %1855 = vrot.lane.b32.xlu0 %v1848, 24
        %v1856 = vpop.permute.xlu0 %1855
        %vm1859 = vcmask 261312
        %1860 = vst.msk [vmem:[#allocation4] sm:$0xff] %vm1859, %v1854
        %1861 = vst.msk [vmem:[#allocation4 + $0x8] sm:$0xff] %vm1859, %v1856
        %v1862 = vmul.f32 %v911, 0.35355338
        %v1863 = vmul.f32 %v916, 0.35355338
        %1866 = vrot.lane.b32.xlu0 %v911, 96
        %v1867 = vpop.permute.xlu0 %1866
        %1868 = vrot.lane.b32.xlu0 %v916, 96
        %v1869 = vpop.permute.xlu0 %1868
        %v1871 = vsel %vm1035, %v1862, 0
        %v1874 = vsel %vm1035, %v1863, 0
        %v1876 = vsel %vm1035, %v1867, 0
        %v1878 = vsel %vm1035, %v1869, 0
        %1880 = vmatprep.subr.mxu0 0.0
        %1881 = vmatpush1.xpose.msra.mxu0 %v1876
        %1882 = vmatprep.subr.mxu0 0.0
        %1883 = vmatpush1.xpose.msra.mxu0 %v1878
        %1884 = vmatprep.subr.mxu0 0.0
        %1885 = vmatpush1.xpose.msra.mxu0 0.0
        %1886 = vmatprep.subr.mxu0 0.0
        %1887 = vmatpush1.xpose.msra.mxu0 0.0
        %1888 = vmatprep.subr.mxu0 0.0
        %1889 = vmatpush1.xpose.msra.mxu0 0.0
        %1890 = vmatprep.subr.mxu0 0.0
        %1891 = vmatpush1.xpose.msra.mxu0 0.0
        %1892 = vmatprep.subr.mxu0 0.0
        %1893 = vmatpush1.xpose.msra.mxu0 0.0
        %1894 = vmatprep.subr.mxu0 0.0
        %1895 = vmatpush1.xpose.msra.mxu0 0.0
        %1896 = vmatprep.subr.mxu0 0.0
        %1897 = vmatpush1.xpose.msra.mxu0 0.0
        %1898 = vmatprep.subr.mxu0 0.0
        %1899 = vmatpush1.xpose.msra.mxu0 0.0
        %1900 = vmatprep.subr.mxu0 0.0
        %1901 = vmatpush1.xpose.msra.mxu0 0.0
        %1902 = vmatprep.subr.mxu0 0.0
        %1903 = vmatpush1.xpose.msra.mxu0 0.0
        %1904 = vmatprep.subr.mxu0 0.0
        %1905 = vmatpush1.xpose.msra.mxu0 0.0
        %1906 = vmatprep.subr.mxu0 0.0
        %1907 = vmatpush1.xpose.msra.mxu0 0.0
        %1908 = vmatprep.subr.mxu0 0.0
        %1909 = vmatpush1.xpose.msra.mxu0 0.0
        %1910 = vmatprep.subr.mxu0 0.0
        %1911 = vmatpush1.xpose.msra.mxu0 0.0
        %1912 = vmatprep.subr.mxu0 0.0
        %1913 = vmatpush1.xpose.msra.mxu0 0.0
        %1914 = vmatprep.subr.mxu0 0.0
        %1915 = vmatpush1.xpose.msra.mxu0 0.0
        %1916 = vmatprep.subr.mxu0 0.0
        %1917 = vmatpush1.xpose.msra.mxu0 0.0
        %1918 = vmatprep.subr.mxu0 0.0
        %1919 = vmatpush1.xpose.msra.mxu0 0.0
        %1920 = vmatprep.subr.mxu0 0.0
        %1921 = vmatpush1.xpose.msra.mxu0 0.0
        %1922 = vmatprep.subr.mxu0 0.0
        %1923 = vmatpush1.xpose.msra.mxu0 0.0
        %1924 = vmatprep.subr.mxu0 0.0
        %1925 = vmatpush1.xpose.msra.mxu0 0.0
        %1926 = vmatprep.subr.mxu0 0.0
        %1927 = vmatpush1.xpose.msra.mxu0 0.0
        %1928 = vmatprep.subr.mxu0 0.0
        %1929 = vmatpush1.xpose.msra.mxu0 0.0
        %1930 = vmatprep.subr.mxu0 0.0
        %1931 = vmatpush1.xpose.msra.mxu0 0.0
        %1932 = vmatprep.subr.mxu0 0.0
        %1933 = vmatpush1.xpose.msra.mxu0 0.0
        %1934 = vmatprep.subr.mxu0 0.0
        %1935 = vmatpush1.xpose.msra.mxu0 0.0
        %1936 = vmatprep.subr.mxu0 0.0
        %1937 = vmatpush1.xpose.msra.mxu0 0.0
        %1938 = vmatprep.subr.mxu0 0.0
        %1939 = vmatpush1.xpose.msra.mxu0 0.0
        %1940 = vmatprep.subr.mxu0 0.0
        %1941 = vmatpush1.xpose.msra.mxu0 0.0
        %1942 = vmatprep.subr.mxu0 0.0
        %1943 = vmatpush1.xpose.msra.mxu0 0.0
        %1944 = vmatprep.mubr.f32.mxu0 0.0
        %1945 = vmatmul.mubr.f32.gmra.mrb[0].mxu0 %v1871
        %v1946 = vpop.f32.mrb[0].mxu0
        %v1947 = vadd.f32 0.0, %v1946
        %v1948 = vpop.f32.mrb[0].mxu0
        %1949 = vmatprep.mubr.f32.mxu0 0.0
        %1950 = vmatmul.mubr.f32.gmra.mrb[0].mxu0 %v1874
        %v1951 = vpop.f32.mrb[0].mxu0
        %v1952 = vadd.f32 0.0, %v1951
        %v1953 = vpop.f32.mrb[0].mxu0
        %1954 = vdwg.mxu0
        %v1955 = vsel %vm1121, %v1947, -inf
        %1956 = vmax.xlane.f32.xlu0 %v1955
        %v1957 = vpop.xlane.xlu0 %1956
        %v1958 = vsel %vm1121, %v1952, -inf
        %1959 = vmax.xlane.f32.xlu0 %v1958
        %v1960 = vpop.xlane.xlu0 %1959
        %v1961 = vsub.f32 %v1947, %v1957
        %v1962 = vsub.f32 %v1952, %v1960
        %v1963 = vmul.f32 %v1961, 1.442695
        %v1964 = vpow.pop %v1963
        %v1965 = vmul.f32 %v1962, 1.442695
        %v1966 = vpow.pop %v1965
        %v1967 = vsel %vm1121, %v1964, 0.0
        %1968 = vadd.xlane.f32.xlu0 %v1967
        %v1969 = vpop.xlane.xlu0 %1968
        %v1970 = vsel %vm1121, %v1966, 0.0
        %1971 = vadd.xlane.f32.xlu0 %v1970
        %v1972 = vpop.xlane.xlu0 %1971
        %v1973 = vrcp.pop %v1969
        %v1974 = vrcp.pop %v1972
        %v1975 = vmul.f32 %v1964, %v1973
        %v1976 = vmul.f32 %v1966, %v1974
        %v1978 = vsel %vm1121, %v1975, 0
        %v1981 = vsel %vm1121, %v1976, 0
        %1983 = vmatprep.subr.mxu0 0.0
        %1984 = vmatpush1.msra.mxu0 %v1019
        %1985 = vmatprep.subr.mxu0 0.0
        %1986 = vmatpush1.msra.mxu0 %v1024
        %1987 = vmatprep.subr.mxu0 0.0
        %1988 = vmatpush1.msra.mxu0 0.0
        %1989 = vmatprep.subr.mxu0 0.0
        %1990 = vmatpush1.msra.mxu0 0.0
        %1991 = vmatprep.subr.mxu0 0.0
        %1992 = vmatpush1.msra.mxu0 0.0
        %1993 = vmatprep.subr.mxu0 0.0
        %1994 = vmatpush1.msra.mxu0 0.0
        %1995 = vmatprep.subr.mxu0 0.0
        %1996 = vmatpush1.msra.mxu0 0.0
        %1997 = vmatprep.subr.mxu0 0.0
        %1998 = vmatpush1.msra.mxu0 0.0
        %1999 = vmatprep.subr.mxu0 0.0
        %2000 = vmatpush1.msra.mxu0 0.0
        %2001 = vmatprep.subr.mxu0 0.0
        %2002 = vmatpush1.msra.mxu0 0.0
        %2003 = vmatprep.subr.mxu0 0.0
        %2004 = vmatpush1.msra.mxu0 0.0
        %2005 = vmatprep.subr.mxu0 0.0
        %2006 = vmatpush1.msra.mxu0 0.0
        %2007 = vmatprep.subr.mxu0 0.0
        %2008 = vmatpush1.msra.mxu0 0.0
        %2009 = vmatprep.subr.mxu0 0.0
        %2010 = vmatpush1.msra.mxu0 0.0
        %2011 = vmatprep.subr.mxu0 0.0
        %2012 = vmatpush1.msra.mxu0 0.0
        %2013 = vmatprep.subr.mxu0 0.0
        %2014 = vmatpush1.msra.mxu0 0.0
        %2015 = vmatprep.subr.mxu0 0.0
        %2016 = vmatpush1.msra.mxu0 0.0
        %2017 = vmatprep.subr.mxu0 0.0
        %2018 = vmatpush1.msra.mxu0 0.0
        %2019 = vmatprep.subr.mxu0 0.0
        %2020 = vmatpush1.msra.mxu0 0.0
        %2021 = vmatprep.subr.mxu0 0.0
        %2022 = vmatpush1.msra.mxu0 0.0
        %2023 = vmatprep.subr.mxu0 0.0
        %2024 = vmatpush1.msra.mxu0 0.0
        %2025 = vmatprep.subr.mxu0 0.0
        %2026 = vmatpush1.msra.mxu0 0.0
        %2027 = vmatprep.subr.mxu0 0.0
        %2028 = vmatpush1.msra.mxu0 0.0
        %2029 = vmatprep.subr.mxu0 0.0
        %2030 = vmatpush1.msra.mxu0 0.0
        %2031 = vmatprep.subr.mxu0 0.0
        %2032 = vmatpush1.msra.mxu0 0.0
        %2033 = vmatprep.subr.mxu0 0.0
        %2034 = vmatpush1.msra.mxu0 0.0
        %2035 = vmatprep.subr.mxu0 0.0
        %2036 = vmatpush1.msra.mxu0 0.0
        %2037 = vmatprep.subr.mxu0 0.0
        %2038 = vmatpush1.msra.mxu0 0.0
        %2039 = vmatprep.subr.mxu0 0.0
        %2040 = vmatpush1.msra.mxu0 0.0
        %2041 = vmatprep.subr.mxu0 0.0
        %2042 = vmatpush1.msra.mxu0 0.0
        %2043 = vmatprep.subr.mxu0 0.0
        %2044 = vmatpush1.msra.mxu0 0.0
        %2045 = vmatprep.subr.mxu0 0.0
        %2046 = vmatpush1.msra.mxu0 0.0
        %2047 = vmatprep.mubr.f32.mxu0 0.0
        %2048 = vmatmul.mubr.f32.gmra.mrb[0].mxu0 %v1978
        %v2049 = vpop.f32.mrb[0].mxu0
        %v2050 = vadd.f32 0.0, %v2049
        %v2051 = vpop.f32.mrb[0].mxu0
        %2052 = vmatprep.mubr.f32.mxu0 0.0
        %2053 = vmatmul.mubr.f32.gmra.mrb[0].mxu0 %v1981
        %v2054 = vpop.f32.mrb[0].mxu0
        %v2055 = vadd.f32 0.0, %v2054
        %v2056 = vpop.f32.mrb[0].mxu0
        %2057 = vdwg.mxu0
        %2058 = vst.msk [vmem:[#allocation4 + $0x10] sm:$0xff] %vm1035, %v2050
        %2059 = vst.msk [vmem:[#allocation4 + $0x18] sm:$0xff] %vm1035, %v2055
        %2060 = vrot.lane.b32.xlu0 %v1862, 120
        %v2061 = vpop.permute.xlu0 %2060
        %2062 = vrot.lane.b32.xlu0 %v1863, 120
        %v2063 = vpop.permute.xlu0 %2062
        %2064 = vrot.lane.b32.xlu0 %v911, 88
        %v2065 = vpop.permute.xlu0 %2064
        %2066 = vrot.lane.b32.xlu0 %v916, 88
        %v2067 = vpop.permute.xlu0 %2066
        %v2068 = vsel %vm1035, %v2061, 0
        %v2070 = vsel %vm1035, %v2063, 0
        %v2072 = vsel %vm1035, %v2065, 0
        %v2074 = vsel %vm1035, %v2067, 0
        %2076 = vmatprep.subr.mxu0 0.0
        %2077 = vmatpush1.xpose.msra.mxu0 %v2072
        %2078 = vmatprep.subr.mxu0 0.0
        %2079 = vmatpush1.xpose.msra.mxu0 %v2074
        %2080 = vmatprep.subr.mxu0 0.0
        %2081 = vmatpush1.xpose.msra.mxu0 0.0
        %2082 = vmatprep.subr.mxu0 0.0
        %2083 = vmatpush1.xpose.msra.mxu0 0.0
        %2084 = vmatprep.subr.mxu0 0.0
        %2085 = vmatpush1.xpose.msra.mxu0 0.0
        %2086 = vmatprep.subr.mxu0 0.0
        %2087 = vmatpush1.xpose.msra.mxu0 0.0
        %2088 = vmatprep.subr.mxu0 0.0
        %2089 = vmatpush1.xpose.msra.mxu0 0.0
        %2090 = vmatprep.subr.mxu0 0.0
        %2091 = vmatpush1.xpose.msra.mxu0 0.0
        %2092 = vmatprep.subr.mxu0 0.0
        %2093 = vmatpush1.xpose.msra.mxu0 0.0
        %2094 = vmatprep.subr.mxu0 0.0
        %2095 = vmatpush1.xpose.msra.mxu0 0.0
        %2096 = vmatprep.subr.mxu0 0.0
        %2097 = vmatpush1.xpose.msra.mxu0 0.0
        %2098 = vmatprep.subr.mxu0 0.0
        %2099 = vmatpush1.xpose.msra.mxu0 0.0
        %2100 = vmatprep.subr.mxu0 0.0
        %2101 = vmatpush1.xpose.msra.mxu0 0.0
        %2102 = vmatprep.subr.mxu0 0.0
        %2103 = vmatpush1.xpose.msra.mxu0 0.0
        %2104 = vmatprep.subr.mxu0 0.0
        %2105 = vmatpush1.xpose.msra.mxu0 0.0
        %2106 = vmatprep.subr.mxu0 0.0
        %2107 = vmatpush1.xpose.msra.mxu0 0.0
        %2108 = vmatprep.subr.mxu0 0.0
        %2109 = vmatpush1.xpose.msra.mxu0 0.0
        %2110 = vmatprep.subr.mxu0 0.0
        %2111 = vmatpush1.xpose.msra.mxu0 0.0
        %2112 = vmatprep.subr.mxu0 0.0
        %2113 = vmatpush1.xpose.msra.mxu0 0.0
        %2114 = vmatprep.subr.mxu0 0.0
        %2115 = vmatpush1.xpose.msra.mxu0 0.0
        %2116 = vmatprep.subr.mxu0 0.0
        %2117 = vmatpush1.xpose.msra.mxu0 0.0
        %2118 = vmatprep.subr.mxu0 0.0
        %2119 = vmatpush1.xpose.msra.mxu0 0.0
        %2120 = vmatprep.subr.mxu0 0.0
        %2121 = vmatpush1.xpose.msra.mxu0 0.0
        %2122 = vmatprep.subr.mxu0 0.0
        %2123 = vmatpush1.xpose.msra.mxu0 0.0
        %2124 = vmatprep.subr.mxu0 0.0
        %2125 = vmatpush1.xpose.msra.mxu0 0.0
        %2126 = vmatprep.subr.mxu0 0.0
        %2127 = vmatpush1.xpose.msra.mxu0 0.0
        %2128 = vmatprep.subr.mxu0 0.0
        %2129 = vmatpush1.xpose.msra.mxu0 0.0
        %2130 = vmatprep.subr.mxu0 0.0
        %2131 = vmatpush1.xpose.msra.mxu0 0.0
        %2132 = vmatprep.subr.mxu0 0.0
        %2133 = vmatpush1.xpose.msra.mxu0 0.0
        %2134 = vmatprep.subr.mxu0 0.0
        %2135 = vmatpush1.xpose.msra.mxu0 0.0
        %2136 = vmatprep.subr.mxu0 0.0
        %2137 = vmatpush1.xpose.msra.mxu0 0.0
        %2138 = vmatprep.subr.mxu0 0.0
        %2139 = vmatpush1.xpose.msra.mxu0 0.0
        %2140 = vmatprep.mubr.f32.mxu0 0.0
        %2141 = vmatmul.mubr.f32.gmra.mrb[0].mxu0 %v2068
        %v2142 = vpop.f32.mrb[0].mxu0
        %v2143 = vadd.f32 0.0, %v2142
        %v2144 = vpop.f32.mrb[0].mxu0
        %2145 = vmatprep.mubr.f32.mxu0 0.0
        %2146 = vmatmul.mubr.f32.gmra.mrb[0].mxu0 %v2070
        %v2147 = vpop.f32.mrb[0].mxu0
        %v2148 = vadd.f32 0.0, %v2147
        %v2149 = vpop.f32.mrb[0].mxu0
        %2150 = vdwg.mxu0
        %v2151 = vsel %vm1121, %v2143, -inf
        %2152 = vmax.xlane.f32.xlu0 %v2151
        %v2153 = vpop.xlane.xlu0 %2152
        %v2154 = vsel %vm1121, %v2148, -inf
        %2155 = vmax.xlane.f32.xlu0 %v2154
        %v2156 = vpop.xlane.xlu0 %2155
        %v2157 = vsub.f32 %v2143, %v2153
        %v2158 = vsub.f32 %v2148, %v2156
        %v2159 = vmul.f32 %v2157, 1.442695
        %v2160 = vpow.pop %v2159
        %v2161 = vmul.f32 %v2158, 1.442695
        %v2162 = vpow.pop %v2161
        %v2163 = vsel %vm1121, %v2160, 0.0
        %2164 = vadd.xlane.f32.xlu0 %v2163
        %v2165 = vpop.xlane.xlu0 %2164
        %v2166 = vsel %vm1121, %v2162, 0.0
        %2167 = vadd.xlane.f32.xlu0 %v2166
        %v2168 = vpop.xlane.xlu0 %2167
        %v2169 = vrcp.pop %v2165
        %v2170 = vrcp.pop %v2168
        %v2171 = vmul.f32 %v2160, %v2169
        %v2172 = vmul.f32 %v2162, %v2170
        %2175 = vrot.lane.b32.xlu0 %v1019, 120
        %v2176 = vpop.permute.xlu0 %2175
        %2177 = vrot.lane.b32.xlu0 %v1024, 120
        %v2178 = vpop.permute.xlu0 %2177
        %v2182 = vsel %vm1121, %v2171, 0
        %v2185 = vsel %vm1121, %v2172, 0
        %2187 = vmatprep.subr.mxu0 0.0
        %2188 = vmatpush1.msra.mxu0 %v2176
        %2189 = vmatprep.subr.mxu0 0.0
        %2190 = vmatpush1.msra.mxu0 %v2178
        %2191 = vmatprep.subr.mxu0 0.0
        %2192 = vmatpush1.msra.mxu0 0.0
        %2193 = vmatprep.subr.mxu0 0.0
        %2194 = vmatpush1.msra.mxu0 0.0
        %2195 = vmatprep.subr.mxu0 0.0
        %2196 = vmatpush1.msra.mxu0 0.0
        %2197 = vmatprep.subr.mxu0 0.0
        %2198 = vmatpush1.msra.mxu0 0.0
        %2199 = vmatprep.subr.mxu0 0.0
        %2200 = vmatpush1.msra.mxu0 0.0
        %2201 = vmatprep.subr.mxu0 0.0
        %2202 = vmatpush1.msra.mxu0 0.0
        %2203 = vmatprep.subr.mxu0 0.0
        %2204 = vmatpush1.msra.mxu0 0.0
        %2205 = vmatprep.subr.mxu0 0.0
        %2206 = vmatpush1.msra.mxu0 0.0
        %2207 = vmatprep.subr.mxu0 0.0
        %2208 = vmatpush1.msra.mxu0 0.0
        %2209 = vmatprep.subr.mxu0 0.0
        %2210 = vmatpush1.msra.mxu0 0.0
        %2211 = vmatprep.subr.mxu0 0.0
        %2212 = vmatpush1.msra.mxu0 0.0
        %2213 = vmatprep.subr.mxu0 0.0
        %2214 = vmatpush1.msra.mxu0 0.0
        %2215 = vmatprep.subr.mxu0 0.0
        %2216 = vmatpush1.msra.mxu0 0.0
        %2217 = vmatprep.subr.mxu0 0.0
        %2218 = vmatpush1.msra.mxu0 0.0
        %2219 = vmatprep.subr.mxu0 0.0
        %2220 = vmatpush1.msra.mxu0 0.0
        %2221 = vmatprep.subr.mxu0 0.0
        %2222 = vmatpush1.msra.mxu0 0.0
        %2223 = vmatprep.subr.mxu0 0.0
        %2224 = vmatpush1.msra.mxu0 0.0
        %2225 = vmatprep.subr.mxu0 0.0
        %2226 = vmatpush1.msra.mxu0 0.0
        %2227 = vmatprep.subr.mxu0 0.0
        %2228 = vmatpush1.msra.mxu0 0.0
        %2229 = vmatprep.subr.mxu0 0.0
        %2230 = vmatpush1.msra.mxu0 0.0
        %2231 = vmatprep.subr.mxu0 0.0
        %2232 = vmatpush1.msra.mxu0 0.0
        %2233 = vmatprep.subr.mxu0 0.0
        %2234 = vmatpush1.msra.mxu0 0.0
        %2235 = vmatprep.subr.mxu0 0.0
        %2236 = vmatpush1.msra.mxu0 0.0
        %2237 = vmatprep.subr.mxu0 0.0
        %2238 = vmatpush1.msra.mxu0 0.0
        %2239 = vmatprep.subr.mxu0 0.0
        %2240 = vmatpush1.msra.mxu0 0.0
        %2241 = vmatprep.subr.mxu0 0.0
        %2242 = vmatpush1.msra.mxu0 0.0
        %2243 = vmatprep.subr.mxu0 0.0
        %2244 = vmatpush1.msra.mxu0 0.0
        %2245 = vmatprep.subr.mxu0 0.0
        %2246 = vmatpush1.msra.mxu0 0.0
        %2247 = vmatprep.subr.mxu0 0.0
        %2248 = vmatpush1.msra.mxu0 0.0
        %2249 = vmatprep.subr.mxu0 0.0
        %2250 = vmatpush1.msra.mxu0 0.0
        %2251 = vmatprep.mubr.f32.mxu0 0.0
        %2252 = vmatmul.mubr.f32.gmra.mrb[0].mxu0 %v2182
        %v2253 = vpop.f32.mrb[0].mxu0
        %v2254 = vadd.f32 0.0, %v2253
        %v2255 = vpop.f32.mrb[0].mxu0
        %2256 = vmatprep.mubr.f32.mxu0 0.0
        %2257 = vmatmul.mubr.f32.gmra.mrb[0].mxu0 %v2185
        %v2258 = vpop.f32.mrb[0].mxu0
        %v2259 = vadd.f32 0.0, %v2258
        %v2260 = vpop.f32.mrb[0].mxu0
        %2261 = vdwg.mxu0
        %2264 = vrot.lane.b32.xlu0 %v2254, 8
        %v2265 = vpop.permute.xlu0 %2264
        %2266 = vrot.lane.b32.xlu0 %v2259, 8
        %v2267 = vpop.permute.xlu0 %2266
        %2270 = vst.msk [vmem:[#allocation4 + $0x10] sm:$0xff] %vm1437, %v2265
        %2271 = vst.msk [vmem:[#allocation4 + $0x18] sm:$0xff] %vm1437, %v2267
        %2272 = vrot.lane.b32.xlu0 %v1862, 112
        %v2273 = vpop.permute.xlu0 %2272
        %2274 = vrot.lane.b32.xlu0 %v1863, 112
        %v2275 = vpop.permute.xlu0 %2274
        %2276 = vrot.lane.b32.xlu0 %v911, 80
        %v2277 = vpop.permute.xlu0 %2276
        %2278 = vrot.lane.b32.xlu0 %v916, 80
        %v2279 = vpop.permute.xlu0 %2278
        %v2280 = vsel %vm1035, %v2273, 0
        %v2282 = vsel %vm1035, %v2275, 0
        %v2284 = vsel %vm1035, %v2277, 0
        %v2286 = vsel %vm1035, %v2279, 0
        %2288 = vmatprep.subr.mxu0 0.0
        %2289 = vmatpush1.xpose.msra.mxu0 %v2284
        %2290 = vmatprep.subr.mxu0 0.0
        %2291 = vmatpush1.xpose.msra.mxu0 %v2286
        %2292 = vmatprep.subr.mxu0 0.0
        %2293 = vmatpush1.xpose.msra.mxu0 0.0
        %2294 = vmatprep.subr.mxu0 0.0
        %2295 = vmatpush1.xpose.msra.mxu0 0.0
        %2296 = vmatprep.subr.mxu0 0.0
        %2297 = vmatpush1.xpose.msra.mxu0 0.0
        %2298 = vmatprep.subr.mxu0 0.0
        %2299 = vmatpush1.xpose.msra.mxu0 0.0
        %2300 = vmatprep.subr.mxu0 0.0
        %2301 = vmatpush1.xpose.msra.mxu0 0.0
        %2302 = vmatprep.subr.mxu0 0.0
        %2303 = vmatpush1.xpose.msra.mxu0 0.0
        %2304 = vmatprep.subr.mxu0 0.0
        %2305 = vmatpush1.xpose.msra.mxu0 0.0
        %2306 = vmatprep.subr.mxu0 0.0
        %2307 = vmatpush1.xpose.msra.mxu0 0.0
        %2308 = vmatprep.subr.mxu0 0.0
        %2309 = vmatpush1.xpose.msra.mxu0 0.0
        %2310 = vmatprep.subr.mxu0 0.0
        %2311 = vmatpush1.xpose.msra.mxu0 0.0
        %2312 = vmatprep.subr.mxu0 0.0
        %2313 = vmatpush1.xpose.msra.mxu0 0.0
        %2314 = vmatprep.subr.mxu0 0.0
        %2315 = vmatpush1.xpose.msra.mxu0 0.0
        %2316 = vmatprep.subr.mxu0 0.0
        %2317 = vmatpush1.xpose.msra.mxu0 0.0
        %2318 = vmatprep.subr.mxu0 0.0
        %2319 = vmatpush1.xpose.msra.mxu0 0.0
        %2320 = vmatprep.subr.mxu0 0.0
        %2321 = vmatpush1.xpose.msra.mxu0 0.0
        %2322 = vmatprep.subr.mxu0 0.0
        %2323 = vmatpush1.xpose.msra.mxu0 0.0
        %2324 = vmatprep.subr.mxu0 0.0
        %2325 = vmatpush1.xpose.msra.mxu0 0.0
        %2326 = vmatprep.subr.mxu0 0.0
        %2327 = vmatpush1.xpose.msra.mxu0 0.0
        %2328 = vmatprep.subr.mxu0 0.0
        %2329 = vmatpush1.xpose.msra.mxu0 0.0
        %2330 = vmatprep.subr.mxu0 0.0
        %2331 = vmatpush1.xpose.msra.mxu0 0.0
        %2332 = vmatprep.subr.mxu0 0.0
        %2333 = vmatpush1.xpose.msra.mxu0 0.0
        %2334 = vmatprep.subr.mxu0 0.0
        %2335 = vmatpush1.xpose.msra.mxu0 0.0
        %2336 = vmatprep.subr.mxu0 0.0
        %2337 = vmatpush1.xpose.msra.mxu0 0.0
        %2338 = vmatprep.subr.mxu0 0.0
        %2339 = vmatpush1.xpose.msra.mxu0 0.0
        %2340 = vmatprep.subr.mxu0 0.0
        %2341 = vmatpush1.xpose.msra.mxu0 0.0
        %2342 = vmatprep.subr.mxu0 0.0
        %2343 = vmatpush1.xpose.msra.mxu0 0.0
        %2344 = vmatprep.subr.mxu0 0.0
        %2345 = vmatpush1.xpose.msra.mxu0 0.0
        %2346 = vmatprep.subr.mxu0 0.0
        %2347 = vmatpush1.xpose.msra.mxu0 0.0
        %2348 = vmatprep.subr.mxu0 0.0
        %2349 = vmatpush1.xpose.msra.mxu0 0.0
        %2350 = vmatprep.subr.mxu0 0.0
        %2351 = vmatpush1.xpose.msra.mxu0 0.0
        %2352 = vmatprep.mubr.f32.mxu0 0.0
        %2353 = vmatmul.mubr.f32.gmra.mrb[0].mxu0 %v2280
        %v2354 = vpop.f32.mrb[0].mxu0
        %v2355 = vadd.f32 0.0, %v2354
        %v2356 = vpop.f32.mrb[0].mxu0
        %2357 = vmatprep.mubr.f32.mxu0 0.0
        %2358 = vmatmul.mubr.f32.gmra.mrb[0].mxu0 %v2282
        %v2359 = vpop.f32.mrb[0].mxu0
        %v2360 = vadd.f32 0.0, %v2359
        %v2361 = vpop.f32.mrb[0].mxu0
        %2362 = vdwg.mxu0
        %v2363 = vsel %vm1121, %v2355, -inf
        %2364 = vmax.xlane.f32.xlu0 %v2363
        %v2365 = vpop.xlane.xlu0 %2364
        %v2366 = vsel %vm1121, %v2360, -inf
        %2367 = vmax.xlane.f32.xlu0 %v2366
        %v2368 = vpop.xlane.xlu0 %2367
        %v2369 = vsub.f32 %v2355, %v2365
        %v2370 = vsub.f32 %v2360, %v2368
        %v2371 = vmul.f32 %v2369, 1.442695
        %v2372 = vpow.pop %v2371
        %v2373 = vmul.f32 %v2370, 1.442695
        %v2374 = vpow.pop %v2373
        %v2375 = vsel %vm1121, %v2372, 0.0
        %2376 = vadd.xlane.f32.xlu0 %v2375
        %v2377 = vpop.xlane.xlu0 %2376
        %v2378 = vsel %vm1121, %v2374, 0.0
        %2379 = vadd.xlane.f32.xlu0 %v2378
        %v2380 = vpop.xlane.xlu0 %2379
        %v2381 = vrcp.pop %v2377
        %v2382 = vrcp.pop %v2380
        %v2383 = vmul.f32 %v2372, %v2381
        %v2384 = vmul.f32 %v2374, %v2382
        %2385 = vrot.lane.b32.xlu0 %v1019, 112
        %v2386 = vpop.permute.xlu0 %2385
        %2387 = vrot.lane.b32.xlu0 %v1024, 112
        %v2388 = vpop.permute.xlu0 %2387
        %v2392 = vsel %vm1121, %v2383, 0
        %v2395 = vsel %vm1121, %v2384, 0
        %2397 = vmatprep.subr.mxu0 0.0
        %2398 = vmatpush1.msra.mxu0 %v2386
        %2399 = vmatprep.subr.mxu0 0.0
        %2400 = vmatpush1.msra.mxu0 %v2388
        %2401 = vmatprep.subr.mxu0 0.0
        %2402 = vmatpush1.msra.mxu0 0.0
        %2403 = vmatprep.subr.mxu0 0.0
        %2404 = vmatpush1.msra.mxu0 0.0
        %2405 = vmatprep.subr.mxu0 0.0
        %2406 = vmatpush1.msra.mxu0 0.0
        %2407 = vmatprep.subr.mxu0 0.0
        %2408 = vmatpush1.msra.mxu0 0.0
        %2409 = vmatprep.subr.mxu0 0.0
        %2410 = vmatpush1.msra.mxu0 0.0
        %2411 = vmatprep.subr.mxu0 0.0
        %2412 = vmatpush1.msra.mxu0 0.0
        %2413 = vmatprep.subr.mxu0 0.0
        %2414 = vmatpush1.msra.mxu0 0.0
        %2415 = vmatprep.subr.mxu0 0.0
        %2416 = vmatpush1.msra.mxu0 0.0
        %2417 = vmatprep.subr.mxu0 0.0
        %2418 = vmatpush1.msra.mxu0 0.0
        %2419 = vmatprep.subr.mxu0 0.0
        %2420 = vmatpush1.msra.mxu0 0.0
        %2421 = vmatprep.subr.mxu0 0.0
        %2422 = vmatpush1.msra.mxu0 0.0
        %2423 = vmatprep.subr.mxu0 0.0
        %2424 = vmatpush1.msra.mxu0 0.0
        %2425 = vmatprep.subr.mxu0 0.0
        %2426 = vmatpush1.msra.mxu0 0.0
        %2427 = vmatprep.subr.mxu0 0.0
        %2428 = vmatpush1.msra.mxu0 0.0
        %2429 = vmatprep.subr.mxu0 0.0
        %2430 = vmatpush1.msra.mxu0 0.0
        %2431 = vmatprep.subr.mxu0 0.0
        %2432 = vmatpush1.msra.mxu0 0.0
        %2433 = vmatprep.subr.mxu0 0.0
        %2434 = vmatpush1.msra.mxu0 0.0
        %2435 = vmatprep.subr.mxu0 0.0
        %2436 = vmatpush1.msra.mxu0 0.0
        %2437 = vmatprep.subr.mxu0 0.0
        %2438 = vmatpush1.msra.mxu0 0.0
        %2439 = vmatprep.subr.mxu0 0.0
        %2440 = vmatpush1.msra.mxu0 0.0
        %2441 = vmatprep.subr.mxu0 0.0
        %2442 = vmatpush1.msra.mxu0 0.0
        %2443 = vmatprep.subr.mxu0 0.0
        %2444 = vmatpush1.msra.mxu0 0.0
        %2445 = vmatprep.subr.mxu0 0.0
        %2446 = vmatpush1.msra.mxu0 0.0
        %2447 = vmatprep.subr.mxu0 0.0
        %2448 = vmatpush1.msra.mxu0 0.0
        %2449 = vmatprep.subr.mxu0 0.0
        %2450 = vmatpush1.msra.mxu0 0.0
        %2451 = vmatprep.subr.mxu0 0.0
        %2452 = vmatpush1.msra.mxu0 0.0
        %2453 = vmatprep.subr.mxu0 0.0
        %2454 = vmatpush1.msra.mxu0 0.0
        %2455 = vmatprep.subr.mxu0 0.0
        %2456 = vmatpush1.msra.mxu0 0.0
        %2457 = vmatprep.subr.mxu0 0.0
        %2458 = vmatpush1.msra.mxu0 0.0
        %2459 = vmatprep.subr.mxu0 0.0
        %2460 = vmatpush1.msra.mxu0 0.0
        %2461 = vmatprep.mubr.f32.mxu0 0.0
        %2462 = vmatmul.mubr.f32.gmra.mrb[0].mxu0 %v2392
        %v2463 = vpop.f32.mrb[0].mxu0
        %v2464 = vadd.f32 0.0, %v2463
        %v2465 = vpop.f32.mrb[0].mxu0
        %2466 = vmatprep.mubr.f32.mxu0 0.0
        %2467 = vmatmul.mubr.f32.gmra.mrb[0].mxu0 %v2395
        %v2468 = vpop.f32.mrb[0].mxu0
        %v2469 = vadd.f32 0.0, %v2468
        %v2470 = vpop.f32.mrb[0].mxu0
        %2471 = vdwg.mxu0
        %2474 = vrot.lane.b32.xlu0 %v2464, 16
        %v2475 = vpop.permute.xlu0 %2474
        %2476 = vrot.lane.b32.xlu0 %v2469, 16
        %v2477 = vpop.permute.xlu0 %2476
        %2480 = vst.msk [vmem:[#allocation4 + $0x10] sm:$0xff] %vm1648, %v2475
        %2481 = vst.msk [vmem:[#allocation4 + $0x18] sm:$0xff] %vm1648, %v2477
        %2482 = vrot.lane.b32.xlu0 %v1862, 104
        %v2483 = vpop.permute.xlu0 %2482
        %2484 = vrot.lane.b32.xlu0 %v1863, 104
        %v2485 = vpop.permute.xlu0 %2484
        %2486 = vrot.lane.b32.xlu0 %v911, 72
        %v2487 = vpop.permute.xlu0 %2486
        %2488 = vrot.lane.b32.xlu0 %v916, 72
        %v2489 = vpop.permute.xlu0 %2488
        %v2490 = vsel %vm1035, %v2483, 0
        %v2492 = vsel %vm1035, %v2485, 0
        %v2494 = vsel %vm1035, %v2487, 0
        %v2496 = vsel %vm1035, %v2489, 0
        %2498 = vmatprep.subr.mxu0 0.0
        %2499 = vmatpush1.xpose.msra.mxu0 %v2494
        %2500 = vmatprep.subr.mxu0 0.0
        %2501 = vmatpush1.xpose.msra.mxu0 %v2496
        %2502 = vmatprep.subr.mxu0 0.0
        %2503 = vmatpush1.xpose.msra.mxu0 0.0
        %2504 = vmatprep.subr.mxu0 0.0
        %2505 = vmatpush1.xpose.msra.mxu0 0.0
        %2506 = vmatprep.subr.mxu0 0.0
        %2507 = vmatpush1.xpose.msra.mxu0 0.0
        %2508 = vmatprep.subr.mxu0 0.0
        %2509 = vmatpush1.xpose.msra.mxu0 0.0
        %2510 = vmatprep.subr.mxu0 0.0
        %2511 = vmatpush1.xpose.msra.mxu0 0.0
        %2512 = vmatprep.subr.mxu0 0.0
        %2513 = vmatpush1.xpose.msra.mxu0 0.0
        %2514 = vmatprep.subr.mxu0 0.0
        %2515 = vmatpush1.xpose.msra.mxu0 0.0
        %2516 = vmatprep.subr.mxu0 0.0
        %2517 = vmatpush1.xpose.msra.mxu0 0.0
        %2518 = vmatprep.subr.mxu0 0.0
        %2519 = vmatpush1.xpose.msra.mxu0 0.0
        %2520 = vmatprep.subr.mxu0 0.0
        %2521 = vmatpush1.xpose.msra.mxu0 0.0
        %2522 = vmatprep.subr.mxu0 0.0
        %2523 = vmatpush1.xpose.msra.mxu0 0.0
        %2524 = vmatprep.subr.mxu0 0.0
        %2525 = vmatpush1.xpose.msra.mxu0 0.0
        %2526 = vmatprep.subr.mxu0 0.0
        %2527 = vmatpush1.xpose.msra.mxu0 0.0
        %2528 = vmatprep.subr.mxu0 0.0
        %2529 = vmatpush1.xpose.msra.mxu0 0.0
        %2530 = vmatprep.subr.mxu0 0.0
        %2531 = vmatpush1.xpose.msra.mxu0 0.0
        %2532 = vmatprep.subr.mxu0 0.0
        %2533 = vmatpush1.xpose.msra.mxu0 0.0
        %2534 = vmatprep.subr.mxu0 0.0
        %2535 = vmatpush1.xpose.msra.mxu0 0.0
        %2536 = vmatprep.subr.mxu0 0.0
        %2537 = vmatpush1.xpose.msra.mxu0 0.0
        %2538 = vmatprep.subr.mxu0 0.0
        %2539 = vmatpush1.xpose.msra.mxu0 0.0
        %2540 = vmatprep.subr.mxu0 0.0
        %2541 = vmatpush1.xpose.msra.mxu0 0.0
        %2542 = vmatprep.subr.mxu0 0.0
        %2543 = vmatpush1.xpose.msra.mxu0 0.0
        %2544 = vmatprep.subr.mxu0 0.0
        %2545 = vmatpush1.xpose.msra.mxu0 0.0
        %2546 = vmatprep.subr.mxu0 0.0
        %2547 = vmatpush1.xpose.msra.mxu0 0.0
        %2548 = vmatprep.subr.mxu0 0.0
        %2549 = vmatpush1.xpose.msra.mxu0 0.0
        %2550 = vmatprep.subr.mxu0 0.0
        %2551 = vmatpush1.xpose.msra.mxu0 0.0
        %2552 = vmatprep.subr.mxu0 0.0
        %2553 = vmatpush1.xpose.msra.mxu0 0.0
        %2554 = vmatprep.subr.mxu0 0.0
        %2555 = vmatpush1.xpose.msra.mxu0 0.0
        %2556 = vmatprep.subr.mxu0 0.0
        %2557 = vmatpush1.xpose.msra.mxu0 0.0
        %2558 = vmatprep.subr.mxu0 0.0
        %2559 = vmatpush1.xpose.msra.mxu0 0.0
        %2560 = vmatprep.subr.mxu0 0.0
        %2561 = vmatpush1.xpose.msra.mxu0 0.0
        %2562 = vmatprep.mubr.f32.mxu0 0.0
        %2563 = vmatmul.mubr.f32.gmra.mrb[0].mxu0 %v2490
        %v2564 = vpop.f32.mrb[0].mxu0
        %v2565 = vadd.f32 0.0, %v2564
        %v2566 = vpop.f32.mrb[0].mxu0
        %2567 = vmatprep.mubr.f32.mxu0 0.0
        %2568 = vmatmul.mubr.f32.gmra.mrb[0].mxu0 %v2492
        %v2569 = vpop.f32.mrb[0].mxu0
        %v2570 = vadd.f32 0.0, %v2569
        %v2571 = vpop.f32.mrb[0].mxu0
        %2572 = vdwg.mxu0
        %v2573 = vsel %vm1121, %v2565, -inf
        %2574 = vmax.xlane.f32.xlu0 %v2573
        %v2575 = vpop.xlane.xlu0 %2574
        %v2576 = vsel %vm1121, %v2570, -inf
        %2577 = vmax.xlane.f32.xlu0 %v2576
        %v2578 = vpop.xlane.xlu0 %2577
        %v2579 = vsub.f32 %v2565, %v2575
        %v2580 = vsub.f32 %v2570, %v2578
        %v2581 = vmul.f32 %v2579, 1.442695
        %v2582 = vpow.pop %v2581
        %v2583 = vmul.f32 %v2580, 1.442695
        %v2584 = vpow.pop %v2583
        %v2585 = vsel %vm1121, %v2582, 0.0
        %2586 = vadd.xlane.f32.xlu0 %v2585
        %v2587 = vpop.xlane.xlu0 %2586
        %v2588 = vsel %vm1121, %v2584, 0.0
        %2589 = vadd.xlane.f32.xlu0 %v2588
        %v2590 = vpop.xlane.xlu0 %2589
        %v2591 = vrcp.pop %v2587
        %v2592 = vrcp.pop %v2590
        %v2593 = vmul.f32 %v2582, %v2591
        %v2594 = vmul.f32 %v2584, %v2592
        %2595 = vrot.lane.b32.xlu0 %v1019, 104
        %v2596 = vpop.permute.xlu0 %2595
        %2597 = vrot.lane.b32.xlu0 %v1024, 104
        %v2598 = vpop.permute.xlu0 %2597
        %v2602 = vsel %vm1121, %v2593, 0
        %v2605 = vsel %vm1121, %v2594, 0
        %2607 = vmatprep.subr.mxu0 0.0
        %2608 = vmatpush1.msra.mxu0 %v2596
        %2609 = vmatprep.subr.mxu0 0.0
        %2610 = vmatpush1.msra.mxu0 %v2598
        %2611 = vmatprep.subr.mxu0 0.0
        %2612 = vmatpush1.msra.mxu0 0.0
        %2613 = vmatprep.subr.mxu0 0.0
        %2614 = vmatpush1.msra.mxu0 0.0
        %2615 = vmatprep.subr.mxu0 0.0
        %2616 = vmatpush1.msra.mxu0 0.0
        %2617 = vmatprep.subr.mxu0 0.0
        %2618 = vmatpush1.msra.mxu0 0.0
        %2619 = vmatprep.subr.mxu0 0.0
        %2620 = vmatpush1.msra.mxu0 0.0
        %2621 = vmatprep.subr.mxu0 0.0
        %2622 = vmatpush1.msra.mxu0 0.0
        %2623 = vmatprep.subr.mxu0 0.0
        %2624 = vmatpush1.msra.mxu0 0.0
        %2625 = vmatprep.subr.mxu0 0.0
        %2626 = vmatpush1.msra.mxu0 0.0
        %2627 = vmatprep.subr.mxu0 0.0
        %2628 = vmatpush1.msra.mxu0 0.0
        %2629 = vmatprep.subr.mxu0 0.0
        %2630 = vmatpush1.msra.mxu0 0.0
        %2631 = vmatprep.subr.mxu0 0.0
        %2632 = vmatpush1.msra.mxu0 0.0
        %2633 = vmatprep.subr.mxu0 0.0
        %2634 = vmatpush1.msra.mxu0 0.0
        %2635 = vmatprep.subr.mxu0 0.0
        %2636 = vmatpush1.msra.mxu0 0.0
        %2637 = vmatprep.subr.mxu0 0.0
        %2638 = vmatpush1.msra.mxu0 0.0
        %2639 = vmatprep.subr.mxu0 0.0
        %2640 = vmatpush1.msra.mxu0 0.0
        %2641 = vmatprep.subr.mxu0 0.0
        %2642 = vmatpush1.msra.mxu0 0.0
        %2643 = vmatprep.subr.mxu0 0.0
        %2644 = vmatpush1.msra.mxu0 0.0
        %2645 = vmatprep.subr.mxu0 0.0
        %2646 = vmatpush1.msra.mxu0 0.0
        %2647 = vmatprep.subr.mxu0 0.0
        %2648 = vmatpush1.msra.mxu0 0.0
        %2649 = vmatprep.subr.mxu0 0.0
        %2650 = vmatpush1.msra.mxu0 0.0
        %2651 = vmatprep.subr.mxu0 0.0
        %2652 = vmatpush1.msra.mxu0 0.0
        %2653 = vmatprep.subr.mxu0 0.0
        %2654 = vmatpush1.msra.mxu0 0.0
        %2655 = vmatprep.subr.mxu0 0.0
        %2656 = vmatpush1.msra.mxu0 0.0
        %2657 = vmatprep.subr.mxu0 0.0
        %2658 = vmatpush1.msra.mxu0 0.0
        %2659 = vmatprep.subr.mxu0 0.0
        %2660 = vmatpush1.msra.mxu0 0.0
        %2661 = vmatprep.subr.mxu0 0.0
        %2662 = vmatpush1.msra.mxu0 0.0
        %2663 = vmatprep.subr.mxu0 0.0
        %2664 = vmatpush1.msra.mxu0 0.0
        %2665 = vmatprep.subr.mxu0 0.0
        %2666 = vmatpush1.msra.mxu0 0.0
        %2667 = vmatprep.subr.mxu0 0.0
        %2668 = vmatpush1.msra.mxu0 0.0
        %2669 = vmatprep.subr.mxu0 0.0
        %2670 = vmatpush1.msra.mxu0 0.0
        %2671 = vmatprep.mubr.f32.mxu0 0.0
        %2672 = vmatmul.mubr.f32.gmra.mrb[0].mxu0 %v2602
        %v2673 = vpop.f32.mrb[0].mxu0
        %v2674 = vadd.f32 0.0, %v2673
        %v2675 = vpop.f32.mrb[0].mxu0
        %2676 = vmatprep.mubr.f32.mxu0 0.0
        %2677 = vmatmul.mubr.f32.gmra.mrb[0].mxu0 %v2605
        %v2678 = vpop.f32.mrb[0].mxu0
        %v2679 = vadd.f32 0.0, %v2678
        %v2680 = vpop.f32.mrb[0].mxu0
        %2681 = vdwg.mxu0
        %2684 = vrot.lane.b32.xlu0 %v2674, 24
        %v2685 = vpop.permute.xlu0 %2684
        %2686 = vrot.lane.b32.xlu0 %v2679, 24
        %v2687 = vpop.permute.xlu0 %2686
        %2690 = vst.msk [vmem:[#allocation4 + $0x10] sm:$0xff] %vm1859, %v2685
        %2691 = vst.msk [vmem:[#allocation4 + $0x18] sm:$0xff] %vm1859, %v2687
        %v2692 = vld [vmem:[#allocation4] sm:$0xff]
        %v2693 = vld [vmem:[#allocation4 + $0x8] sm:$0xff]
        %v2694 = vld [vmem:[#allocation4 + $0x10] sm:$0xff]
        %v2695 = vld [vmem:[#allocation4 + $0x18] sm:$0xff]
        %v2696 = vld [vmem:[%s734] sm:$0xff]
        %v2697 = vld [vmem:[%s734 + $0x8] sm:$0xff]
        %v2698 = vld [vmem:[%s734 + $0x10] sm:$0xff]
        %v2699 = vld [vmem:[%s734 + $0x18] sm:$0xff]
        %v2700 = vld [vmem:[%s737] sm:$0x1]
        %v2702 = vlaneseq
        %v2703 = vshrl.u32 %v2702, 7
        %v2704 = vsub.s32 0, %v2703
        %v2705 = vrot.slane %v2700, %v2704
        %v2708 = vsel %vm821, %v2692, 0
        %v2711 = vsel %vm821, %v2693, 0
        %v2714 = vsel %vm821, %v2694, 0
        %v2717 = vsel %vm821, %v2695, 0
        %2719 = vmatprep.subr.mxu0 0.0
        %2720 = vmatpush1.msra.mxu0 %v2696
        %2721 = vmatprep.subr.mxu0 0.0
        %2722 = vmatpush1.msra.mxu0 %v2697
        %2723 = vmatprep.subr.mxu0 0.0
        %2724 = vmatpush1.msra.mxu0 %v2698
        %2725 = vmatprep.subr.mxu0 0.0
        %2726 = vmatpush1.msra.mxu0 %v2699
        %2727 = vmatprep.subr.mxu0 0.0
        %2728 = vmatpush1.msra.mxu0 0.0
        %2729 = vmatprep.subr.mxu0 0.0
        %2730 = vmatpush1.msra.mxu0 0.0
        %2731 = vmatprep.subr.mxu0 0.0
        %2732 = vmatpush1.msra.mxu0 0.0
        %2733 = vmatprep.subr.mxu0 0.0
        %2734 = vmatpush1.msra.mxu0 0.0
        %2735 = vmatprep.subr.mxu0 0.0
        %2736 = vmatpush1.msra.mxu0 0.0
        %2737 = vmatprep.subr.mxu0 0.0
        %2738 = vmatpush1.msra.mxu0 0.0
        %2739 = vmatprep.subr.mxu0 0.0
        %2740 = vmatpush1.msra.mxu0 0.0
        %2741 = vmatprep.subr.mxu0 0.0
        %2742 = vmatpush1.msra.mxu0 0.0
        %2743 = vmatprep.subr.mxu0 0.0
        %2744 = vmatpush1.msra.mxu0 0.0
        %2745 = vmatprep.subr.mxu0 0.0
        %2746 = vmatpush1.msra.mxu0 0.0
        %2747 = vmatprep.subr.mxu0 0.0
        %2748 = vmatpush1.msra.mxu0 0.0
        %2749 = vmatprep.subr.mxu0 0.0
        %2750 = vmatpush1.msra.mxu0 0.0
        %2751 = vmatprep.subr.mxu0 0.0
        %2752 = vmatpush1.msra.mxu0 0.0
        %2753 = vmatprep.subr.mxu0 0.0
        %2754 = vmatpush1.msra.mxu0 0.0
        %2755 = vmatprep.subr.mxu0 0.0
        %2756 = vmatpush1.msra.mxu0 0.0
        %2757 = vmatprep.subr.mxu0 0.0
        %2758 = vmatpush1.msra.mxu0 0.0
        %2759 = vmatprep.subr.mxu0 0.0
        %2760 = vmatpush1.msra.mxu0 0.0
        %2761 = vmatprep.subr.mxu0 0.0
        %2762 = vmatpush1.msra.mxu0 0.0
        %2763 = vmatprep.subr.mxu0 0.0
        %2764 = vmatpush1.msra.mxu0 0.0
        %2765 = vmatprep.subr.mxu0 0.0
        %2766 = vmatpush1.msra.mxu0 0.0
        %2767 = vmatprep.subr.mxu0 0.0
        %2768 = vmatpush1.msra.mxu0 0.0
        %2769 = vmatprep.subr.mxu0 0.0
        %2770 = vmatpush1.msra.mxu0 0.0
        %2771 = vmatprep.subr.mxu0 0.0
        %2772 = vmatpush1.msra.mxu0 0.0
        %2773 = vmatprep.subr.mxu0 0.0
        %2774 = vmatpush1.msra.mxu0 0.0
        %2775 = vmatprep.subr.mxu0 0.0
        %2776 = vmatpush1.msra.mxu0 0.0
        %2777 = vmatprep.subr.mxu0 0.0
        %2778 = vmatpush1.msra.mxu0 0.0
        %2779 = vmatprep.subr.mxu0 0.0
        %2780 = vmatpush1.msra.mxu0 0.0
        %2781 = vmatprep.subr.mxu0 0.0
        %2782 = vmatpush1.msra.mxu0 0.0
        %2783 = vmatprep.mubr.f32.mxu0 0.0
        %2784 = vmatmul.mubr.f32.gmra.mrb[0].mxu0 %v2708
        %v2785 = vpop.f32.mrb[0].mxu0
        %v2786 = vadd.f32 %v2705, %v2785
        %v2787 = vpop.f32.mrb[0].mxu0
        %2788 = vmatprep.mubr.f32.mxu0 0.0
        %2789 = vmatmul.mubr.f32.gmra.mrb[0].mxu0 %v2711
        %v2790 = vpop.f32.mrb[0].mxu0
        %v2791 = vadd.f32 %v2705, %v2790
        %v2792 = vpop.f32.mrb[0].mxu0
        %2793 = vmatprep.mubr.f32.mxu0 0.0
        %2794 = vmatmul.mubr.f32.gmra.mrb[0].mxu0 %v2714
        %v2795 = vpop.f32.mrb[0].mxu0
        %v2796 = vadd.f32 %v2705, %v2795
        %v2797 = vpop.f32.mrb[0].mxu0
        %2798 = vmatprep.mubr.f32.mxu0 0.0
        %2799 = vmatmul.mubr.f32.gmra.mrb[0].mxu0 %v2717
        %v2800 = vpop.f32.mrb[0].mxu0
        %v2801 = vadd.f32 %v2705, %v2800
        %v2802 = vpop.f32.mrb[0].mxu0
        %2803 = vdwg.mxu0
        %v2804 = vadd.f32 %v798, %v2786
        %v2805 = vadd.f32 %v799, %v2791
        %v2806 = vadd.f32 %v800, %v2796
        %v2807 = vadd.f32 %v801, %v2801
        %v2808 = vsel %vm821, %v2804, 0.0
        %2809 = vadd.xlane.f32.xlu0 %v2808
        %v2810 = vpop.xlane.xlu0 %2809
        %v2811 = vsel %vm821, %v2805, 0.0
        %2812 = vadd.xlane.f32.xlu0 %v2811
        %v2813 = vpop.xlane.xlu0 %2812
        %v2814 = vsel %vm821, %v2806, 0.0
        %2815 = vadd.xlane.f32.xlu0 %v2814
        %v2816 = vpop.xlane.xlu0 %2815
        %v2817 = vsel %vm821, %v2807, 0.0
        %2818 = vadd.xlane.f32.xlu0 %v2817
        %v2819 = vpop.xlane.xlu0 %2818
        %v2820 = vrcp.pop 32.0
        %v2821 = vmul.f32 %v2810, %v2820
        %v2822 = vmul.f32 %v2813, %v2820
        %v2823 = vmul.f32 %v2816, %v2820
        %v2824 = vmul.f32 %v2819, %v2820
        %v2825 = vsub.f32 %v2804, %v2821
        %v2826 = vsub.f32 %v2805, %v2822
        %v2827 = vsub.f32 %v2806, %v2823
        %v2828 = vsub.f32 %v2807, %v2824
        %v2829 = vmul.f32 %v2825, %v2825
        %v2830 = vmul.f32 %v2826, %v2826
        %v2831 = vmul.f32 %v2827, %v2827
        %v2832 = vmul.f32 %v2828, %v2828
        %v2833 = vsel %vm821, %v2829, 0.0
        %2834 = vadd.xlane.f32.xlu0 %v2833
        %v2835 = vpop.xlane.xlu0 %2834
        %v2836 = vsel %vm821, %v2830, 0.0
        %2837 = vadd.xlane.f32.xlu0 %v2836
        %v2838 = vpop.xlane.xlu0 %2837
        %v2839 = vsel %vm821, %v2831, 0.0
        %2840 = vadd.xlane.f32.xlu0 %v2839
        %v2841 = vpop.xlane.xlu0 %2840
        %v2842 = vsel %vm821, %v2832, 0.0
        %2843 = vadd.xlane.f32.xlu0 %v2842
        %v2844 = vpop.xlane.xlu0 %2843
        %v2845 = vmul.f32 %v2835, %v2820
        %v2846 = vmul.f32 %v2838, %v2820
        %v2847 = vmul.f32 %v2841, %v2820
        %v2848 = vmul.f32 %v2844, %v2820
        %v2849 = vadd.f32 %v2845, 1e-05
        %v2850 = vadd.f32 %v2846, 1e-05
        %v2851 = vadd.f32 %v2847, 1e-05
        %v2852 = vadd.f32 %v2848, 1e-05
        %v2853 = vrsqrt.pop %v2849
        %v2854 = vrsqrt.pop %v2850
        %v2855 = vrsqrt.pop %v2851
        %v2856 = vrsqrt.pop %v2852
        %v2857 = vmul.f32 %v2825, %v2853
        %v2858 = vmul.f32 %v2826, %v2854
        %v2859 = vmul.f32 %v2827, %v2855
        %v2860 = vmul.f32 %v2828, %v2856
        %v2861 = vld [vmem:[%s751] sm:$0x1]
        %v2863 = vlaneseq
        %v2864 = vshrl.u32 %v2863, 7
        %v2865 = vsub.s32 0, %v2864
        %v2866 = vrot.slane %v2861, %v2865
        %v2868 = vmul.f32 %v2857, %v2866
        %v2869 = vmul.f32 %v2858, %v2866
        %v2870 = vmul.f32 %v2859, %v2866
        %v2871 = vmul.f32 %v2860, %v2866
        %v2872 = vld [vmem:[%s754] sm:$0x1]
        %v2874 = vlaneseq
        %v2875 = vshrl.u32 %v2874, 7
        %v2876 = vsub.s32 0, %v2875
        %v2877 = vrot.slane %v2872, %v2876
        %v2879 = vadd.f32 %v2868, %v2877
        %v2880 = vadd.f32 %v2869, %v2877
        %v2881 = vadd.f32 %v2870, %v2877
        %v2882 = vadd.f32 %v2871, %v2877
        %v2883 = vld [vmem:[%s623] sm:$0xff]
        %v2884 = vld [vmem:[%s623 + $0x8] sm:$0xff]
        %v2885 = vld [vmem:[%s623 + $0x10] sm:$0xff]
        %v2886 = vld [vmem:[%s623 + $0x18] sm:$0xff]
        %v2887 = vld [vmem:[%s740] sm:$0x1]
        %v2889 = vlaneseq
        %v2890 = vshrl.u32 %v2889, 7
        %v2891 = vsub.s32 0, %v2890
        %v2892 = vrot.slane %v2887, %v2891
        %v2895 = vsel %vm821, %v2879, 0
        %v2898 = vsel %vm821, %v2880, 0
        %v2901 = vsel %vm821, %v2881, 0
        %v2904 = vsel %vm821, %v2882, 0
        %2906 = vmatprep.subr.mxu0 0.0
        %2907 = vmatpush1.msra.mxu0 %v2883
        %2908 = vmatprep.subr.mxu0 0.0
        %2909 = vmatpush1.msra.mxu0 %v2884
        %2910 = vmatprep.subr.mxu0 0.0
        %2911 = vmatpush1.msra.mxu0 %v2885
        %2912 = vmatprep.subr.mxu0 0.0
        %2913 = vmatpush1.msra.mxu0 %v2886
        %2914 = vmatprep.subr.mxu0 0.0
        %2915 = vmatpush1.msra.mxu0 0.0
        %2916 = vmatprep.subr.mxu0 0.0
        %2917 = vmatpush1.msra.mxu0 0.0
        %2918 = vmatprep.subr.mxu0 0.0
        %2919 = vmatpush1.msra.mxu0 0.0
        %2920 = vmatprep.subr.mxu0 0.0
        %2921 = vmatpush1.msra.mxu0 0.0
        %2922 = vmatprep.subr.mxu0 0.0
        %2923 = vmatpush1.msra.mxu0 0.0
        %2924 = vmatprep.subr.mxu0 0.0
        %2925 = vmatpush1.msra.mxu0 0.0
        %2926 = vmatprep.subr.mxu0 0.0
        %2927 = vmatpush1.msra.mxu0 0.0
        %2928 = vmatprep.subr.mxu0 0.0
        %2929 = vmatpush1.msra.mxu0 0.0
        %2930 = vmatprep.subr.mxu0 0.0
        %2931 = vmatpush1.msra.mxu0 0.0
        %2932 = vmatprep.subr.mxu0 0.0
        %2933 = vmatpush1.msra.mxu0 0.0
        %2934 = vmatprep.subr.mxu0 0.0
        %2935 = vmatpush1.msra.mxu0 0.0
        %2936 = vmatprep.subr.mxu0 0.0
        %2937 = vmatpush1.msra.mxu0 0.0
        %2938 = vmatprep.subr.mxu0 0.0
        %2939 = vmatpush1.msra.mxu0 0.0
        %2940 = vmatprep.subr.mxu0 0.0
        %2941 = vmatpush1.msra.mxu0 0.0
        %2942 = vmatprep.subr.mxu0 0.0
        %2943 = vmatpush1.msra.mxu0 0.0
        %2944 = vmatprep.subr.mxu0 0.0
        %2945 = vmatpush1.msra.mxu0 0.0
        %2946 = vmatprep.subr.mxu0 0.0
        %2947 = vmatpush1.msra.mxu0 0.0
        %2948 = vmatprep.subr.mxu0 0.0
        %2949 = vmatpush1.msra.mxu0 0.0
        %2950 = vmatprep.subr.mxu0 0.0
        %2951 = vmatpush1.msra.mxu0 0.0
        %2952 = vmatprep.subr.mxu0 0.0
        %2953 = vmatpush1.msra.mxu0 0.0
        %2954 = vmatprep.subr.mxu0 0.0
        %2955 = vmatpush1.msra.mxu0 0.0
        %2956 = vmatprep.subr.mxu0 0.0
        %2957 = vmatpush1.msra.mxu0 0.0
        %2958 = vmatprep.subr.mxu0 0.0
        %2959 = vmatpush1.msra.mxu0 0.0
        %2960 = vmatprep.subr.mxu0 0.0
        %2961 = vmatpush1.msra.mxu0 0.0
        %2962 = vmatprep.subr.mxu0 0.0
        %2963 = vmatpush1.msra.mxu0 0.0
        %2964 = vmatprep.subr.mxu0 0.0
        %2965 = vmatpush1.msra.mxu0 0.0
        %2966 = vmatprep.subr.mxu0 0.0
        %2967 = vmatpush1.msra.mxu0 0.0
        %2968 = vmatprep.subr.mxu0 0.0
        %2969 = vmatpush1.msra.mxu0 0.0
        %2970 = vmatprep.mubr.f32.mxu0 0.0
        %2971 = vmatmul.mubr.f32.gmra.mrb[0].mxu0 %v2895
        %v2972 = vpop.f32.mrb[0].mxu0
        %v2973 = vadd.f32 %v2892, %v2972
        %v2974 = vpop.f32.mrb[0].mxu0
        %2975 = vmatprep.mubr.f32.mxu0 0.0
        %2976 = vmatmul.mubr.f32.gmra.mrb[0].mxu0 %v2898
        %v2977 = vpop.f32.mrb[0].mxu0
        %v2978 = vadd.f32 %v2892, %v2977
        %v2979 = vpop.f32.mrb[0].mxu0
        %2980 = vmatprep.mubr.f32.mxu0 0.0
        %2981 = vmatmul.mubr.f32.gmra.mrb[0].mxu0 %v2901
        %v2982 = vpop.f32.mrb[0].mxu0
        %v2983 = vadd.f32 %v2892, %v2982
        %v2984 = vpop.f32.mrb[0].mxu0
        %2985 = vmatprep.mubr.f32.mxu0 0.0
        %2986 = vmatmul.mubr.f32.gmra.mrb[0].mxu0 %v2904
        %v2987 = vpop.f32.mrb[0].mxu0
        %v2988 = vadd.f32 %v2892, %v2987
        %v2989 = vpop.f32.mrb[0].mxu0
        %2990 = vdwg.mxu0
        %v2991 = vmax.f32 %v2973, 0.0
        %v2992 = vmax.f32 %v2978, 0.0
        %v2993 = vmax.f32 %v2983, 0.0
        %v2994 = vmax.f32 %v2988, 0.0
        %v2995 = vld [vmem:[%s745] sm:$0xff]
        %v2996 = vld [vmem:[%s745 + $0x8] sm:$0xff]
        %v2997 = vld [vmem:[%s745 + $0x10] sm:$0xff]
        %v2998 = vld [vmem:[%s745 + $0x18] sm:$0xff]
        %v2999 = vld [vmem:[%s745 + $0x20] sm:$0xff]
        %v3000 = vld [vmem:[%s745 + $0x28] sm:$0xff]
        %v3001 = vld [vmem:[%s745 + $0x30] sm:$0xff]
        %v3002 = vld [vmem:[%s745 + $0x38] sm:$0xff]
        %v3003 = vld [vmem:[%s748] sm:$0x1]
        %v3005 = vlaneseq
        %v3006 = vshrl.u32 %v3005, 7
        %v3007 = vsub.s32 0, %v3006
        %v3008 = vrot.slane %v3003, %v3007
        %vm3010 = vcmask 523264
        %v3012 = vsel %vm3010, %v2991, 0
        %v3015 = vsel %vm3010, %v2992, 0
        %v3018 = vsel %vm3010, %v2993, 0
        %v3021 = vsel %vm3010, %v2994, 0
        %3023 = vmatprep.subr.mxu0 0.0
        %3024 = vmatpush1.msra.mxu0 %v2995
        %3025 = vmatprep.subr.mxu0 0.0
        %3026 = vmatpush1.msra.mxu0 %v2996
        %3027 = vmatprep.subr.mxu0 0.0
        %3028 = vmatpush1.msra.mxu0 %v2997
        %3029 = vmatprep.subr.mxu0 0.0
        %3030 = vmatpush1.msra.mxu0 %v2998
        %3031 = vmatprep.subr.mxu0 0.0
        %3032 = vmatpush1.msra.mxu0 %v2999
        %3033 = vmatprep.subr.mxu0 0.0
        %3034 = vmatpush1.msra.mxu0 %v3000
        %3035 = vmatprep.subr.mxu0 0.0
        %3036 = vmatpush1.msra.mxu0 %v3001
        %3037 = vmatprep.subr.mxu0 0.0
        %3038 = vmatpush1.msra.mxu0 %v3002
        %3039 = vmatprep.subr.mxu0 0.0
        %3040 = vmatpush1.msra.mxu0 0.0
        %3041 = vmatprep.subr.mxu0 0.0
        %3042 = vmatpush1.msra.mxu0 0.0
        %3043 = vmatprep.subr.mxu0 0.0
        %3044 = vmatpush1.msra.mxu0 0.0
        %3045 = vmatprep.subr.mxu0 0.0
        %3046 = vmatpush1.msra.mxu0 0.0
        %3047 = vmatprep.subr.mxu0 0.0
        %3048 = vmatpush1.msra.mxu0 0.0
        %3049 = vmatprep.subr.mxu0 0.0
        %3050 = vmatpush1.msra.mxu0 0.0
        %3051 = vmatprep.subr.mxu0 0.0
        %3052 = vmatpush1.msra.mxu0 0.0
        %3053 = vmatprep.subr.mxu0 0.0
        %3054 = vmatpush1.msra.mxu0 0.0
        %3055 = vmatprep.subr.mxu0 0.0
        %3056 = vmatpush1.msra.mxu0 0.0
        %3057 = vmatprep.subr.mxu0 0.0
        %3058 = vmatpush1.msra.mxu0 0.0
        %3059 = vmatprep.subr.mxu0 0.0
        %3060 = vmatpush1.msra.mxu0 0.0
        %3061 = vmatprep.subr.mxu0 0.0
        %3062 = vmatpush1.msra.mxu0 0.0
        %3063 = vmatprep.subr.mxu0 0.0
        %3064 = vmatpush1.msra.mxu0 0.0
        %3065 = vmatprep.subr.mxu0 0.0
        %3066 = vmatpush1.msra.mxu0 0.0
        %3067 = vmatprep.subr.mxu0 0.0
        %3068 = vmatpush1.msra.mxu0 0.0
        %3069 = vmatprep.subr.mxu0 0.0
        %3070 = vmatpush1.msra.mxu0 0.0
        %3071 = vmatprep.subr.mxu0 0.0
        %3072 = vmatpush1.msra.mxu0 0.0
        %3073 = vmatprep.subr.mxu0 0.0
        %3074 = vmatpush1.msra.mxu0 0.0
        %3075 = vmatprep.subr.mxu0 0.0
        %3076 = vmatpush1.msra.mxu0 0.0
        %3077 = vmatprep.subr.mxu0 0.0
        %3078 = vmatpush1.msra.mxu0 0.0
        %3079 = vmatprep.subr.mxu0 0.0
        %3080 = vmatpush1.msra.mxu0 0.0
        %3081 = vmatprep.subr.mxu0 0.0
        %3082 = vmatpush1.msra.mxu0 0.0
        %3083 = vmatprep.subr.mxu0 0.0
        %3084 = vmatpush1.msra.mxu0 0.0
        %3085 = vmatprep.subr.mxu0 0.0
        %3086 = vmatpush1.msra.mxu0 0.0
        %3087 = vmatprep.mubr.f32.mxu0 0.0
        %3088 = vmatmul.mubr.f32.gmra.mrb[0].mxu0 %v3012
        %v3089 = vpop.f32.mrb[0].mxu0
        %v3090 = vadd.f32 %v3008, %v3089
        %v3091 = vpop.f32.mrb[0].mxu0
        %3092 = vmatprep.mubr.f32.mxu0 0.0
        %3093 = vmatmul.mubr.f32.gmra.mrb[0].mxu0 %v3015
        %v3094 = vpop.f32.mrb[0].mxu0
        %v3095 = vadd.f32 %v3008, %v3094
        %v3096 = vpop.f32.mrb[0].mxu0
        %3097 = vmatprep.mubr.f32.mxu0 0.0
        %3098 = vmatmul.mubr.f32.gmra.mrb[0].mxu0 %v3018
        %v3099 = vpop.f32.mrb[0].mxu0
        %v3100 = vadd.f32 %v3008, %v3099
        %v3101 = vpop.f32.mrb[0].mxu0
        %3102 = vmatprep.mubr.f32.mxu0 0.0
        %3103 = vmatmul.mubr.f32.gmra.mrb[0].mxu0 %v3021
        %v3104 = vpop.f32.mrb[0].mxu0
        %v3105 = vadd.f32 %v3008, %v3104
        %v3106 = vpop.f32.mrb[0].mxu0
        %3107 = vdwg.mxu0
        %v3108 = vadd.f32 %v2879, %v3090
        %v3109 = vadd.f32 %v2880, %v3095
        %v3110 = vadd.f32 %v2881, %v3100
        %v3111 = vadd.f32 %v2882, %v3105
        %v3112 = vsel %vm821, %v3108, 0.0
        %3113 = vadd.xlane.f32.xlu0 %v3112
        %v3114 = vpop.xlane.xlu0 %3113
        %v3115 = vsel %vm821, %v3109, 0.0
        %3116 = vadd.xlane.f32.xlu0 %v3115
        %v3117 = vpop.xlane.xlu0 %3116
        %v3118 = vsel %vm821, %v3110, 0.0
        %3119 = vadd.xlane.f32.xlu0 %v3118
        %v3120 = vpop.xlane.xlu0 %3119
        %v3121 = vsel %vm821, %v3111, 0.0
        %3122 = vadd.xlane.f32.xlu0 %v3121
        %v3123 = vpop.xlane.xlu0 %3122
        %v3124 = vmul.f32 %v3114, %v2820
        %v3125 = vmul.f32 %v3117, %v2820
        %v3126 = vmul.f32 %v3120, %v2820
        %v3127 = vmul.f32 %v3123, %v2820
        %v3128 = vsub.f32 %v3108, %v3124
        %v3129 = vsub.f32 %v3109, %v3125
        %v3130 = vsub.f32 %v3110, %v3126
        %v3131 = vsub.f32 %v3111, %v3127
        %v3132 = vmul.f32 %v3128, %v3128
        %v3133 = vmul.f32 %v3129, %v3129
        %v3134 = vmul.f32 %v3130, %v3130
        %v3135 = vmul.f32 %v3131, %v3131
        %v3136 = vsel %vm821, %v3132, 0.0
        %3137 = vadd.xlane.f32.xlu0 %v3136
        %v3138 = vpop.xlane.xlu0 %3137
        %v3139 = vsel %vm821, %v3133, 0.0
        %3140 = vadd.xlane.f32.xlu0 %v3139
        %v3141 = vpop.xlane.xlu0 %3140
        %v3142 = vsel %vm821, %v3134, 0.0
        %3143 = vadd.xlane.f32.xlu0 %v3142
        %v3144 = vpop.xlane.xlu0 %3143
        %v3145 = vsel %vm821, %v3135, 0.0
        %3146 = vadd.xlane.f32.xlu0 %v3145
        %v3147 = vpop.xlane.xlu0 %3146
        %v3148 = vmul.f32 %v3138, %v2820
        %v3149 = vmul.f32 %v3141, %v2820
        %v3150 = vmul.f32 %v3144, %v2820
        %v3151 = vmul.f32 %v3147, %v2820
        %v3152 = vadd.f32 %v3148, 1e-05
        %v3153 = vadd.f32 %v3149, 1e-05
        %v3154 = vadd.f32 %v3150, 1e-05
        %v3155 = vadd.f32 %v3151, 1e-05
        %v3156 = vrsqrt.pop %v3152
        %v3157 = vrsqrt.pop %v3153
        %v3158 = vrsqrt.pop %v3154
        %v3159 = vrsqrt.pop %v3155
        %v3160 = vmul.f32 %v3128, %v3156
        %v3161 = vmul.f32 %v3129, %v3157
        %v3162 = vmul.f32 %v3130, %v3158
        %v3163 = vmul.f32 %v3131, %v3159
        %v3164 = vld [vmem:[%s757] sm:$0x1]
        %v3166 = vlaneseq
        %v3167 = vshrl.u32 %v3166, 7
        %v3168 = vsub.s32 0, %v3167
        %v3169 = vrot.slane %v3164, %v3168
        %v3171 = vmul.f32 %v3160, %v3169
        %v3172 = vmul.f32 %v3161, %v3169
        %v3173 = vmul.f32 %v3162, %v3169
        %v3174 = vmul.f32 %v3163, %v3169
        %v3175 = vld [vmem:[%s760] sm:$0x1]
        %v3177 = vlaneseq
        %v3178 = vshrl.u32 %v3177, 7
        %v3179 = vsub.s32 0, %v3178
        %v3180 = vrot.slane %v3175, %v3179
        %v3182 = vadd.f32 %v3171, %v3180
        %v3183 = vadd.f32 %v3172, %v3180
        %v3184 = vadd.f32 %v3173, %v3180
        %v3185 = vadd.f32 %v3174, %v3180
        %3186 = vst.msk [vmem:[#allocation2] sm:$0xff] %vm821, %v3182
        %3187 = vst.msk [vmem:[#allocation2 + $0x8] sm:$0xff] %vm821, %v3183
        %3188 = vst.msk [vmem:[#allocation2 + $0x10] sm:$0xff] %vm821, %v3184
        %3189 = vst.msk [vmem:[#allocation2 + $0x18] sm:$0xff] %vm821, %v3185
        %p3190 = scmp.eq.s32.totalorder %s30, 1
        // Predicated region
        $region101: #{tpu_custom_call.1} parent=83 // pred_check
          %p3191 = pneg %p3190
        $region102: #{tpu_custom_call.1} parent=83 // pred_check_branch
          %3193 = sbr.rel (%p3191) target = $region104
        $region103: #{tpu_custom_call.1} parent=83 // pred_region
          %3194 = vst.msk [vmem:[#allocation11] sm:$0xff] %vm821, %v3182
          %3195 = vst.msk [vmem:[#allocation11 + $0x8] sm:$0xff] %vm821, %v3183
          %3198 = vrot.lane.b32.xlu0 %v3184, 32
          %v3199 = vpop.permute.xlu0 %3198
          %3200 = vrot.lane.b32.xlu0 %v3185, 32
          %v3201 = vpop.permute.xlu0 %3200
          %vm3204 = vcmask 523520
          %3205 = vst.msk [vmem:[#allocation11] sm:$0xff] %vm3204, %v3199
          %3206 = vst.msk [vmem:[#allocation11 + $0x8] sm:$0xff] %vm3204, %v3201
        $region104: #{tpu_custom_call.1} parent=83 // pred_fallthru
          _
        // Predicated region
        $region105: #{tpu_custom_call.1} parent=83 // pred_check
          %p3207 = pneg %p449
        $region106: #{tpu_custom_call.1} parent=83 // pred_check_branch
          %3209 = sbr.rel (%p3207) target = $region108
        $region107: #{tpu_custom_call.1} parent=83 // pred_region
          %s3211 = ssub.s32 256, 256
          %3212 = vsyncadd [#allocation7], %s3211
          %s3213 = sshll.u32 [#allocation11], 4
          %s3214 = int_to_ptr.vmem [resolvable:$true] %s3213
          %3219 = dma.vmem_to_hbm [thread:$0]  %s3214, 256, %s16, [#allocation7], 128, 128, 8
        $region108: #{tpu_custom_call.1} parent=83 // pred_fallthru
          _
        // Predicated region
        $region109: #{tpu_custom_call.1} parent=83 // pred_check
          %p3220 = pneg %p449
        $region110: #{tpu_custom_call.1} parent=83 // pred_check_branch
          %3222 = sbr.rel (%p3220) target = $region112
        $region111: #{tpu_custom_call.1} parent=83 // pred_region
          %3223 = dma.done [#allocation7], 256
        $region112: #{tpu_custom_call.1} parent=83 // pred_fallthru
          _
      $region84: #{tpu_custom_call.1} parent=5 // pred_fallthru
        _
      %p3224 = scmp.le.s32.totalorder 2, %s25
      // Predicated region
      $region113: #{tpu_custom_call.1} parent=5 // pred_check
        %p3225 = pneg %p3224
      $region114: #{tpu_custom_call.1} parent=5 // pred_check_branch
        %3227 = sbr.rel (%p3225) target = $region116
      $region115: #{tpu_custom_call.1} parent=5 // pred_region
        %s3228 = ssub.s32 %s25, 2
      $region116: #{tpu_custom_call.1} parent=5 // pred_fallthru
        _
    $region6: #{tpu_custom_call.1} parent=1 // loop_footer
      %s29 = sadd.s32 1, %s25
    $region7: #{tpu_custom_call.1} parent=1 // loop_footer_branch
      %24 = sbr.rel target = $region3
    $region8: #{tpu_custom_call.1} parent=1 // loop_exit
      _
    %3229 = vsyncpa [#allocation6], 1
    %s3230 = scalar_lea.sflag [#allocation6], 1
    %3231 = vsyncpa %s3230, 1
    %3232 = vsyncpa [#allocation9], 1
    %3233 = vsyncpa [#allocation7], 1
    %s3234 = scalar_lea.sflag [#allocation7], 1
    %3235 = vsyncpa %s3234, 1

</llo_original>
